<compile_context>
chip_gen: v7x
topology: tpu7x:2x2x1
jax: 0.10.0
libtpu: 0.0.40
codegen_flags: <defaults>
</compile_context>

<pallas_src>
import functools

import jax
import jax.numpy as jnp
import numpy as np
from jax.experimental import pallas as pl
from jax.experimental.pallas import tpu as pltpu

EPS = 1e-5


def _res_in_block_kernel(x_ref, w1_ref, w2_ref, mask_ref, out_ref, xpad_ref, *,
                         C, H, W, Wp, Pf, offsets, mxu_dtype):
    # x_ref:    (1, C, H*W)   raw sample, spatial plane flat on the lane axis
    # w*_ref:   (9, Cp, Cp)   per-tap packed conv weights (tap t = ky*3+kx), mxu_dtype
    # mask_ref: (1, Pf)       1.0 at true interior positions of the padded-flat plane
    # out_ref:  (1, C, H*W)
    # xpad_ref: (Cp, Pf) f32  VMEM scratch holding the zero-padded slab
    Cp = xpad_ref.shape[0]
    inv_hw = jnp.float32(1.0 / (H * W))

    # ---- build the zero-padded slab in VMEM (no HBM pad round trip) ----
    xpad_ref[...] = jnp.zeros_like(xpad_ref)
    for h in range(H):                                   # static unroll, H small copies
        dst = (h + 1) * Wp + 1
        xpad_ref[0:C, dst:dst + W] = x_ref[0, :, h * W:(h + 1) * W]
    xpad = xpad_ref[...]                                 # (Cp, Pf) f32

    mask_b = jnp.broadcast_to(mask_ref[...], (Cp, Pf))   # hoisted once (no re-broadcast)

    def conv3x3(slab, w_ref):
        # 9 per-tap matmuls, f32 accumulation; no (9*Cp, Pf) im2col is materialized.
        acc = None
        for t, off in enumerate(offsets):
            # want shifted[:, p] == slab[:, p + off] for every interior p
            shifted = slab if off == 0 else pltpu.roll(slab, (-off) % Pf, axis=1)
            part = jnp.dot(w_ref[t], shifted.astype(mxu_dtype),
                           preferred_element_type=jnp.float32)
            acc = part if acc is None else acc + part
        return acc                                       # (Cp, Pf) f32

    def inst_norm(v, zero_border):
        # biased per-channel stats over the H*W interior only; single-pass sum / sumsq
        vm = v * mask_b
        mean = jnp.sum(vm, axis=1, keepdims=True) * inv_hw
        sumsq = jnp.sum(vm * v, axis=1, keepdims=True) * inv_hw
        var = sumsq - mean * mean
        out = (v - mean) * jax.lax.rsqrt(var + EPS)
        # zero_border=True -> output is zero outside the interior, i.e. it is directly
        # a valid zero-padded input slab for the next conv.
        return out * mask_b if zero_border else out

    h1 = jnp.maximum(inst_norm(conv3x3(xpad, w1_ref), True), 0.0)   # ConvINReLU
    h2 = inst_norm(conv3x3(h1, w2_ref), False)                      # Conv2D + InstanceNorm

    # Extract the interior rows (lane-dense (C, H*W) slab) and add the residual.
    rows = [h2[0:C, (h + 1) * Wp + 1:(h + 1) * Wp + 1 + W] for h in range(H)]
    out_ref[0] = (x_ref[0] + jnp.concatenate(rows, axis=1)).astype(out_ref.dtype)


def res_in_block(x, w1, w2, *, mxu_dtype=jnp.bfloat16):
    """x: (N, C, H, W) float32 (NCHW); w1/w2: (C, C, 3, 3) float32 (PyTorch OIHW)."""
    N, C, H, W = x.shape
    Hp, Wp = H + 2, W + 2
    Cp = ((C + 7) // 8) * 8                  # sublane-native channel count
    P = Hp * Wp
    Pf = ((P + 127) // 128) * 128            # lane-native padded-flat length
    HW = H * W

    x_flat = x.reshape(N, C, HW)             # metadata-only reshape, no HBM copy

    # Interior mask in the padded-flat domain (tiny, resident).
    rows = jnp.arange(Hp)[:, None]
    cols = jnp.arange(Wp)[None, :]
    interior = (rows >= 1) & (rows <= H) & (cols >= 1) & (cols <= W)
    mask = jnp.pad(interior.astype(jnp.float32).reshape(1, P), ((0, 0), (0, Pf - P)))

    # Pack OIHW weights -> (9, Cp, Cp): w_packed[ky*3+kx, o, i] = w[o, i, ky, kx].
    def pack_w(w):
        wt = jnp.transpose(w, (2, 3, 0, 1)).reshape(9, C, C)
        wt = jnp.pad(wt, ((0, 0), (0, Cp - C), (0, Cp - C)))
        return wt.astype(mxu_dtype)

    w1p, w2p = pack_w(w1), pack_w(w2)

    # Tap (ky, kx) is a constant lane offset in the padded-flat domain.
    offsets = tuple((ky - 1) * Wp + (kx - 1) for ky in range(3) for kx in range(3))

    # Explicit scoped-VMEM budget: double-buffered in/out blocks + resident weights +
    # mask + padded scratch + ~8 slab-sized in-kernel temporaries, with headroom.
    slab = Cp * Pf * 4
    est = (2 * 2 * C * HW * 4
           + 2 * Pf * 4
           + 2 * 2 * 9 * Cp * Cp * jnp.dtype(mxu_dtype).itemsize
           + slab
           + 8 * slab)
    vmem_limit = int(min(max(1.5 * est, 32 * 2 ** 20), 64 * 2 ** 20))

    kernel = functools.partial(_res_in_block_kernel, C=C, H=H, W=W, Wp=Wp,
                               Pf=Pf, offsets=offsets, mxu_dtype=mxu_dtype)

    out_flat = pl.pallas_call(
        kernel,
        out_shape=jax.ShapeDtypeStruct((N, C, HW), x.dtype),
        grid_spec=pltpu.PrefetchScalarGridSpec(
            num_scalar_prefetch=0,
            grid=(N,),
            in_specs=[
                pl.BlockSpec((1, C, HW), lambda n: (n, 0, 0)),     # per-sample slab
                pl.BlockSpec((9, Cp, Cp), lambda n: (0, 0, 0)),    # conv1 weights (resident)
                pl.BlockSpec((9, Cp, Cp), lambda n: (0, 0, 0)),    # conv2 weights (resident)
                pl.BlockSpec((1, Pf), lambda n: (0, 0)),           # interior mask
            ],
            out_specs=pl.BlockSpec((1, C, HW), lambda n: (n, 0, 0)),
            scratch_shapes=[pltpu.VMEM((Cp, Pf), jnp.float32)],    # padded slab
        ),
        compiler_params=pltpu.CompilerParams(
            dimension_semantics=("parallel",),
            vmem_limit_bytes=vmem_limit),
    )(x_flat, w1p, w2p, mask)

    return out_flat.reshape(N, C, H, W)


# ---------------- plain-JAX reference (NCHW, matches the PyTorch module) ----------------
def _conv_ref(x, w):
    return jax.lax.conv_general_dilated(
        x, w, window_strides=(1, 1), padding=((1, 1), (1, 1)),
        dimension_numbers=("NCHW", "OIHW", "NCHW"))


def _in_ref(v):
    m = v.mean(axis=(2, 3), keepdims=True)
    var = ((v - m) ** 2).mean(axis=(2, 3), keepdims=True)
    return (v - m) * jax.lax.rsqrt(var + EPS)


def _res_in_block_ref(x, w1, w2):
    h = jnp.maximum(_in_ref(_conv_ref(x, w1)), 0.0)
    h = _in_ref(_conv_ref(h, w2))
    return x + h


if __name__ == "__main__":
    key = jax.random.PRNGKey(0)
    kx, k1, k2 = jax.random.split(key, 3)

    N, C, H, W = 2, 4, 16, 16
    x = jax.random.normal(kx, (N, C, H, W), dtype=jnp.float32)
    fan_in = C * 3 * 3
    w1 = jax.random.normal(k1, (C, C, 3, 3), dtype=jnp.float32) / jnp.sqrt(fan_in)
    w2 = jax.random.normal(k2, (C, C, 3, 3), dtype=jnp.float32) / jnp.sqrt(fan_in)

    ref = _res_in_block_ref(x, w1, w2)

    # Exact-ish path (f32 MXU operands): tight tolerance.
    out_f32 = jax.block_until_ready(res_in_block(x, w1, w2, mxu_dtype=jnp.float32))
    np.testing.assert_allclose(np.asarray(out_f32), np.asarray(ref), rtol=1e-3, atol=1e-3)

    # Default fast path (bf16 MXU operands, f32 accumulation / norm math):
    # looser tolerance accounts for bf16 operand rounding through two chained convs.
    out_bf16 = jax.block_until_ready(res_in_block(x, w1, w2))
    np.testing.assert_allclose(np.asarray(out_bf16), np.asarray(ref), rtol=5e-2, atol=5e-2)

    print("KERNEL_OK")
</pallas_src>

<mosaic_0001>
module attributes {stable_mosaic.version = 11 : i64} {
  func.func @_res_in_block_kernel(%arg0: i32, %arg1: memref<1x4x256xf32, #tpu.memory_space<vmem>>, %arg2: memref<9x8x8xf32, #tpu.memory_space<vmem>>, %arg3: memref<9x8x8xf32, #tpu.memory_space<vmem>>, %arg4: memref<1x384xf32, #tpu.memory_space<vmem>>, %arg5: memref<1x4x256xf32, #tpu.memory_space<vmem>>, %arg6: memref<8x384xf32, #tpu.memory_space<vmem>>) attributes {dimension_semantics = [#tpu.dimension_semantics<parallel>], iteration_bounds = array<i64: 2>, scalar_prefetch = 0 : i64, scratch_operands = 1 : i64, tpu.core_type = #tpu.core_type<tc>, window_params = [{transform_indices = @transform_0, window_bounds = array<i64: 1, 4, 256>}, {pipeline_mode = #tpu.pipeline_mode<synchronous>, transform_indices = @transform_1, window_bounds = array<i64: 9, 8, 8>}, {pipeline_mode = #tpu.pipeline_mode<synchronous>, transform_indices = @transform_2, window_bounds = array<i64: 9, 8, 8>}, {pipeline_mode = #tpu.pipeline_mode<synchronous>, transform_indices = @transform_3, window_bounds = array<i64: 1, 384>}, {transform_indices = @transform_4, window_bounds = array<i64: 1, 4, 256>}]} {
    %cst = arith.constant 0.000000e+00 : f32
    %0 = vector.broadcast %cst : f32 to vector<8x384xf32>
    %c0 = arith.constant 0 : index
    %c0_0 = arith.constant 0 : index
    %1 = vector.load %arg6[%c0, %c0_0] : memref<8x384xf32, #tpu.memory_space<vmem>>, vector<8x384xf32>
    tpu.vector_store %arg6[%c0, %c0_0], %0 {strides = array<i32>} : memref<8x384xf32, #tpu.memory_space<vmem>>, vector<8x384xf32>,
    %c0_1 = arith.constant 0 : index
    %c0_2 = arith.constant 0 : index
    %c0_3 = arith.constant 0 : index
    %2 = vector.load %arg1[%c0_1, %c0_2, %c0_3] : memref<1x4x256xf32, #tpu.memory_space<vmem>>, vector<1x4x16xf32>
    %3 = vector.shape_cast %2 : vector<1x4x16xf32> to vector<4x16xf32>
    %c0_4 = arith.constant 0 : index
    %c19 = arith.constant 19 : index
    %4 = vector.load %arg6[%c0_4, %c19] : memref<8x384xf32, #tpu.memory_space<vmem>>, vector<4x16xf32>
    tpu.vector_store %arg6[%c0_4, %c19], %3 {strides = array<i32>} : memref<8x384xf32, #tpu.memory_space<vmem>>, vector<4x16xf32>,
    %c0_5 = arith.constant 0 : index
    %c0_6 = arith.constant 0 : index
    %c16 = arith.constant 16 : index
    %5 = vector.load %arg1[%c0_5, %c0_6, %c16] : memref<1x4x256xf32, #tpu.memory_space<vmem>>, vector<1x4x16xf32>
    %6 = vector.shape_cast %5 : vector<1x4x16xf32> to vector<4x16xf32>
    %c0_7 = arith.constant 0 : index
    %c37 = arith.constant 37 : index
    %7 = vector.load %arg6[%c0_7, %c37] : memref<8x384xf32, #tpu.memory_space<vmem>>, vector<4x16xf32>
    tpu.vector_store %arg6[%c0_7, %c37], %6 {strides = array<i32>} : memref<8x384xf32, #tpu.memory_space<vmem>>, vector<4x16xf32>,
    %c0_8 = arith.constant 0 : index
    %c0_9 = arith.constant 0 : index
    %c32 = arith.constant 32 : index
    %8 = vector.load %arg1[%c0_8, %c0_9, %c32] : memref<1x4x256xf32, #tpu.memory_space<vmem>>, vector<1x4x16xf32>
    %9 = vector.shape_cast %8 : vector<1x4x16xf32> to vector<4x16xf32>
    %c0_10 = arith.constant 0 : index
    %c55 = arith.constant 55 : index
    %10 = vector.load %arg6[%c0_10, %c55] : memref<8x384xf32, #tpu.memory_space<vmem>>, vector<4x16xf32>
    tpu.vector_store %arg6[%c0_10, %c55], %9 {strides = array<i32>} : memref<8x384xf32, #tpu.memory_space<vmem>>, vector<4x16xf32>,
    %c0_11 = arith.constant 0 : index
    %c0_12 = arith.constant 0 : index
    %c48 = arith.constant 48 : index
    %11 = vector.load %arg1[%c0_11, %c0_12, %c48] : memref<1x4x256xf32, #tpu.memory_space<vmem>>, vector<1x4x16xf32>
    %12 = vector.shape_cast %11 : vector<1x4x16xf32> to vector<4x16xf32>
    %c0_13 = arith.constant 0 : index
    %c73 = arith.constant 73 : index
    %13 = vector.load %arg6[%c0_13, %c73] : memref<8x384xf32, #tpu.memory_space<vmem>>, vector<4x16xf32>
    tpu.vector_store %arg6[%c0_13, %c73], %12 {strides = array<i32>} : memref<8x384xf32, #tpu.memory_space<vmem>>, vector<4x16xf32>,
    %c0_14 = arith.constant 0 : index
    %c0_15 = arith.constant 0 : index
    %c64 = arith.constant 64 : index
    %14 = vector.load %arg1[%c0_14, %c0_15, %c64] : memref<1x4x256xf32, #tpu.memory_space<vmem>>, vector<1x4x16xf32>
    %15 = vector.shape_cast %14 : vector<1x4x16xf32> to vector<4x16xf32>
    %c0_16 = arith.constant 0 : index
    %c91 = arith.constant 91 : index
    %16 = vector.load %arg6[%c0_16, %c91] : memref<8x384xf32, #tpu.memory_space<vmem>>, vector<4x16xf32>
    tpu.vector_store %arg6[%c0_16, %c91], %15 {strides = array<i32>} : memref<8x384xf32, #tpu.memory_space<vmem>>, vector<4x16xf32>,
    %c0_17 = arith.constant 0 : index
    %c0_18 = arith.constant 0 : index
    %c80 = arith.constant 80 : index
    %17 = vector.load %arg1[%c0_17, %c0_18, %c80] : memref<1x4x256xf32, #tpu.memory_space<vmem>>, vector<1x4x16xf32>
    %18 = vector.shape_cast %17 : vector<1x4x16xf32> to vector<4x16xf32>
    %c0_19 = arith.constant 0 : index
    %c109 = arith.constant 109 : index
    %19 = vector.load %arg6[%c0_19, %c109] : memref<8x384xf32, #tpu.memory_space<vmem>>, vector<4x16xf32>
    tpu.vector_store %arg6[%c0_19, %c109], %18 {strides = array<i32>} : memref<8x384xf32, #tpu.memory_space<vmem>>, vector<4x16xf32>,
    %c0_20 = arith.constant 0 : index
    %c0_21 = arith.constant 0 : index
    %c96 = arith.constant 96 : index
    %20 = vector.load %arg1[%c0_20, %c0_21, %c96] : memref<1x4x256xf32, #tpu.memory_space<vmem>>, vector<1x4x16xf32>
    %21 = vector.shape_cast %20 : vector<1x4x16xf32> to vector<4x16xf32>
    %c0_22 = arith.constant 0 : index
    %c127 = arith.constant 127 : index
    %22 = vector.load %arg6[%c0_22, %c127] : memref<8x384xf32, #tpu.memory_space<vmem>>, vector<4x16xf32>
    tpu.vector_store %arg6[%c0_22, %c127], %21 {strides = array<i32>} : memref<8x384xf32, #tpu.memory_space<vmem>>, vector<4x16xf32>,
    %c0_23 = arith.constant 0 : index
    %c0_24 = arith.constant 0 : index
    %c112 = arith.constant 112 : index
    %23 = vector.load %arg1[%c0_23, %c0_24, %c112] : memref<1x4x256xf32, #tpu.memory_space<vmem>>, vector<1x4x16xf32>
    %24 = vector.shape_cast %23 : vector<1x4x16xf32> to vector<4x16xf32>
    %c0_25 = arith.constant 0 : index
    %c145 = arith.constant 145 : index
    %25 = vector.load %arg6[%c0_25, %c145] : memref<8x384xf32, #tpu.memory_space<vmem>>, vector<4x16xf32>
    tpu.vector_store %arg6[%c0_25, %c145], %24 {strides = array<i32>} : memref<8x384xf32, #tpu.memory_space<vmem>>, vector<4x16xf32>,
    %c0_26 = arith.constant 0 : index
    %c0_27 = arith.constant 0 : index
    %c128 = arith.constant 128 : index
    %26 = vector.load %arg1[%c0_26, %c0_27, %c128] : memref<1x4x256xf32, #tpu.memory_space<vmem>>, vector<1x4x16xf32>
    %27 = vector.shape_cast %26 : vector<1x4x16xf32> to vector<4x16xf32>
    %c0_28 = arith.constant 0 : index
    %c163 = arith.constant 163 : index
    %28 = vector.load %arg6[%c0_28, %c163] : memref<8x384xf32, #tpu.memory_space<vmem>>, vector<4x16xf32>
    tpu.vector_store %arg6[%c0_28, %c163], %27 {strides = array<i32>} : memref<8x384xf32, #tpu.memory_space<vmem>>, vector<4x16xf32>,
    %c0_29 = arith.constant 0 : index
    %c0_30 = arith.constant 0 : index
    %c144 = arith.constant 144 : index
    %29 = vector.load %arg1[%c0_29, %c0_30, %c144] : memref<1x4x256xf32, #tpu.memory_space<vmem>>, vector<1x4x16xf32>
    %30 = vector.shape_cast %29 : vector<1x4x16xf32> to vector<4x16xf32>
    %c0_31 = arith.constant 0 : index
    %c181 = arith.constant 181 : index
    %31 = vector.load %arg6[%c0_31, %c181] : memref<8x384xf32, #tpu.memory_space<vmem>>, vector<4x16xf32>
    tpu.vector_store %arg6[%c0_31, %c181], %30 {strides = array<i32>} : memref<8x384xf32, #tpu.memory_space<vmem>>, vector<4x16xf32>,
    %c0_32 = arith.constant 0 : index
    %c0_33 = arith.constant 0 : index
    %c160 = arith.constant 160 : index
    %32 = vector.load %arg1[%c0_32, %c0_33, %c160] : memref<1x4x256xf32, #tpu.memory_space<vmem>>, vector<1x4x16xf32>
    %33 = vector.shape_cast %32 : vector<1x4x16xf32> to vector<4x16xf32>
    %c0_34 = arith.constant 0 : index
    %c199 = arith.constant 199 : index
    %34 = vector.load %arg6[%c0_34, %c199] : memref<8x384xf32, #tpu.memory_space<vmem>>, vector<4x16xf32>
    tpu.vector_store %arg6[%c0_34, %c199], %33 {strides = array<i32>} : memref<8x384xf32, #tpu.memory_space<vmem>>, vector<4x16xf32>,
    %c0_35 = arith.constant 0 : index
    %c0_36 = arith.constant 0 : index
    %c176 = arith.constant 176 : index
    %35 = vector.load %arg1[%c0_35, %c0_36, %c176] : memref<1x4x256xf32, #tpu.memory_space<vmem>>, vector<1x4x16xf32>
    %36 = vector.shape_cast %35 : vector<1x4x16xf32> to vector<4x16xf32>
    %c0_37 = arith.constant 0 : index
    %c217 = arith.constant 217 : index
    %37 = vector.load %arg6[%c0_37, %c217] : memref<8x384xf32, #tpu.memory_space<vmem>>, vector<4x16xf32>
    tpu.vector_store %arg6[%c0_37, %c217], %36 {strides = array<i32>} : memref<8x384xf32, #tpu.memory_space<vmem>>, vector<4x16xf32>,
    %c0_38 = arith.constant 0 : index
    %c0_39 = arith.constant 0 : index
    %c192 = arith.constant 192 : index
    %38 = vector.load %arg1[%c0_38, %c0_39, %c192] : memref<1x4x256xf32, #tpu.memory_space<vmem>>, vector<1x4x16xf32>
    %39 = vector.shape_cast %38 : vector<1x4x16xf32> to vector<4x16xf32>
    %c0_40 = arith.constant 0 : index
    %c235 = arith.constant 235 : index
    %40 = vector.load %arg6[%c0_40, %c235] : memref<8x384xf32, #tpu.memory_space<vmem>>, vector<4x16xf32>
    tpu.vector_store %arg6[%c0_40, %c235], %39 {strides = array<i32>} : memref<8x384xf32, #tpu.memory_space<vmem>>, vector<4x16xf32>,
    %c0_41 = arith.constant 0 : index
    %c0_42 = arith.constant 0 : index
    %c208 = arith.constant 208 : index
    %41 = vector.load %arg1[%c0_41, %c0_42, %c208] : memref<1x4x256xf32, #tpu.memory_space<vmem>>, vector<1x4x16xf32>
    %42 = vector.shape_cast %41 : vector<1x4x16xf32> to vector<4x16xf32>
    %c0_43 = arith.constant 0 : index
    %c253 = arith.constant 253 : index
    %43 = vector.load %arg6[%c0_43, %c253] : memref<8x384xf32, #tpu.memory_space<vmem>>, vector<4x16xf32>
    tpu.vector_store %arg6[%c0_43, %c253], %42 {strides = array<i32>} : memref<8x384xf32, #tpu.memory_space<vmem>>, vector<4x16xf32>,
    %c0_44 = arith.constant 0 : index
    %c0_45 = arith.constant 0 : index
    %c224 = arith.constant 224 : index
    %44 = vector.load %arg1[%c0_44, %c0_45, %c224] : memref<1x4x256xf32, #tpu.memory_space<vmem>>, vector<1x4x16xf32>
    %45 = vector.shape_cast %44 : vector<1x4x16xf32> to vector<4x16xf32>
    %c0_46 = arith.constant 0 : index
    %c271 = arith.constant 271 : index
    %46 = vector.load %arg6[%c0_46, %c271] : memref<8x384xf32, #tpu.memory_space<vmem>>, vector<4x16xf32>
    tpu.vector_store %arg6[%c0_46, %c271], %45 {strides = array<i32>} : memref<8x384xf32, #tpu.memory_space<vmem>>, vector<4x16xf32>,
    %c0_47 = arith.constant 0 : index
    %c0_48 = arith.constant 0 : index
    %c240 = arith.constant 240 : index
    %47 = vector.load %arg1[%c0_47, %c0_48, %c240] : memref<1x4x256xf32, #tpu.memory_space<vmem>>, vector<1x4x16xf32>
    %48 = vector.shape_cast %47 : vector<1x4x16xf32> to vector<4x16xf32>
    %c0_49 = arith.constant 0 : index
    %c289 = arith.constant 289 : index
    %49 = vector.load %arg6[%c0_49, %c289] : memref<8x384xf32, #tpu.memory_space<vmem>>, vector<4x16xf32>
    tpu.vector_store %arg6[%c0_49, %c289], %48 {strides = array<i32>} : memref<8x384xf32, #tpu.memory_space<vmem>>, vector<4x16xf32>,
    %c0_50 = arith.constant 0 : index
    %c0_51 = arith.constant 0 : index
    %50 = vector.load %arg6[%c0_50, %c0_51] : memref<8x384xf32, #tpu.memory_space<vmem>>, vector<8x384xf32>
    %c0_52 = arith.constant 0 : index
    %c0_53 = arith.constant 0 : index
    %51 = vector.load %arg4[%c0_52, %c0_53] : memref<1x384xf32, #tpu.memory_space<vmem>>, vector<1x384xf32>
    %52 = vector.shape_cast %51 : vector<1x384xf32> to vector<1x384xf32>
    %53 = vector.broadcast %52 : vector<1x384xf32> to vector<8x384xf32>
    %c19_i32 = arith.constant 19 : i32
    %54 = tpu.dynamic_rotate %50 by %c19_i32 dim 1 : vector<8x384xf32>, i32 -> vector<8x384xf32>
    %c0_54 = arith.constant 0 : index
    %c0_55 = arith.constant 0 : index
    %c0_56 = arith.constant 0 : index
    %55 = vector.load %arg2[%c0_54, %c0_55, %c0_56] : memref<9x8x8xf32, #tpu.memory_space<vmem>>, vector<1x8x8xf32>
    %56 = vector.shape_cast %55 : vector<1x8x8xf32> to vector<8x8xf32>
    %cst_57 = arith.constant dense<0.000000e+00> : vector<8x384xf32>
    %57 = tpu.matmul %56, %54, %cst_57 {dimension_numbers = #tpu.dot_dimension_numbers<[1], [0], [0], [1], [0, 0, 1, 1], [], []>} : vector<8x8xf32>, vector<8x384xf32>, vector<8x384xf32> -> vector<8x384xf32>
    %c18_i32 = arith.constant 18 : i32
    %58 = tpu.dynamic_rotate %50 by %c18_i32 dim 1 : vector<8x384xf32>, i32 -> vector<8x384xf32>
    %c1 = arith.constant 1 : index
    %c0_58 = arith.constant 0 : index
    %c0_59 = arith.constant 0 : index
    %59 = vector.load %arg2[%c1, %c0_58, %c0_59] : memref<9x8x8xf32, #tpu.memory_space<vmem>>, vector<1x8x8xf32>
    %60 = vector.shape_cast %59 : vector<1x8x8xf32> to vector<8x8xf32>
    %cst_60 = arith.constant dense<0.000000e+00> : vector<8x384xf32>
    %61 = tpu.matmul %60, %58, %cst_60 {dimension_numbers = #tpu.dot_dimension_numbers<[1], [0], [0], [1], [0, 0, 1, 1], [], []>} : vector<8x8xf32>, vector<8x384xf32>, vector<8x384xf32> -> vector<8x384xf32>
    %62 = arith.addf %57, %61 : vector<8x384xf32>
    %c17_i32 = arith.constant 17 : i32
    %63 = tpu.dynamic_rotate %50 by %c17_i32 dim 1 : vector<8x384xf32>, i32 -> vector<8x384xf32>
    %c2 = arith.constant 2 : index
    %c0_61 = arith.constant 0 : index
    %c0_62 = arith.constant 0 : index
    %64 = vector.load %arg2[%c2, %c0_61, %c0_62] : memref<9x8x8xf32, #tpu.memory_space<vmem>>, vector<1x8x8xf32>
    %65 = vector.shape_cast %64 : vector<1x8x8xf32> to vector<8x8xf32>
    %cst_63 = arith.constant dense<0.000000e+00> : vector<8x384xf32>
    %66 = tpu.matmul %65, %63, %cst_63 {dimension_numbers = #tpu.dot_dimension_numbers<[1], [0], [0], [1], [0, 0, 1, 1], [], []>} : vector<8x8xf32>, vector<8x384xf32>, vector<8x384xf32> -> vector<8x384xf32>
    %67 = arith.addf %62, %66 : vector<8x384xf32>
    %c1_i32 = arith.constant 1 : i32
    %68 = tpu.dynamic_rotate %50 by %c1_i32 dim 1 : vector<8x384xf32>, i32 -> vector<8x384xf32>
    %c3 = arith.constant 3 : index
    %c0_64 = arith.constant 0 : index
    %c0_65 = arith.constant 0 : index
    %69 = vector.load %arg2[%c3, %c0_64, %c0_65] : memref<9x8x8xf32, #tpu.memory_space<vmem>>, vector<1x8x8xf32>
    %70 = vector.shape_cast %69 : vector<1x8x8xf32> to vector<8x8xf32>
    %cst_66 = arith.constant dense<0.000000e+00> : vector<8x384xf32>
    %71 = tpu.matmul %70, %68, %cst_66 {dimension_numbers = #tpu.dot_dimension_numbers<[1], [0], [0], [1], [0, 0, 1, 1], [], []>} : vector<8x8xf32>, vector<8x384xf32>, vector<8x384xf32> -> vector<8x384xf32>
    %72 = arith.addf %67, %71 : vector<8x384xf32>
    %c4 = arith.constant 4 : index
    %c0_67 = arith.constant 0 : index
    %c0_68 = arith.constant 0 : index
    %73 = vector.load %arg2[%c4, %c0_67, %c0_68] : memref<9x8x8xf32, #tpu.memory_space<vmem>>, vector<1x8x8xf32>
    %74 = vector.shape_cast %73 : vector<1x8x8xf32> to vector<8x8xf32>
    %cst_69 = arith.constant dense<0.000000e+00> : vector<8x384xf32>
    %75 = tpu.matmul %74, %50, %cst_69 {dimension_numbers = #tpu.dot_dimension_numbers<[1], [0], [0], [1], [0, 0, 1, 1], [], []>} : vector<8x8xf32>, vector<8x384xf32>, vector<8x384xf32> -> vector<8x384xf32>
    %76 = arith.addf %72, %75 : vector<8x384xf32>
    %c383_i32 = arith.constant 383 : i32
    %77 = tpu.dynamic_rotate %50 by %c383_i32 dim 1 : vector<8x384xf32>, i32 -> vector<8x384xf32>
    %c5 = arith.constant 5 : index
    %c0_70 = arith.constant 0 : index
    %c0_71 = arith.constant 0 : index
    %78 = vector.load %arg2[%c5, %c0_70, %c0_71] : memref<9x8x8xf32, #tpu.memory_space<vmem>>, vector<1x8x8xf32>
    %79 = vector.shape_cast %78 : vector<1x8x8xf32> to vector<8x8xf32>
    %cst_72 = arith.constant dense<0.000000e+00> : vector<8x384xf32>
    %80 = tpu.matmul %79, %77, %cst_72 {dimension_numbers = #tpu.dot_dimension_numbers<[1], [0], [0], [1], [0, 0, 1, 1], [], []>} : vector<8x8xf32>, vector<8x384xf32>, vector<8x384xf32> -> vector<8x384xf32>
    %81 = arith.addf %76, %80 : vector<8x384xf32>
    %c367_i32 = arith.constant 367 : i32
    %82 = tpu.dynamic_rotate %50 by %c367_i32 dim 1 : vector<8x384xf32>, i32 -> vector<8x384xf32>
    %c6 = arith.constant 6 : index
    %c0_73 = arith.constant 0 : index
    %c0_74 = arith.constant 0 : index
    %83 = vector.load %arg2[%c6, %c0_73, %c0_74] : memref<9x8x8xf32, #tpu.memory_space<vmem>>, vector<1x8x8xf32>
    %84 = vector.shape_cast %83 : vector<1x8x8xf32> to vector<8x8xf32>
    %cst_75 = arith.constant dense<0.000000e+00> : vector<8x384xf32>
    %85 = tpu.matmul %84, %82, %cst_75 {dimension_numbers = #tpu.dot_dimension_numbers<[1], [0], [0], [1], [0, 0, 1, 1], [], []>} : vector<8x8xf32>, vector<8x384xf32>, vector<8x384xf32> -> vector<8x384xf32>
    %86 = arith.addf %81, %85 : vector<8x384xf32>
    %c366_i32 = arith.constant 366 : i32
    %87 = tpu.dynamic_rotate %50 by %c366_i32 dim 1 : vector<8x384xf32>, i32 -> vector<8x384xf32>
    %c7 = arith.constant 7 : index
    %c0_76 = arith.constant 0 : index
    %c0_77 = arith.constant 0 : index
    %88 = vector.load %arg2[%c7, %c0_76, %c0_77] : memref<9x8x8xf32, #tpu.memory_space<vmem>>, vector<1x8x8xf32>
    %89 = vector.shape_cast %88 : vector<1x8x8xf32> to vector<8x8xf32>
    %cst_78 = arith.constant dense<0.000000e+00> : vector<8x384xf32>
    %90 = tpu.matmul %89, %87, %cst_78 {dimension_numbers = #tpu.dot_dimension_numbers<[1], [0], [0], [1], [0, 0, 1, 1], [], []>} : vector<8x8xf32>, vector<8x384xf32>, vector<8x384xf32> -> vector<8x384xf32>
    %91 = arith.addf %86, %90 : vector<8x384xf32>
    %c365_i32 = arith.constant 365 : i32
    %92 = tpu.dynamic_rotate %50 by %c365_i32 dim 1 : vector<8x384xf32>, i32 -> vector<8x384xf32>
    %c8 = arith.constant 8 : index
    %c0_79 = arith.constant 0 : index
    %c0_80 = arith.constant 0 : index
    %93 = vector.load %arg2[%c8, %c0_79, %c0_80] : memref<9x8x8xf32, #tpu.memory_space<vmem>>, vector<1x8x8xf32>
    %94 = vector.shape_cast %93 : vector<1x8x8xf32> to vector<8x8xf32>
    %cst_81 = arith.constant dense<0.000000e+00> : vector<8x384xf32>
    %95 = tpu.matmul %94, %92, %cst_81 {dimension_numbers = #tpu.dot_dimension_numbers<[1], [0], [0], [1], [0, 0, 1, 1], [], []>} : vector<8x8xf32>, vector<8x384xf32>, vector<8x384xf32> -> vector<8x384xf32>
    %96 = arith.addf %91, %95 : vector<8x384xf32>
    %97 = arith.mulf %96, %53 : vector<8x384xf32>
    %cst_82 = arith.constant dense<0.000000e+00> : vector<8xf32>
    %98 = vector.multi_reduction <add>, %97, %cst_82 [1] : vector<8x384xf32> to vector<8xf32>
    %99 = vector.shape_cast %98 : vector<8xf32> to vector<8x1xf32>
    %cst_83 = arith.constant 3.906250e-03 : f32
    %100 = vector.broadcast %cst_83 : f32 to vector<8x1xf32>
    %101 = arith.mulf %99, %100 : vector<8x1xf32>
    %102 = arith.mulf %97, %96 : vector<8x384xf32>
    %cst_84 = arith.constant dense<0.000000e+00> : vector<8xf32>
    %103 = vector.multi_reduction <add>, %102, %cst_84 [1] : vector<8x384xf32> to vector<8xf32>
    %104 = vector.shape_cast %103 : vector<8xf32> to vector<8x1xf32>
    %cst_85 = arith.constant 3.906250e-03 : f32
    %105 = vector.broadcast %cst_85 : f32 to vector<8x1xf32>
    %106 = arith.mulf %104, %105 : vector<8x1xf32>
    %107 = arith.mulf %101, %101 : vector<8x1xf32>
    %108 = arith.subf %106, %107 : vector<8x1xf32>
    %109 = vector.broadcast %101 : vector<8x1xf32> to vector<8x384xf32>
    %110 = arith.subf %96, %109 : vector<8x384xf32>
    %cst_86 = arith.constant 9.99999974E-6 : f32
    %111 = vector.broadcast %cst_86 : f32 to vector<8x1xf32>
    %112 = arith.addf %108, %111 : vector<8x1xf32>
    %113 = math.rsqrt %112 : vector<8x1xf32>
    %114 = vector.broadcast %113 : vector<8x1xf32> to vector<8x384xf32>
    %115 = arith.mulf %110, %114 : vector<8x384xf32>
    %116 = arith.mulf %115, %53 : vector<8x384xf32>
    %cst_87 = arith.constant 0.000000e+00 : f32
    %117 = vector.broadcast %cst_87 : f32 to vector<8x384xf32>
    %118 = arith.maximumf %116, %117 : vector<8x384xf32>
    %c19_i32_88 = arith.constant 19 : i32
    %119 = tpu.dynamic_rotate %118 by %c19_i32_88 dim 1 : vector<8x384xf32>, i32 -> vector<8x384xf32>
    %c0_89 = arith.constant 0 : index
    %c0_90 = arith.constant 0 : index
    %c0_91 = arith.constant 0 : index
    %120 = vector.load %arg3[%c0_89, %c0_90, %c0_91] : memref<9x8x8xf32, #tpu.memory_space<vmem>>, vector<1x8x8xf32>
    %121 = vector.shape_cast %120 : vector<1x8x8xf32> to vector<8x8xf32>
    %cst_92 = arith.constant dense<0.000000e+00> : vector<8x384xf32>
    %122 = tpu.matmul %121, %119, %cst_92 {dimension_numbers = #tpu.dot_dimension_numbers<[1], [0], [0], [1], [0, 0, 1, 1], [], []>} : vector<8x8xf32>, vector<8x384xf32>, vector<8x384xf32> -> vector<8x384xf32>
    %c18_i32_93 = arith.constant 18 : i32
    %123 = tpu.dynamic_rotate %118 by %c18_i32_93 dim 1 : vector<8x384xf32>, i32 -> vector<8x384xf32>
    %c1_94 = arith.constant 1 : index
    %c0_95 = arith.constant 0 : index
    %c0_96 = arith.constant 0 : index
    %124 = vector.load %arg3[%c1_94, %c0_95, %c0_96] : memref<9x8x8xf32, #tpu.memory_space<vmem>>, vector<1x8x8xf32>
    %125 = vector.shape_cast %124 : vector<1x8x8xf32> to vector<8x8xf32>
    %cst_97 = arith.constant dense<0.000000e+00> : vector<8x384xf32>
    %126 = tpu.matmul %125, %123, %cst_97 {dimension_numbers = #tpu.dot_dimension_numbers<[1], [0], [0], [1], [0, 0, 1, 1], [], []>} : vector<8x8xf32>, vector<8x384xf32>, vector<8x384xf32> -> vector<8x384xf32>
    %127 = arith.addf %122, %126 : vector<8x384xf32>
    %c17_i32_98 = arith.constant 17 : i32
    %128 = tpu.dynamic_rotate %118 by %c17_i32_98 dim 1 : vector<8x384xf32>, i32 -> vector<8x384xf32>
    %c2_99 = arith.constant 2 : index
    %c0_100 = arith.constant 0 : index
    %c0_101 = arith.constant 0 : index
    %129 = vector.load %arg3[%c2_99, %c0_100, %c0_101] : memref<9x8x8xf32, #tpu.memory_space<vmem>>, vector<1x8x8xf32>
    %130 = vector.shape_cast %129 : vector<1x8x8xf32> to vector<8x8xf32>
    %cst_102 = arith.constant dense<0.000000e+00> : vector<8x384xf32>
    %131 = tpu.matmul %130, %128, %cst_102 {dimension_numbers = #tpu.dot_dimension_numbers<[1], [0], [0], [1], [0, 0, 1, 1], [], []>} : vector<8x8xf32>, vector<8x384xf32>, vector<8x384xf32> -> vector<8x384xf32>
    %132 = arith.addf %127, %131 : vector<8x384xf32>
    %c1_i32_103 = arith.constant 1 : i32
    %133 = tpu.dynamic_rotate %118 by %c1_i32_103 dim 1 : vector<8x384xf32>, i32 -> vector<8x384xf32>
    %c3_104 = arith.constant 3 : index
    %c0_105 = arith.constant 0 : index
    %c0_106 = arith.constant 0 : index
    %134 = vector.load %arg3[%c3_104, %c0_105, %c0_106] : memref<9x8x8xf32, #tpu.memory_space<vmem>>, vector<1x8x8xf32>
    %135 = vector.shape_cast %134 : vector<1x8x8xf32> to vector<8x8xf32>
    %cst_107 = arith.constant dense<0.000000e+00> : vector<8x384xf32>
    %136 = tpu.matmul %135, %133, %cst_107 {dimension_numbers = #tpu.dot_dimension_numbers<[1], [0], [0], [1], [0, 0, 1, 1], [], []>} : vector<8x8xf32>, vector<8x384xf32>, vector<8x384xf32> -> vector<8x384xf32>
    %137 = arith.addf %132, %136 : vector<8x384xf32>
    %c4_108 = arith.constant 4 : index
    %c0_109 = arith.constant 0 : index
    %c0_110 = arith.constant 0 : index
    %138 = vector.load %arg3[%c4_108, %c0_109, %c0_110] : memref<9x8x8xf32, #tpu.memory_space<vmem>>, vector<1x8x8xf32>
    %139 = vector.shape_cast %138 : vector<1x8x8xf32> to vector<8x8xf32>
    %cst_111 = arith.constant dense<0.000000e+00> : vector<8x384xf32>
    %140 = tpu.matmul %139, %118, %cst_111 {dimension_numbers = #tpu.dot_dimension_numbers<[1], [0], [0], [1], [0, 0, 1, 1], [], []>} : vector<8x8xf32>, vector<8x384xf32>, vector<8x384xf32> -> vector<8x384xf32>
    %141 = arith.addf %137, %140 : vector<8x384xf32>
    %c383_i32_112 = arith.constant 383 : i32
    %142 = tpu.dynamic_rotate %118 by %c383_i32_112 dim 1 : vector<8x384xf32>, i32 -> vector<8x384xf32>
    %c5_113 = arith.constant 5 : index
    %c0_114 = arith.constant 0 : index
    %c0_115 = arith.constant 0 : index
    %143 = vector.load %arg3[%c5_113, %c0_114, %c0_115] : memref<9x8x8xf32, #tpu.memory_space<vmem>>, vector<1x8x8xf32>
    %144 = vector.shape_cast %143 : vector<1x8x8xf32> to vector<8x8xf32>
    %cst_116 = arith.constant dense<0.000000e+00> : vector<8x384xf32>
    %145 = tpu.matmul %144, %142, %cst_116 {dimension_numbers = #tpu.dot_dimension_numbers<[1], [0], [0], [1], [0, 0, 1, 1], [], []>} : vector<8x8xf32>, vector<8x384xf32>, vector<8x384xf32> -> vector<8x384xf32>
    %146 = arith.addf %141, %145 : vector<8x384xf32>
    %c367_i32_117 = arith.constant 367 : i32
    %147 = tpu.dynamic_rotate %118 by %c367_i32_117 dim 1 : vector<8x384xf32>, i32 -> vector<8x384xf32>
    %c6_118 = arith.constant 6 : index
    %c0_119 = arith.constant 0 : index
    %c0_120 = arith.constant 0 : index
    %148 = vector.load %arg3[%c6_118, %c0_119, %c0_120] : memref<9x8x8xf32, #tpu.memory_space<vmem>>, vector<1x8x8xf32>
    %149 = vector.shape_cast %148 : vector<1x8x8xf32> to vector<8x8xf32>
    %cst_121 = arith.constant dense<0.000000e+00> : vector<8x384xf32>
    %150 = tpu.matmul %149, %147, %cst_121 {dimension_numbers = #tpu.dot_dimension_numbers<[1], [0], [0], [1], [0, 0, 1, 1], [], []>} : vector<8x8xf32>, vector<8x384xf32>, vector<8x384xf32> -> vector<8x384xf32>
    %151 = arith.addf %146, %150 : vector<8x384xf32>
    %c366_i32_122 = arith.constant 366 : i32
    %152 = tpu.dynamic_rotate %118 by %c366_i32_122 dim 1 : vector<8x384xf32>, i32 -> vector<8x384xf32>
    %c7_123 = arith.constant 7 : index
    %c0_124 = arith.constant 0 : index
    %c0_125 = arith.constant 0 : index
    %153 = vector.load %arg3[%c7_123, %c0_124, %c0_125] : memref<9x8x8xf32, #tpu.memory_space<vmem>>, vector<1x8x8xf32>
    %154 = vector.shape_cast %153 : vector<1x8x8xf32> to vector<8x8xf32>
    %cst_126 = arith.constant dense<0.000000e+00> : vector<8x384xf32>
    %155 = tpu.matmul %154, %152, %cst_126 {dimension_numbers = #tpu.dot_dimension_numbers<[1], [0], [0], [1], [0, 0, 1, 1], [], []>} : vector<8x8xf32>, vector<8x384xf32>, vector<8x384xf32> -> vector<8x384xf32>
    %156 = arith.addf %151, %155 : vector<8x384xf32>
    %c365_i32_127 = arith.constant 365 : i32
    %157 = tpu.dynamic_rotate %118 by %c365_i32_127 dim 1 : vector<8x384xf32>, i32 -> vector<8x384xf32>
    %c8_128 = arith.constant 8 : index
    %c0_129 = arith.constant 0 : index
    %c0_130 = arith.constant 0 : index
    %158 = vector.load %arg3[%c8_128, %c0_129, %c0_130] : memref<9x8x8xf32, #tpu.memory_space<vmem>>, vector<1x8x8xf32>
    %159 = vector.shape_cast %158 : vector<1x8x8xf32> to vector<8x8xf32>
    %cst_131 = arith.constant dense<0.000000e+00> : vector<8x384xf32>
    %160 = tpu.matmul %159, %157, %cst_131 {dimension_numbers = #tpu.dot_dimension_numbers<[1], [0], [0], [1], [0, 0, 1, 1], [], []>} : vector<8x8xf32>, vector<8x384xf32>, vector<8x384xf32> -> vector<8x384xf32>
    %161 = arith.addf %156, %160 : vector<8x384xf32>
    %162 = arith.mulf %161, %53 : vector<8x384xf32>
    %cst_132 = arith.constant dense<0.000000e+00> : vector<8xf32>
    %163 = vector.multi_reduction <add>, %162, %cst_132 [1] : vector<8x384xf32> to vector<8xf32>
    %164 = vector.shape_cast %163 : vector<8xf32> to vector<8x1xf32>
    %cst_133 = arith.constant 3.906250e-03 : f32
    %165 = vector.broadcast %cst_133 : f32 to vector<8x1xf32>
    %166 = arith.mulf %164, %165 : vector<8x1xf32>
    %167 = arith.mulf %162, %161 : vector<8x384xf32>
    %cst_134 = arith.constant dense<0.000000e+00> : vector<8xf32>
    %168 = vector.multi_reduction <add>, %167, %cst_134 [1] : vector<8x384xf32> to vector<8xf32>
    %169 = vector.shape_cast %168 : vector<8xf32> to vector<8x1xf32>
    %cst_135 = arith.constant 3.906250e-03 : f32
    %170 = vector.broadcast %cst_135 : f32 to vector<8x1xf32>
    %171 = arith.mulf %169, %170 : vector<8x1xf32>
    %172 = arith.mulf %166, %166 : vector<8x1xf32>
    %173 = arith.subf %171, %172 : vector<8x1xf32>
    %174 = vector.broadcast %166 : vector<8x1xf32> to vector<8x384xf32>
    %175 = arith.subf %161, %174 : vector<8x384xf32>
    %cst_136 = arith.constant 9.99999974E-6 : f32
    %176 = vector.broadcast %cst_136 : f32 to vector<8x1xf32>
    %177 = arith.addf %173, %176 : vector<8x1xf32>
    %178 = math.rsqrt %177 : vector<8x1xf32>
    %179 = vector.broadcast %178 : vector<8x1xf32> to vector<8x384xf32>
    %180 = arith.mulf %175, %179 : vector<8x384xf32>
    %181 = vector.extract_strided_slice %180 {offsets = [0, 19], sizes = [4, 16], strides = [1, 1]} : vector<8x384xf32> to vector<4x16xf32>
    %182 = vector.extract_strided_slice %180 {offsets = [0, 37], sizes = [4, 16], strides = [1, 1]} : vector<8x384xf32> to vector<4x16xf32>
    %183 = vector.extract_strided_slice %180 {offsets = [0, 55], sizes = [4, 16], strides = [1, 1]} : vector<8x384xf32> to vector<4x16xf32>
    %184 = vector.extract_strided_slice %180 {offsets = [0, 73], sizes = [4, 16], strides = [1, 1]} : vector<8x384xf32> to vector<4x16xf32>
    %185 = vector.extract_strided_slice %180 {offsets = [0, 91], sizes = [4, 16], strides = [1, 1]} : vector<8x384xf32> to vector<4x16xf32>
    %186 = vector.extract_strided_slice %180 {offsets = [0, 109], sizes = [4, 16], strides = [1, 1]} : vector<8x384xf32> to vector<4x16xf32>
    %187 = vector.extract_strided_slice %180 {offsets = [0, 127], sizes = [4, 16], strides = [1, 1]} : vector<8x384xf32> to vector<4x16xf32>
    %188 = vector.extract_strided_slice %180 {offsets = [0, 145], sizes = [4, 16], strides = [1, 1]} : vector<8x384xf32> to vector<4x16xf32>
    %189 = vector.extract_strided_slice %180 {offsets = [0, 163], sizes = [4, 16], strides = [1, 1]} : vector<8x384xf32> to vector<4x16xf32>
    %190 = vector.extract_strided_slice %180 {offsets = [0, 181], sizes = [4, 16], strides = [1, 1]} : vector<8x384xf32> to vector<4x16xf32>
    %191 = vector.extract_strided_slice %180 {offsets = [0, 199], sizes = [4, 16], strides = [1, 1]} : vector<8x384xf32> to vector<4x16xf32>
    %192 = vector.extract_strided_slice %180 {offsets = [0, 217], sizes = [4, 16], strides = [1, 1]} : vector<8x384xf32> to vector<4x16xf32>
    %193 = vector.extract_strided_slice %180 {offsets = [0, 235], sizes = [4, 16], strides = [1, 1]} : vector<8x384xf32> to vector<4x16xf32>
    %194 = vector.extract_strided_slice %180 {offsets = [0, 253], sizes = [4, 16], strides = [1, 1]} : vector<8x384xf32> to vector<4x16xf32>
    %195 = vector.extract_strided_slice %180 {offsets = [0, 271], sizes = [4, 16], strides = [1, 1]} : vector<8x384xf32> to vector<4x16xf32>
    %196 = vector.extract_strided_slice %180 {offsets = [0, 289], sizes = [4, 16], strides = [1, 1]} : vector<8x384xf32> to vector<4x16xf32>
    %c0_137 = arith.constant 0 : index
    %c0_138 = arith.constant 0 : index
    %c0_139 = arith.constant 0 : index
    %197 = vector.load %arg1[%c0_137, %c0_138, %c0_139] : memref<1x4x256xf32, #tpu.memory_space<vmem>>, vector<1x4x256xf32>
    %198 = vector.shape_cast %197 : vector<1x4x256xf32> to vector<4x256xf32>
    %199 = tpu.concatenate %181, %182, %183, %184, %185, %186, %187, %188, %189, %190, %191, %192, %193, %194, %195, %196 in 1 : vector<4x16xf32>, vector<4x16xf32>, vector<4x16xf32>, vector<4x16xf32>, vector<4x16xf32>, vector<4x16xf32>, vector<4x16xf32>, vector<4x16xf32>, vector<4x16xf32>, vector<4x16xf32>, vector<4x16xf32>, vector<4x16xf32>, vector<4x16xf32>, vector<4x16xf32>, vector<4x16xf32>, vector<4x16xf32> -> vector<4x256xf32>
    %200 = arith.addf %198, %199 : vector<4x256xf32>
    %c0_140 = arith.constant 0 : index
    %c0_141 = arith.constant 0 : index
    %c0_142 = arith.constant 0 : index
    %201 = vector.load %arg5[%c0_140, %c0_141, %c0_142] : memref<1x4x256xf32, #tpu.memory_space<vmem>>, vector<1x4x256xf32>
    %202 = vector.shape_cast %201 : vector<1x4x256xf32> to vector<4x256xf32>
    %203 = vector.shape_cast %200 : vector<4x256xf32> to vector<1x4x256xf32>
    tpu.vector_store %arg5[%c0_140, %c0_141, %c0_142], %203 {strides = array<i32>} : memref<1x4x256xf32, #tpu.memory_space<vmem>>, vector<1x4x256xf32>,
    return
  }
  func.func @transform_0(%arg0: i32) -> (i32, i32, i32) {
    %c0_i32 = arith.constant 0 : i32
    %c0_i32_0 = arith.constant 0 : i32
    %c0_i32_1 = arith.constant 0 : i32
    return %arg0, %c0_i32, %c0_i32_0 : i32, i32, i32
  }
  func.func @transform_1(%arg0: i32) -> (i32, i32, i32) {
    %c0_i32 = arith.constant 0 : i32
    %c0_i32_0 = arith.constant 0 : i32
    %c0_i32_1 = arith.constant 0 : i32
    %c0_i32_2 = arith.constant 0 : i32
    return %c0_i32, %c0_i32_0, %c0_i32_1 : i32, i32, i32
  }
  func.func @transform_2(%arg0: i32) -> (i32, i32, i32) {
    %c0_i32 = arith.constant 0 : i32
    %c0_i32_0 = arith.constant 0 : i32
    %c0_i32_1 = arith.constant 0 : i32
    %c0_i32_2 = arith.constant 0 : i32
    return %c0_i32, %c0_i32_0, %c0_i32_1 : i32, i32, i32
  }
  func.func @transform_3(%arg0: i32) -> (i32, i32) {
    %c0_i32 = arith.constant 0 : i32
    %c0_i32_0 = arith.constant 0 : i32
    %c0_i32_1 = arith.constant 0 : i32
    return %c0_i32, %c0_i32_0 : i32, i32
  }
  func.func @transform_4(%arg0: i32) -> (i32, i32, i32) {
    %c0_i32 = arith.constant 0 : i32
    %c0_i32_0 = arith.constant 0 : i32
    %c0_i32_1 = arith.constant 0 : i32
    return %arg0, %c0_i32, %c0_i32_0 : i32, i32, i32
  }
}

</mosaic_0001>

<llo_original>
// kernel: tpu_custom_call.1
$region0: #{tpu_custom_call.1}
  #allocation0 [shape = 'u32[]', space=smem, size = 0x4, offset = 0x4, fixed_abs, tag = 'smem constant byte address 0x4 - core index']
  #allocation1 [shape = 'u32[144,128]{1,0:T(1,128)}', space=vmem, size = 0x12000, scoped, tag = 'internal scratch']
  #allocation2 [shape = 'f32[8,384]{1,0:T(8,128)}', space=vmem, size = 0x3000, scoped, tag = 'scratch operand']
  %s0 = inlined_call_operand.vmem [shape: f32[2,4,256], index: 0, kind: input, shape index: {}]
  %s1 = inlined_call_operand.vmem [shape: f32[9,8,8], index: 1, kind: input, shape index: {}]
  %s2 = inlined_call_operand.vmem [shape: f32[9,8,8], index: 2, kind: input, shape index: {}]
  %s3 = inlined_call_operand.vmem [shape: f32[1,384], index: 3, kind: input, shape index: {}]
  %s4 = inlined_call_operand.hbm [shape: f32[2,4,256], index: 4, kind: output, shape index: {}]
  %s5 = sld [smem:[#allocation0]]
  $region49: #{tpu_custom_call.1} parent=0
    _
  %s7 = ssub.s32 1, %s5
  %s8 = scalar_select 0, %s7, %s5
  $region1: #{tpu_custom_call.1} parent=0
    #allocation3 [shape = 'u8[8192]{0}', space=vmem, size = 0x2000, scoped, tag = 'output window, operand 0']
    #allocation4 [shape = 's32[2]{0}', space=sflag, size = 0x8, scoped, tag = 'scoped memory for tpu_custom_call.1']
    %9 = vsyncpa [#allocation4], 0
    %s10 = scalar_lea.sflag [#allocation4], 1
    %11 = vsyncpa %s10, 0
    loop: start=0, step=1, limit=4
    $region2: #{tpu_custom_call.1} parent=1 // loop_pre_header
      _
    $region3: #{tpu_custom_call.1} parent=1 // loop_header
      %s13 = sphi 0, %s17
      %p14 = scmp.ge.s32.totalorder %s13, 4
      %s23 = sphi 0, %s25
      %s26 = sphi 0, %s23
      %s27 = sphi 0, %s26
      %s43 = sphi 0, %s27
      %s47 = sphi 0, %s47
      %s49 = sphi 0, %s47
      %s50 = sphi 0, %s49
      %s64 = sphi 0, %s50
      %s68 = sphi 0, %s68
      %s70 = sphi 0, %s68
      %s71 = sphi 0, %s70
      %s85 = sphi 0, %s71
      %s89 = sphi 0, %s89
      %s91 = sphi 0, %s89
      %s92 = sphi 0, %s91
      %s106 = sphi 0, %s92
      %s112 = sphi 0, %s114
      %s115 = sphi 0, %s112
      %s116 = sphi 0, %s115
      %s132 = sphi 0, %s116
    $region4: #{tpu_custom_call.1} parent=1 // loop_header_branch
      %16 = sbr.rel (%p14) target = $region8
    $region5: #{tpu_custom_call.1} parent=1 // loop_body
      %s18 = ssub.s32 %s13, 1
      %s19 = ssub.s32 %s13, 2
      %s20 = sadd.s32 %s13, 1
      %s21 = ssub.s32 %s13, %s20
      %p22 = scmp.eq.s32.totalorder %s21, 0
      %s24 = sadd.s32 %s23, 1
      %s25 = scalar_select %p22, %s23, %s24
      %p28 = pneg %p22
      %p29 = scmp.eq.s32.totalorder %s13, 1
      %p30 = por %p28, %p29
      %p31 = scmp.ne.s32.totalorder %s23, %s26
      %p32 = scmp.eq.s32.totalorder %s13, 0
      %p33 = por %p31, %p32
      %p34 = scmp.ne.s32.totalorder %s23, %s26
      %p35 = scmp.eq.s32.totalorder %s18, 1
      %p36 = por %p34, %p35
      %p37 = scmp.ne.s32.totalorder %s26, %s27
      %p38 = scmp.eq.s32.totalorder %s18, 0
      %p39 = por %p37, %p38
      %p40 = scmp.ne.s32.totalorder %s26, %s27
      %p41 = scmp.eq.s32.totalorder %s19, 1
      %p42 = por %p40, %p41
      %p44 = scmp.ne.s32.totalorder %s27, %s43
      %p45 = scmp.eq.s32.totalorder %s19, 0
      %p46 = por %p44, %p45
      %s48 = sadd.s32 %s47, 1
      %p51 = scmp.eq.s32.totalorder %s13, 1
      %p52 = scmp.ne.s32.totalorder %s47, %s49
      %p53 = scmp.eq.s32.totalorder %s13, 0
      %p54 = por %p52, %p53
      %p55 = scmp.ne.s32.totalorder %s47, %s49
      %p56 = scmp.eq.s32.totalorder %s18, 1
      %p57 = por %p55, %p56
      %p58 = scmp.ne.s32.totalorder %s49, %s50
      %p59 = scmp.eq.s32.totalorder %s18, 0
      %p60 = por %p58, %p59
      %p61 = scmp.ne.s32.totalorder %s49, %s50
      %p62 = scmp.eq.s32.totalorder %s19, 1
      %p63 = por %p61, %p62
      %p65 = scmp.ne.s32.totalorder %s50, %s64
      %p66 = scmp.eq.s32.totalorder %s19, 0
      %p67 = por %p65, %p66
      %s69 = sadd.s32 %s68, 1
      %p72 = scmp.eq.s32.totalorder %s13, 1
      %p73 = scmp.ne.s32.totalorder %s68, %s70
      %p74 = scmp.eq.s32.totalorder %s13, 0
      %p75 = por %p73, %p74
      %p76 = scmp.ne.s32.totalorder %s68, %s70
      %p77 = scmp.eq.s32.totalorder %s18, 1
      %p78 = por %p76, %p77
      %p79 = scmp.ne.s32.totalorder %s70, %s71
      %p80 = scmp.eq.s32.totalorder %s18, 0
      %p81 = por %p79, %p80
      %p82 = scmp.ne.s32.totalorder %s70, %s71
      %p83 = scmp.eq.s32.totalorder %s19, 1
      %p84 = por %p82, %p83
      %p86 = scmp.ne.s32.totalorder %s71, %s85
      %p87 = scmp.eq.s32.totalorder %s19, 0
      %p88 = por %p86, %p87
      %s90 = sadd.s32 %s89, 1
      %p93 = scmp.eq.s32.totalorder %s13, 1
      %p94 = scmp.ne.s32.totalorder %s89, %s91
      %p95 = scmp.eq.s32.totalorder %s13, 0
      %p96 = por %p94, %p95
      %p97 = scmp.ne.s32.totalorder %s89, %s91
      %p98 = scmp.eq.s32.totalorder %s18, 1
      %p99 = por %p97, %p98
      %p100 = scmp.ne.s32.totalorder %s91, %s92
      %p101 = scmp.eq.s32.totalorder %s18, 0
      %p102 = por %p100, %p101
      %p103 = scmp.ne.s32.totalorder %s91, %s92
      %p104 = scmp.eq.s32.totalorder %s19, 1
      %p105 = por %p103, %p104
      %p107 = scmp.ne.s32.totalorder %s92, %s106
      %p108 = scmp.eq.s32.totalorder %s19, 0
      %p109 = por %p107, %p108
      %s110 = ssub.s32 %s13, %s20
      %p111 = scmp.eq.s32.totalorder %s110, 0
      %s113 = sadd.s32 %s112, 1
      %s114 = scalar_select %p111, %s112, %s113
      %p117 = pneg %p111
      %p118 = scmp.eq.s32.totalorder %s13, 1
      %p119 = por %p117, %p118
      %p120 = scmp.ne.s32.totalorder %s112, %s115
      %p121 = scmp.eq.s32.totalorder %s13, 0
      %p122 = por %p120, %p121
      %p123 = scmp.ne.s32.totalorder %s112, %s115
      %p124 = scmp.eq.s32.totalorder %s18, 1
      %p125 = por %p123, %p124
      %p126 = scmp.ne.s32.totalorder %s115, %s116
      %p127 = scmp.eq.s32.totalorder %s18, 0
      %p128 = por %p126, %p127
      %p129 = scmp.ne.s32.totalorder %s115, %s116
      %p130 = scmp.eq.s32.totalorder %s19, 1
      %p131 = por %p129, %p130
      %p133 = scmp.ne.s32.totalorder %s116, %s132
      %p134 = scmp.eq.s32.totalorder %s19, 0
      %p135 = por %p133, %p134
      %p136 = scmp.le.s32.totalorder 1, %s13
      %p137 = scmp.lt.s32.totalorder %s13, 3
      %p138 = pnand %p136, %p137
      %p139 = pneg %p138
      // Predicated region
      $region9: #{tpu_custom_call.1} parent=5 // pred_check
        _
      $region10: #{tpu_custom_call.1} parent=5 // pred_check_branch
        %141 = sbr.rel (%p138) target = $region12
      $region11: #{tpu_custom_call.1} parent=5 // pred_region
        %s142 = ssub.s32 %s13, 1
        // Predicated region
        $region13: #{tpu_custom_call.1} parent=11 // pred_check
          %p143 = pneg %p60
        $region14: #{tpu_custom_call.1} parent=11 // pred_check_branch
          %145 = sbr.rel (%p143) target = $region16
        $region15: #{tpu_custom_call.1} parent=11 // pred_region
          _
        $region16: #{tpu_custom_call.1} parent=11 // pred_fallthru
          _
        // Predicated region
        $region17: #{tpu_custom_call.1} parent=11 // pred_check
          %p146 = pneg %p81
        $region18: #{tpu_custom_call.1} parent=11 // pred_check_branch
          %148 = sbr.rel (%p146) target = $region20
        $region19: #{tpu_custom_call.1} parent=11 // pred_region
          _
        $region20: #{tpu_custom_call.1} parent=11 // pred_fallthru
          _
        // Predicated region
        $region21: #{tpu_custom_call.1} parent=11 // pred_check
          %p149 = pneg %p102
        $region22: #{tpu_custom_call.1} parent=11 // pred_check_branch
          %151 = sbr.rel (%p149) target = $region24
        $region23: #{tpu_custom_call.1} parent=11 // pred_region
          _
        $region24: #{tpu_custom_call.1} parent=11 // pred_fallthru
          _
      $region12: #{tpu_custom_call.1} parent=5 // pred_fallthru
        _
      %p152 = scmp.lt.s32.totalorder %s13, 2
      // Predicated region
      $region25: #{tpu_custom_call.1} parent=5 // pred_check
        %p153 = pneg %p152
      $region26: #{tpu_custom_call.1} parent=5 // pred_check_branch
        %155 = sbr.rel (%p153) target = $region28
      $region27: #{tpu_custom_call.1} parent=5 // pred_region
        // Predicated region
        $region29: #{tpu_custom_call.1} parent=27 // pred_check
          %p156 = pneg %p33
        $region30: #{tpu_custom_call.1} parent=27 // pred_check_branch
          %158 = sbr.rel (%p156) target = $region32
        $region31: #{tpu_custom_call.1} parent=27 // pred_region
          %p159 = scmp.lt.s32.totalorder %s13, 1
          %s160 = scalar_select %p159, %s13, 1
          %s161 = smul.addr %s160, 2
          %s162 = smul.addr %s161, 4
          %s163 = scalar_lea.vmem %s0, %s162
        $region32: #{tpu_custom_call.1} parent=27 // pred_fallthru
          _
      $region28: #{tpu_custom_call.1} parent=5 // pred_fallthru
        _
      %p164 = scmp.le.s32.totalorder 1, %s13
      %p165 = scmp.lt.s32.totalorder %s13, 3
      %p166 = pnand %p164, %p165
      %p167 = pneg %p166
      // Predicated region
      $region33: #{tpu_custom_call.1} parent=5 // pred_check
        _
      $region34: #{tpu_custom_call.1} parent=5 // pred_check_branch
        %169 = sbr.rel (%p166) target = $region36
      $region35: #{tpu_custom_call.1} parent=5 // pred_region
        %s170 = ssub.s32 %s13, 1
        %p171 = scmp.lt.s32.totalorder %s18, 1
        %s172 = scalar_select %p171, %s18, 1
        %s173 = smul.addr %s172, 2
        %s174 = smul.addr %s173, 4
        %s175 = scalar_lea.vmem %s0, %s174
        %p176 = pneg %p39
        %p177 = pneg %p36
        %p178 = pneg %p60
        %p179 = pneg %p57
        %p180 = pneg %p81
        %p181 = pneg %p78
        %p182 = pneg %p102
        %p183 = pneg %p99
        %p184 = pneg %p128
        %p185 = pneg %p125
        %s186 = sand.u32 %s115, 1
        %s187 = scalar_lea.sflag [#allocation4], %s186
        %s188 = sand.u32 %s115, 1
        %s189 = smul.addr %s188, 8
        %s190 = scalar_lea.vmem [#allocation3], %s189
        %p191 = scmp.lt.s32.totalorder %s18, 1
        %s192 = scalar_select %p191, %s18, 1
        %s193 = smul.addr %s192, 2
        %s194 = smul.addr %s193, 4
        %s195 = scalar_lea.vmem %s0, %s194
        %196 = vst [vmem:[#allocation2] sm:$0xff] 0.0
        %197 = vst [vmem:[#allocation2 + $0x8] sm:$0xff] 0.0
        %198 = vst [vmem:[#allocation2 + $0x10] sm:$0xff] 0.0
        %v199 = vld [vmem:[%s195] sm:$0xf]
        %201 = vrot.lane.b32.xlu0 %v199, 19
        %v202 = vpop.permute.xlu0 %201
        %vm204 = vcmask 281752
        %205 = vst.msk [vmem:[#allocation2] sm:$0xf] %vm204, %v202
        %v206 = vld [vmem:[%s195] sm:$0xf]
        %208 = vrot.lane.b32.xlu0 %v206, 21
        %v209 = vpop.permute.xlu0 %208
        %vm211 = vcmask 429352
        %212 = vst.msk [vmem:[#allocation2] sm:$0xf] %vm211, %v209
        %v213 = vld [vmem:[%s195] sm:$0xf]
        %215 = vrot.lane.b32.xlu0 %v213, 23
        %v216 = vpop.permute.xlu0 %215
        %vm218 = vcmask 576952
        %219 = vst.msk [vmem:[#allocation2] sm:$0xf] %vm218, %v216
        %v220 = vld [vmem:[%s195] sm:$0xf]
        %222 = vrot.lane.b32.xlu0 %v220, 25
        %v223 = vpop.permute.xlu0 %222
        %vm225 = vcmask 724552
        %226 = vst.msk [vmem:[#allocation2] sm:$0xf] %vm225, %v223
        %v227 = vld [vmem:[%s195] sm:$0xf]
        %229 = vrot.lane.b32.xlu0 %v227, 27
        %v230 = vpop.permute.xlu0 %229
        %vm232 = vcmask 872152
        %233 = vst.msk [vmem:[#allocation2] sm:$0xf] %vm232, %v230
        %v234 = vld [vmem:[%s195] sm:$0xf]
        %236 = vrot.lane.b32.xlu0 %v234, 29
        %v237 = vpop.permute.xlu0 %236
        %vm239 = vcmask 1019752
        %240 = vst.msk [vmem:[#allocation2] sm:$0xf] %vm239, %v237
        %v241 = vld [vmem:[%s195] sm:$0xf]
        %243 = vrot.lane.b32.xlu0 %v241, 31
        %v244 = vpop.permute.xlu0 %243
        %vm246 = vcmask 1044472
        %247 = vst.msk [vmem:[#allocation2] sm:$0xf] %vm246, %v244
        %vm248 = vcmask 117760
        %249 = vst.msk [vmem:[#allocation2 + $0x8] sm:$0xf] %vm248, %v244
        %v250 = vld [vmem:[%s195] sm:$0xf]
        %252 = vrot.lane.b32.xlu0 %v250, 33
        %v253 = vpop.permute.xlu0 %252
        %vm255 = vcmask 265352
        %256 = vst.msk [vmem:[#allocation2 + $0x8] sm:$0xf] %vm255, %v253
        %v257 = vld [vmem:[%s195 + $0x4] sm:$0xf]
        %259 = vrot.lane.b32.xlu0 %v257, 35
        %v260 = vpop.permute.xlu0 %259
        %vm262 = vcmask 412952
        %263 = vst.msk [vmem:[#allocation2 + $0x8] sm:$0xf] %vm262, %v260
        %v264 = vld [vmem:[%s195 + $0x4] sm:$0xf]
        %266 = vrot.lane.b32.xlu0 %v264, 37
        %v267 = vpop.permute.xlu0 %266
        %vm269 = vcmask 560552
        %270 = vst.msk [vmem:[#allocation2 + $0x8] sm:$0xf] %vm269, %v267
        %v271 = vld [vmem:[%s195 + $0x4] sm:$0xf]
        %273 = vrot.lane.b32.xlu0 %v271, 39
        %v274 = vpop.permute.xlu0 %273
        %vm276 = vcmask 708152
        %277 = vst.msk [vmem:[#allocation2 + $0x8] sm:$0xf] %vm276, %v274
        %v278 = vld [vmem:[%s195 + $0x4] sm:$0xf]
        %280 = vrot.lane.b32.xlu0 %v278, 41
        %v281 = vpop.permute.xlu0 %280
        %vm283 = vcmask 855752
        %284 = vst.msk [vmem:[#allocation2 + $0x8] sm:$0xf] %vm283, %v281
        %v285 = vld [vmem:[%s195 + $0x4] sm:$0xf]
        %287 = vrot.lane.b32.xlu0 %v285, 43
        %v288 = vpop.permute.xlu0 %287
        %vm290 = vcmask 1003352
        %291 = vst.msk [vmem:[#allocation2 + $0x8] sm:$0xf] %vm290, %v288
        %v292 = vld [vmem:[%s195 + $0x4] sm:$0xf]
        %294 = vrot.lane.b32.xlu0 %v292, 45
        %v295 = vpop.permute.xlu0 %294
        %vm297 = vcmask 1044456
        %298 = vst.msk [vmem:[#allocation2 + $0x8] sm:$0xf] %vm297, %v295
        %vm299 = vcmask 101376
        %300 = vst.msk [vmem:[#allocation2 + $0x10] sm:$0xf] %vm299, %v295
        %v301 = vld [vmem:[%s195 + $0x4] sm:$0xf]
        %303 = vrot.lane.b32.xlu0 %v301, 47
        %v304 = vpop.permute.xlu0 %303
        %vm306 = vcmask 248952
        %307 = vst.msk [vmem:[#allocation2 + $0x10] sm:$0xf] %vm306, %v304
        %v308 = vld [vmem:[%s195 + $0x4] sm:$0xf]
        %310 = vrot.lane.b32.xlu0 %v308, 49
        %v311 = vpop.permute.xlu0 %310
        %vm313 = vcmask 396552
        %314 = vst.msk [vmem:[#allocation2 + $0x10] sm:$0xf] %vm313, %v311
        %v315 = vld [vmem:[#allocation2] sm:$0xff]
        %v316 = vld [vmem:[#allocation2 + $0x8] sm:$0xff]
        %v317 = vld [vmem:[#allocation2 + $0x10] sm:$0xff]
        %v318 = vld [vmem:[%s3] sm:$0x7]
        %v320 = vlaneseq
        %v321 = vshrl.u32 %v320, 7
        %v322 = vsub.s32 0, %v321
        %v323 = vrot.slane %v318, %v322
        %v324 = vlaneseq
        %v325 = vshrl.u32 %v324, 7
        %v326 = vsub.s32 1, %v325
        %v327 = vrot.slane %v318, %v326
        %v328 = vlaneseq
        %v329 = vshrl.u32 %v328, 7
        %v330 = vsub.s32 2, %v329
        %v331 = vrot.slane %v318, %v330
        %335 = vrot.lane.b32.xlu0 %v315, 19
        %v336 = vpop.permute.xlu0 %335
        %337 = vrot.lane.b32.xlu0 %v316, 19
        %v338 = vpop.permute.xlu0 %337
        %339 = vrot.lane.b32.xlu0 %v317, 19
        %v340 = vpop.permute.xlu0 %339
        %v341 = vlaneseq
        %v342 = vand.u32 %v341, 127
        %vm343 = vcmp.lt.s32.totalorder %v342, 19
        %v344 = vsel %vm343, %v338, %v340
        %v345 = vsel %vm343, %v336, %v338
        %v346 = vsel %vm343, %v340, %v336
        %v347 = vld [vmem:[%s1] sm:$0xff]
        %348 = vrot.lane.b32.xlu0 %v315, 18
        %v349 = vpop.permute.xlu0 %348
        %350 = vrot.lane.b32.xlu0 %v316, 18
        %v351 = vpop.permute.xlu0 %350
        %352 = vrot.lane.b32.xlu0 %v317, 18
        %v353 = vpop.permute.xlu0 %352
        %vm354 = vcmp.lt.s32.totalorder %v342, 18
        %v355 = vsel %vm354, %v351, %v353
        %v356 = vsel %vm354, %v349, %v351
        %v357 = vsel %vm354, %v353, %v349
        %s358 = scalar_lea.vmem %s1, 8
        %v359 = vld [vmem:[%s358] sm:$0xff]
        %vm360 = vcmask 64512
        %v362 = vsel %vm360, %v359, 0
        %364 = vmatprep.subr.mxu0 %v356
        %365 = vmatpush1.msra.mxu0 %v357
        %366 = vmatprep.subr.mxu0 0.0
        %367 = vmatpush1.msra.mxu0 0.0
        %368 = vmatprep.subr.mxu0 0.0
        %369 = vmatpush1.msra.mxu0 0.0
        %370 = vmatprep.subr.mxu0 0.0
        %371 = vmatpush1.msra.mxu0 0.0
        %372 = vmatprep.subr.mxu0 0.0
        %373 = vmatpush1.msra.mxu0 0.0
        %374 = vmatprep.subr.mxu0 0.0
        %375 = vmatpush1.msra.mxu0 0.0
        %376 = vmatprep.subr.mxu0 0.0
        %377 = vmatpush1.msra.mxu0 0.0
        %378 = vmatprep.subr.mxu0 0.0
        %379 = vmatpush1.msra.mxu0 0.0
        %380 = vmatprep.subr.mxu0 0.0
        %381 = vmatpush1.msra.mxu0 0.0
        %382 = vmatprep.subr.mxu0 0.0
        %383 = vmatpush1.msra.mxu0 0.0
        %384 = vmatprep.subr.mxu0 0.0
        %385 = vmatpush1.msra.mxu0 0.0
        %386 = vmatprep.subr.mxu0 0.0
        %387 = vmatpush1.msra.mxu0 0.0
        %388 = vmatprep.subr.mxu0 0.0
        %389 = vmatpush1.msra.mxu0 0.0
        %390 = vmatprep.subr.mxu0 0.0
        %391 = vmatpush1.msra.mxu0 0.0
        %392 = vmatprep.subr.mxu0 0.0
        %393 = vmatpush1.msra.mxu0 0.0
        %394 = vmatprep.subr.mxu0 0.0
        %395 = vmatpush1.msra.mxu0 0.0
        %396 = vmatprep.subr.mxu0 0.0
        %397 = vmatpush1.msra.mxu0 0.0
        %398 = vmatprep.subr.mxu0 0.0
        %399 = vmatpush1.msra.mxu0 0.0
        %400 = vmatprep.subr.mxu0 0.0
        %401 = vmatpush1.msra.mxu0 0.0
        %402 = vmatprep.subr.mxu0 0.0
        %403 = vmatpush1.msra.mxu0 0.0
        %404 = vmatprep.subr.mxu0 0.0
        %405 = vmatpush1.msra.mxu0 0.0
        %406 = vmatprep.subr.mxu0 0.0
        %407 = vmatpush1.msra.mxu0 0.0
        %408 = vmatprep.subr.mxu0 0.0
        %409 = vmatpush1.msra.mxu0 0.0
        %410 = vmatprep.subr.mxu0 0.0
        %411 = vmatpush1.msra.mxu0 0.0
        %412 = vmatprep.subr.mxu0 0.0
        %413 = vmatpush1.msra.mxu0 0.0
        %414 = vmatprep.subr.mxu0 0.0
        %415 = vmatpush1.msra.mxu0 0.0
        %416 = vmatprep.subr.mxu0 0.0
        %417 = vmatpush1.msra.mxu0 0.0
        %418 = vmatprep.subr.mxu0 0.0
        %419 = vmatpush1.msra.mxu0 0.0
        %420 = vmatprep.subr.mxu0 0.0
        %421 = vmatpush1.msra.mxu0 0.0
        %422 = vmatprep.subr.mxu0 0.0
        %423 = vmatpush1.msra.mxu0 0.0
        %424 = vmatprep.subr.mxu0 0.0
        %425 = vmatpush1.msra.mxu0 0.0
        %426 = vmatprep.subr.mxu0 0.0
        %427 = vmatpush1.msra.mxu0 0.0
        %428 = vmatprep.mubr.f32.mxu0 0.0
        %429 = vmatmul.mubr.f32.gmra.mrb[0].mxu0 %v362
        %v430 = vpop.f32.mrb[0].mxu0
        %v431 = vadd.f32 0.0, %v430
        %v432 = vpop.f32.mrb[0].mxu0
        %v433 = vadd.f32 0.0, %v432
        %434 = vdwg.mxu0
        %435 = vmatprep.subr.mxu0 0.0
        %436 = vmatpush1.msra.mxu0 %v355
        %437 = vmatprep.subr.mxu0 0.0
        %438 = vmatpush1.msra.mxu0 0.0
        %439 = vmatprep.subr.mxu0 0.0
        %440 = vmatpush1.msra.mxu0 0.0
        %441 = vmatprep.subr.mxu0 0.0
        %442 = vmatpush1.msra.mxu0 0.0
        %443 = vmatprep.subr.mxu0 0.0
        %444 = vmatpush1.msra.mxu0 0.0
        %445 = vmatprep.subr.mxu0 0.0
        %446 = vmatpush1.msra.mxu0 0.0
        %447 = vmatprep.subr.mxu0 0.0
        %448 = vmatpush1.msra.mxu0 0.0
        %449 = vmatprep.subr.mxu0 0.0
        %450 = vmatpush1.msra.mxu0 0.0
        %451 = vmatprep.subr.mxu0 0.0
        %452 = vmatpush1.msra.mxu0 0.0
        %453 = vmatprep.subr.mxu0 0.0
        %454 = vmatpush1.msra.mxu0 0.0
        %455 = vmatprep.subr.mxu0 0.0
        %456 = vmatpush1.msra.mxu0 0.0
        %457 = vmatprep.subr.mxu0 0.0
        %458 = vmatpush1.msra.mxu0 0.0
        %459 = vmatprep.subr.mxu0 0.0
        %460 = vmatpush1.msra.mxu0 0.0
        %461 = vmatprep.subr.mxu0 0.0
        %462 = vmatpush1.msra.mxu0 0.0
        %463 = vmatprep.subr.mxu0 0.0
        %464 = vmatpush1.msra.mxu0 0.0
        %465 = vmatprep.subr.mxu0 0.0
        %466 = vmatpush1.msra.mxu0 0.0
        %467 = vmatprep.subr.mxu0 0.0
        %468 = vmatpush1.msra.mxu0 0.0
        %469 = vmatprep.subr.mxu0 0.0
        %470 = vmatpush1.msra.mxu0 0.0
        %471 = vmatprep.subr.mxu0 0.0
        %472 = vmatpush1.msra.mxu0 0.0
        %473 = vmatprep.subr.mxu0 0.0
        %474 = vmatpush1.msra.mxu0 0.0
        %475 = vmatprep.subr.mxu0 0.0
        %476 = vmatpush1.msra.mxu0 0.0
        %477 = vmatprep.subr.mxu0 0.0
        %478 = vmatpush1.msra.mxu0 0.0
        %479 = vmatprep.subr.mxu0 0.0
        %480 = vmatpush1.msra.mxu0 0.0
        %481 = vmatprep.subr.mxu0 0.0
        %482 = vmatpush1.msra.mxu0 0.0
        %483 = vmatprep.subr.mxu0 0.0
        %484 = vmatpush1.msra.mxu0 0.0
        %485 = vmatprep.subr.mxu0 0.0
        %486 = vmatpush1.msra.mxu0 0.0
        %487 = vmatprep.subr.mxu0 0.0
        %488 = vmatpush1.msra.mxu0 0.0
        %489 = vmatprep.subr.mxu0 0.0
        %490 = vmatpush1.msra.mxu0 0.0
        %491 = vmatprep.subr.mxu0 0.0
        %492 = vmatpush1.msra.mxu0 0.0
        %493 = vmatprep.subr.mxu0 0.0
        %494 = vmatpush1.msra.mxu0 0.0
        %495 = vmatprep.subr.mxu0 0.0
        %496 = vmatpush1.msra.mxu0 0.0
        %497 = vmatprep.subr.mxu0 0.0
        %498 = vmatpush1.msra.mxu0 0.0
        %499 = vmatprep.mubr.f32.mxu0 0.0
        %500 = vmatmul.mubr.f32.gmra.mrb[0].mxu0 %v362
        %v501 = vpop.f32.mrb[0].mxu0
        %v502 = vadd.f32 0.0, %v501
        %v503 = vpop.f32.mrb[0].mxu0
        %504 = vdwg.mxu0
        %v506 = vsel %vm360, %v347, 0
        %508 = vmatprep.subr.mxu0 %v345
        %509 = vmatpush1.msra.mxu0 %v346
        %510 = vmatprep.subr.mxu0 0.0
        %511 = vmatpush1.msra.mxu0 0.0
        %512 = vmatprep.subr.mxu0 0.0
        %513 = vmatpush1.msra.mxu0 0.0
        %514 = vmatprep.subr.mxu0 0.0
        %515 = vmatpush1.msra.mxu0 0.0
        %516 = vmatprep.subr.mxu0 0.0
        %517 = vmatpush1.msra.mxu0 0.0
        %518 = vmatprep.subr.mxu0 0.0
        %519 = vmatpush1.msra.mxu0 0.0
        %520 = vmatprep.subr.mxu0 0.0
        %521 = vmatpush1.msra.mxu0 0.0
        %522 = vmatprep.subr.mxu0 0.0
        %523 = vmatpush1.msra.mxu0 0.0
        %524 = vmatprep.subr.mxu0 0.0
        %525 = vmatpush1.msra.mxu0 0.0
        %526 = vmatprep.subr.mxu0 0.0
        %527 = vmatpush1.msra.mxu0 0.0
        %528 = vmatprep.subr.mxu0 0.0
        %529 = vmatpush1.msra.mxu0 0.0
        %530 = vmatprep.subr.mxu0 0.0
        %531 = vmatpush1.msra.mxu0 0.0
        %532 = vmatprep.subr.mxu0 0.0
        %533 = vmatpush1.msra.mxu0 0.0
        %534 = vmatprep.subr.mxu0 0.0
        %535 = vmatpush1.msra.mxu0 0.0
        %536 = vmatprep.subr.mxu0 0.0
        %537 = vmatpush1.msra.mxu0 0.0
        %538 = vmatprep.subr.mxu0 0.0
        %539 = vmatpush1.msra.mxu0 0.0
        %540 = vmatprep.subr.mxu0 0.0
        %541 = vmatpush1.msra.mxu0 0.0
        %542 = vmatprep.subr.mxu0 0.0
        %543 = vmatpush1.msra.mxu0 0.0
        %544 = vmatprep.subr.mxu0 0.0
        %545 = vmatpush1.msra.mxu0 0.0
        %546 = vmatprep.subr.mxu0 0.0
        %547 = vmatpush1.msra.mxu0 0.0
        %548 = vmatprep.subr.mxu0 0.0
        %549 = vmatpush1.msra.mxu0 0.0
        %550 = vmatprep.subr.mxu0 0.0
        %551 = vmatpush1.msra.mxu0 0.0
        %552 = vmatprep.subr.mxu0 0.0
        %553 = vmatpush1.msra.mxu0 0.0
        %554 = vmatprep.subr.mxu0 0.0
        %555 = vmatpush1.msra.mxu0 0.0
        %556 = vmatprep.subr.mxu0 0.0
        %557 = vmatpush1.msra.mxu0 0.0
        %558 = vmatprep.subr.mxu0 0.0
        %559 = vmatpush1.msra.mxu0 0.0
        %560 = vmatprep.subr.mxu0 0.0
        %561 = vmatpush1.msra.mxu0 0.0
        %562 = vmatprep.subr.mxu0 0.0
        %563 = vmatpush1.msra.mxu0 0.0
        %564 = vmatprep.subr.mxu0 0.0
        %565 = vmatpush1.msra.mxu0 0.0
        %566 = vmatprep.subr.mxu0 0.0
        %567 = vmatpush1.msra.mxu0 0.0
        %568 = vmatprep.subr.mxu0 0.0
        %569 = vmatpush1.msra.mxu0 0.0
        %570 = vmatprep.subr.mxu0 0.0
        %571 = vmatpush1.msra.mxu0 0.0
        %572 = vmatprep.mubr.f32.mxu0 0.0
        %573 = vmatmul.mubr.f32.gmra.mrb[0].mxu0 %v506
        %v574 = vpop.f32.mrb[0].mxu0
        %v575 = vadd.f32 %v431, %v574
        %v576 = vpop.f32.mrb[0].mxu0
        %v577 = vadd.f32 %v433, %v576
        %578 = vdwg.mxu0
        %579 = vmatprep.subr.mxu0 0.0
        %580 = vmatpush1.msra.mxu0 %v344
        %581 = vmatprep.subr.mxu0 0.0
        %582 = vmatpush1.msra.mxu0 0.0
        %583 = vmatprep.subr.mxu0 0.0
        %584 = vmatpush1.msra.mxu0 0.0
        %585 = vmatprep.subr.mxu0 0.0
        %586 = vmatpush1.msra.mxu0 0.0
        %587 = vmatprep.subr.mxu0 0.0
        %588 = vmatpush1.msra.mxu0 0.0
        %589 = vmatprep.subr.mxu0 0.0
        %590 = vmatpush1.msra.mxu0 0.0
        %591 = vmatprep.subr.mxu0 0.0
        %592 = vmatpush1.msra.mxu0 0.0
        %593 = vmatprep.subr.mxu0 0.0
        %594 = vmatpush1.msra.mxu0 0.0
        %595 = vmatprep.subr.mxu0 0.0
        %596 = vmatpush1.msra.mxu0 0.0
        %597 = vmatprep.subr.mxu0 0.0
        %598 = vmatpush1.msra.mxu0 0.0
        %599 = vmatprep.subr.mxu0 0.0
        %600 = vmatpush1.msra.mxu0 0.0
        %601 = vmatprep.subr.mxu0 0.0
        %602 = vmatpush1.msra.mxu0 0.0
        %603 = vmatprep.subr.mxu0 0.0
        %604 = vmatpush1.msra.mxu0 0.0
        %605 = vmatprep.subr.mxu0 0.0
        %606 = vmatpush1.msra.mxu0 0.0
        %607 = vmatprep.subr.mxu0 0.0
        %608 = vmatpush1.msra.mxu0 0.0
        %609 = vmatprep.subr.mxu0 0.0
        %610 = vmatpush1.msra.mxu0 0.0
        %611 = vmatprep.subr.mxu0 0.0
        %612 = vmatpush1.msra.mxu0 0.0
        %613 = vmatprep.subr.mxu0 0.0
        %614 = vmatpush1.msra.mxu0 0.0
        %615 = vmatprep.subr.mxu0 0.0
        %616 = vmatpush1.msra.mxu0 0.0
        %617 = vmatprep.subr.mxu0 0.0
        %618 = vmatpush1.msra.mxu0 0.0
        %619 = vmatprep.subr.mxu0 0.0
        %620 = vmatpush1.msra.mxu0 0.0
        %621 = vmatprep.subr.mxu0 0.0
        %622 = vmatpush1.msra.mxu0 0.0
        %623 = vmatprep.subr.mxu0 0.0
        %624 = vmatpush1.msra.mxu0 0.0
        %625 = vmatprep.subr.mxu0 0.0
        %626 = vmatpush1.msra.mxu0 0.0
        %627 = vmatprep.subr.mxu0 0.0
        %628 = vmatpush1.msra.mxu0 0.0
        %629 = vmatprep.subr.mxu0 0.0
        %630 = vmatpush1.msra.mxu0 0.0
        %631 = vmatprep.subr.mxu0 0.0
        %632 = vmatpush1.msra.mxu0 0.0
        %633 = vmatprep.subr.mxu0 0.0
        %634 = vmatpush1.msra.mxu0 0.0
        %635 = vmatprep.subr.mxu0 0.0
        %636 = vmatpush1.msra.mxu0 0.0
        %637 = vmatprep.subr.mxu0 0.0
        %638 = vmatpush1.msra.mxu0 0.0
        %639 = vmatprep.subr.mxu0 0.0
        %640 = vmatpush1.msra.mxu0 0.0
        %641 = vmatprep.subr.mxu0 0.0
        %642 = vmatpush1.msra.mxu0 0.0
        %643 = vmatprep.mubr.f32.mxu0 0.0
        %644 = vmatmul.mubr.f32.gmra.mrb[0].mxu0 %v506
        %v645 = vpop.f32.mrb[0].mxu0
        %v646 = vadd.f32 %v502, %v645
        %v647 = vpop.f32.mrb[0].mxu0
        %648 = vdwg.mxu0
        %649 = vrot.lane.b32.xlu0 %v315, 17
        %v650 = vpop.permute.xlu0 %649
        %651 = vrot.lane.b32.xlu0 %v316, 17
        %v652 = vpop.permute.xlu0 %651
        %653 = vrot.lane.b32.xlu0 %v317, 17
        %v654 = vpop.permute.xlu0 %653
        %vm655 = vcmp.lt.s32.totalorder %v342, 17
        %v656 = vsel %vm655, %v652, %v654
        %v657 = vsel %vm655, %v650, %v652
        %v658 = vsel %vm655, %v654, %v650
        %s659 = scalar_lea.vmem %s1, 16
        %v660 = vld [vmem:[%s659] sm:$0xff]
        %v662 = vsel %vm360, %v660, 0
        %664 = vmatprep.subr.mxu0 %v657
        %665 = vmatpush1.msra.mxu0 %v658
        %666 = vmatprep.subr.mxu0 0.0
        %667 = vmatpush1.msra.mxu0 0.0
        %668 = vmatprep.subr.mxu0 0.0
        %669 = vmatpush1.msra.mxu0 0.0
        %670 = vmatprep.subr.mxu0 0.0
        %671 = vmatpush1.msra.mxu0 0.0
        %672 = vmatprep.subr.mxu0 0.0
        %673 = vmatpush1.msra.mxu0 0.0
        %674 = vmatprep.subr.mxu0 0.0
        %675 = vmatpush1.msra.mxu0 0.0
        %676 = vmatprep.subr.mxu0 0.0
        %677 = vmatpush1.msra.mxu0 0.0
        %678 = vmatprep.subr.mxu0 0.0
        %679 = vmatpush1.msra.mxu0 0.0
        %680 = vmatprep.subr.mxu0 0.0
        %681 = vmatpush1.msra.mxu0 0.0
        %682 = vmatprep.subr.mxu0 0.0
        %683 = vmatpush1.msra.mxu0 0.0
        %684 = vmatprep.subr.mxu0 0.0
        %685 = vmatpush1.msra.mxu0 0.0
        %686 = vmatprep.subr.mxu0 0.0
        %687 = vmatpush1.msra.mxu0 0.0
        %688 = vmatprep.subr.mxu0 0.0
        %689 = vmatpush1.msra.mxu0 0.0
        %690 = vmatprep.subr.mxu0 0.0
        %691 = vmatpush1.msra.mxu0 0.0
        %692 = vmatprep.subr.mxu0 0.0
        %693 = vmatpush1.msra.mxu0 0.0
        %694 = vmatprep.subr.mxu0 0.0
        %695 = vmatpush1.msra.mxu0 0.0
        %696 = vmatprep.subr.mxu0 0.0
        %697 = vmatpush1.msra.mxu0 0.0
        %698 = vmatprep.subr.mxu0 0.0
        %699 = vmatpush1.msra.mxu0 0.0
        %700 = vmatprep.subr.mxu0 0.0
        %701 = vmatpush1.msra.mxu0 0.0
        %702 = vmatprep.subr.mxu0 0.0
        %703 = vmatpush1.msra.mxu0 0.0
        %704 = vmatprep.subr.mxu0 0.0
        %705 = vmatpush1.msra.mxu0 0.0
        %706 = vmatprep.subr.mxu0 0.0
        %707 = vmatpush1.msra.mxu0 0.0
        %708 = vmatprep.subr.mxu0 0.0
        %709 = vmatpush1.msra.mxu0 0.0
        %710 = vmatprep.subr.mxu0 0.0
        %711 = vmatpush1.msra.mxu0 0.0
        %712 = vmatprep.subr.mxu0 0.0
        %713 = vmatpush1.msra.mxu0 0.0
        %714 = vmatprep.subr.mxu0 0.0
        %715 = vmatpush1.msra.mxu0 0.0
        %716 = vmatprep.subr.mxu0 0.0
        %717 = vmatpush1.msra.mxu0 0.0
        %718 = vmatprep.subr.mxu0 0.0
        %719 = vmatpush1.msra.mxu0 0.0
        %720 = vmatprep.subr.mxu0 0.0
        %721 = vmatpush1.msra.mxu0 0.0
        %722 = vmatprep.subr.mxu0 0.0
        %723 = vmatpush1.msra.mxu0 0.0
        %724 = vmatprep.subr.mxu0 0.0
        %725 = vmatpush1.msra.mxu0 0.0
        %726 = vmatprep.subr.mxu0 0.0
        %727 = vmatpush1.msra.mxu0 0.0
        %728 = vmatprep.mubr.f32.mxu0 0.0
        %729 = vmatmul.mubr.f32.gmra.mrb[0].mxu0 %v662
        %v730 = vpop.f32.mrb[0].mxu0
        %v731 = vadd.f32 0.0, %v730
        %v732 = vpop.f32.mrb[0].mxu0
        %v733 = vadd.f32 0.0, %v732
        %734 = vdwg.mxu0
        %735 = vmatprep.subr.mxu0 0.0
        %736 = vmatpush1.msra.mxu0 %v656
        %737 = vmatprep.subr.mxu0 0.0
        %738 = vmatpush1.msra.mxu0 0.0
        %739 = vmatprep.subr.mxu0 0.0
        %740 = vmatpush1.msra.mxu0 0.0
        %741 = vmatprep.subr.mxu0 0.0
        %742 = vmatpush1.msra.mxu0 0.0
        %743 = vmatprep.subr.mxu0 0.0
        %744 = vmatpush1.msra.mxu0 0.0
        %745 = vmatprep.subr.mxu0 0.0
        %746 = vmatpush1.msra.mxu0 0.0
        %747 = vmatprep.subr.mxu0 0.0
        %748 = vmatpush1.msra.mxu0 0.0
        %749 = vmatprep.subr.mxu0 0.0
        %750 = vmatpush1.msra.mxu0 0.0
        %751 = vmatprep.subr.mxu0 0.0
        %752 = vmatpush1.msra.mxu0 0.0
        %753 = vmatprep.subr.mxu0 0.0
        %754 = vmatpush1.msra.mxu0 0.0
        %755 = vmatprep.subr.mxu0 0.0
        %756 = vmatpush1.msra.mxu0 0.0
        %757 = vmatprep.subr.mxu0 0.0
        %758 = vmatpush1.msra.mxu0 0.0
        %759 = vmatprep.subr.mxu0 0.0
        %760 = vmatpush1.msra.mxu0 0.0
        %761 = vmatprep.subr.mxu0 0.0
        %762 = vmatpush1.msra.mxu0 0.0
        %763 = vmatprep.subr.mxu0 0.0
        %764 = vmatpush1.msra.mxu0 0.0
        %765 = vmatprep.subr.mxu0 0.0
        %766 = vmatpush1.msra.mxu0 0.0
        %767 = vmatprep.subr.mxu0 0.0
        %768 = vmatpush1.msra.mxu0 0.0
        %769 = vmatprep.subr.mxu0 0.0
        %770 = vmatpush1.msra.mxu0 0.0
        %771 = vmatprep.subr.mxu0 0.0
        %772 = vmatpush1.msra.mxu0 0.0
        %773 = vmatprep.subr.mxu0 0.0
        %774 = vmatpush1.msra.mxu0 0.0
        %775 = vmatprep.subr.mxu0 0.0
        %776 = vmatpush1.msra.mxu0 0.0
        %777 = vmatprep.subr.mxu0 0.0
        %778 = vmatpush1.msra.mxu0 0.0
        %779 = vmatprep.subr.mxu0 0.0
        %780 = vmatpush1.msra.mxu0 0.0
        %781 = vmatprep.subr.mxu0 0.0
        %782 = vmatpush1.msra.mxu0 0.0
        %783 = vmatprep.subr.mxu0 0.0
        %784 = vmatpush1.msra.mxu0 0.0
        %785 = vmatprep.subr.mxu0 0.0
        %786 = vmatpush1.msra.mxu0 0.0
        %787 = vmatprep.subr.mxu0 0.0
        %788 = vmatpush1.msra.mxu0 0.0
        %789 = vmatprep.subr.mxu0 0.0
        %790 = vmatpush1.msra.mxu0 0.0
        %791 = vmatprep.subr.mxu0 0.0
        %792 = vmatpush1.msra.mxu0 0.0
        %793 = vmatprep.subr.mxu0 0.0
        %794 = vmatpush1.msra.mxu0 0.0
        %795 = vmatprep.subr.mxu0 0.0
        %796 = vmatpush1.msra.mxu0 0.0
        %797 = vmatprep.subr.mxu0 0.0
        %798 = vmatpush1.msra.mxu0 0.0
        %799 = vmatprep.mubr.f32.mxu0 0.0
        %800 = vmatmul.mubr.f32.gmra.mrb[0].mxu0 %v662
        %v801 = vpop.f32.mrb[0].mxu0
        %v802 = vadd.f32 0.0, %v801
        %v803 = vpop.f32.mrb[0].mxu0
        %804 = vdwg.mxu0
        %v805 = vadd.f32 %v575, %v731
        %v806 = vadd.f32 %v577, %v733
        %v807 = vadd.f32 %v646, %v802
        %808 = vrot.lane.b32.xlu0 %v315, 1
        %v809 = vpop.permute.xlu0 %808
        %810 = vrot.lane.b32.xlu0 %v316, 1
        %v811 = vpop.permute.xlu0 %810
        %812 = vrot.lane.b32.xlu0 %v317, 1
        %v813 = vpop.permute.xlu0 %812
        %vm814 = vcmp.lt.s32.totalorder %v342, 1
        %v815 = vsel %vm814, %v811, %v813
        %v816 = vsel %vm814, %v809, %v811
        %v817 = vsel %vm814, %v813, %v809
        %s818 = scalar_lea.vmem %s1, 24
        %v819 = vld [vmem:[%s818] sm:$0xff]
        %v821 = vsel %vm360, %v819, 0
        %823 = vmatprep.subr.mxu0 %v816
        %824 = vmatpush1.msra.mxu0 %v817
        %825 = vmatprep.subr.mxu0 0.0
        %826 = vmatpush1.msra.mxu0 0.0
        %827 = vmatprep.subr.mxu0 0.0
        %828 = vmatpush1.msra.mxu0 0.0
        %829 = vmatprep.subr.mxu0 0.0
        %830 = vmatpush1.msra.mxu0 0.0
        %831 = vmatprep.subr.mxu0 0.0
        %832 = vmatpush1.msra.mxu0 0.0
        %833 = vmatprep.subr.mxu0 0.0
        %834 = vmatpush1.msra.mxu0 0.0
        %835 = vmatprep.subr.mxu0 0.0
        %836 = vmatpush1.msra.mxu0 0.0
        %837 = vmatprep.subr.mxu0 0.0
        %838 = vmatpush1.msra.mxu0 0.0
        %839 = vmatprep.subr.mxu0 0.0
        %840 = vmatpush1.msra.mxu0 0.0
        %841 = vmatprep.subr.mxu0 0.0
        %842 = vmatpush1.msra.mxu0 0.0
        %843 = vmatprep.subr.mxu0 0.0
        %844 = vmatpush1.msra.mxu0 0.0
        %845 = vmatprep.subr.mxu0 0.0
        %846 = vmatpush1.msra.mxu0 0.0
        %847 = vmatprep.subr.mxu0 0.0
        %848 = vmatpush1.msra.mxu0 0.0
        %849 = vmatprep.subr.mxu0 0.0
        %850 = vmatpush1.msra.mxu0 0.0
        %851 = vmatprep.subr.mxu0 0.0
        %852 = vmatpush1.msra.mxu0 0.0
        %853 = vmatprep.subr.mxu0 0.0
        %854 = vmatpush1.msra.mxu0 0.0
        %855 = vmatprep.subr.mxu0 0.0
        %856 = vmatpush1.msra.mxu0 0.0
        %857 = vmatprep.subr.mxu0 0.0
        %858 = vmatpush1.msra.mxu0 0.0
        %859 = vmatprep.subr.mxu0 0.0
        %860 = vmatpush1.msra.mxu0 0.0
        %861 = vmatprep.subr.mxu0 0.0
        %862 = vmatpush1.msra.mxu0 0.0
        %863 = vmatprep.subr.mxu0 0.0
        %864 = vmatpush1.msra.mxu0 0.0
        %865 = vmatprep.subr.mxu0 0.0
        %866 = vmatpush1.msra.mxu0 0.0
        %867 = vmatprep.subr.mxu0 0.0
        %868 = vmatpush1.msra.mxu0 0.0
        %869 = vmatprep.subr.mxu0 0.0
        %870 = vmatpush1.msra.mxu0 0.0
        %871 = vmatprep.subr.mxu0 0.0
        %872 = vmatpush1.msra.mxu0 0.0
        %873 = vmatprep.subr.mxu0 0.0
        %874 = vmatpush1.msra.mxu0 0.0
        %875 = vmatprep.subr.mxu0 0.0
        %876 = vmatpush1.msra.mxu0 0.0
        %877 = vmatprep.subr.mxu0 0.0
        %878 = vmatpush1.msra.mxu0 0.0
        %879 = vmatprep.subr.mxu0 0.0
        %880 = vmatpush1.msra.mxu0 0.0
        %881 = vmatprep.subr.mxu0 0.0
        %882 = vmatpush1.msra.mxu0 0.0
        %883 = vmatprep.subr.mxu0 0.0
        %884 = vmatpush1.msra.mxu0 0.0
        %885 = vmatprep.subr.mxu0 0.0
        %886 = vmatpush1.msra.mxu0 0.0
        %887 = vmatprep.mubr.f32.mxu0 0.0
        %888 = vmatmul.mubr.f32.gmra.mrb[0].mxu0 %v821
        %v889 = vpop.f32.mrb[0].mxu0
        %v890 = vadd.f32 0.0, %v889
        %v891 = vpop.f32.mrb[0].mxu0
        %v892 = vadd.f32 0.0, %v891
        %893 = vdwg.mxu0
        %894 = vmatprep.subr.mxu0 0.0
        %895 = vmatpush1.msra.mxu0 %v815
        %896 = vmatprep.subr.mxu0 0.0
        %897 = vmatpush1.msra.mxu0 0.0
        %898 = vmatprep.subr.mxu0 0.0
        %899 = vmatpush1.msra.mxu0 0.0
        %900 = vmatprep.subr.mxu0 0.0
        %901 = vmatpush1.msra.mxu0 0.0
        %902 = vmatprep.subr.mxu0 0.0
        %903 = vmatpush1.msra.mxu0 0.0
        %904 = vmatprep.subr.mxu0 0.0
        %905 = vmatpush1.msra.mxu0 0.0
        %906 = vmatprep.subr.mxu0 0.0
        %907 = vmatpush1.msra.mxu0 0.0
        %908 = vmatprep.subr.mxu0 0.0
        %909 = vmatpush1.msra.mxu0 0.0
        %910 = vmatprep.subr.mxu0 0.0
        %911 = vmatpush1.msra.mxu0 0.0
        %912 = vmatprep.subr.mxu0 0.0
        %913 = vmatpush1.msra.mxu0 0.0
        %914 = vmatprep.subr.mxu0 0.0
        %915 = vmatpush1.msra.mxu0 0.0
        %916 = vmatprep.subr.mxu0 0.0
        %917 = vmatpush1.msra.mxu0 0.0
        %918 = vmatprep.subr.mxu0 0.0
        %919 = vmatpush1.msra.mxu0 0.0
        %920 = vmatprep.subr.mxu0 0.0
        %921 = vmatpush1.msra.mxu0 0.0
        %922 = vmatprep.subr.mxu0 0.0
        %923 = vmatpush1.msra.mxu0 0.0
        %924 = vmatprep.subr.mxu0 0.0
        %925 = vmatpush1.msra.mxu0 0.0
        %926 = vmatprep.subr.mxu0 0.0
        %927 = vmatpush1.msra.mxu0 0.0
        %928 = vmatprep.subr.mxu0 0.0
        %929 = vmatpush1.msra.mxu0 0.0
        %930 = vmatprep.subr.mxu0 0.0
        %931 = vmatpush1.msra.mxu0 0.0
        %932 = vmatprep.subr.mxu0 0.0
        %933 = vmatpush1.msra.mxu0 0.0
        %934 = vmatprep.subr.mxu0 0.0
        %935 = vmatpush1.msra.mxu0 0.0
        %936 = vmatprep.subr.mxu0 0.0
        %937 = vmatpush1.msra.mxu0 0.0
        %938 = vmatprep.subr.mxu0 0.0
        %939 = vmatpush1.msra.mxu0 0.0
        %940 = vmatprep.subr.mxu0 0.0
        %941 = vmatpush1.msra.mxu0 0.0
        %942 = vmatprep.subr.mxu0 0.0
        %943 = vmatpush1.msra.mxu0 0.0
        %944 = vmatprep.subr.mxu0 0.0
        %945 = vmatpush1.msra.mxu0 0.0
        %946 = vmatprep.subr.mxu0 0.0
        %947 = vmatpush1.msra.mxu0 0.0
        %948 = vmatprep.subr.mxu0 0.0
        %949 = vmatpush1.msra.mxu0 0.0
        %950 = vmatprep.subr.mxu0 0.0
        %951 = vmatpush1.msra.mxu0 0.0
        %952 = vmatprep.subr.mxu0 0.0
        %953 = vmatpush1.msra.mxu0 0.0
        %954 = vmatprep.subr.mxu0 0.0
        %955 = vmatpush1.msra.mxu0 0.0
        %956 = vmatprep.subr.mxu0 0.0
        %957 = vmatpush1.msra.mxu0 0.0
        %958 = vmatprep.mubr.f32.mxu0 0.0
        %959 = vmatmul.mubr.f32.gmra.mrb[0].mxu0 %v821
        %v960 = vpop.f32.mrb[0].mxu0
        %v961 = vadd.f32 0.0, %v960
        %v962 = vpop.f32.mrb[0].mxu0
        %963 = vdwg.mxu0
        %v964 = vadd.f32 %v805, %v890
        %v965 = vadd.f32 %v806, %v892
        %v966 = vadd.f32 %v807, %v961
        %s967 = scalar_lea.vmem %s1, 32
        %v968 = vld [vmem:[%s967] sm:$0xff]
        %v970 = vsel %vm360, %v968, 0
        %972 = vmatprep.subr.mxu0 %v316
        %973 = vmatpush1.msra.mxu0 %v315
        %974 = vmatprep.subr.mxu0 0.0
        %975 = vmatpush1.msra.mxu0 0.0
        %976 = vmatprep.subr.mxu0 0.0
        %977 = vmatpush1.msra.mxu0 0.0
        %978 = vmatprep.subr.mxu0 0.0
        %979 = vmatpush1.msra.mxu0 0.0
        %980 = vmatprep.subr.mxu0 0.0
        %981 = vmatpush1.msra.mxu0 0.0
        %982 = vmatprep.subr.mxu0 0.0
        %983 = vmatpush1.msra.mxu0 0.0
        %984 = vmatprep.subr.mxu0 0.0
        %985 = vmatpush1.msra.mxu0 0.0
        %986 = vmatprep.subr.mxu0 0.0
        %987 = vmatpush1.msra.mxu0 0.0
        %988 = vmatprep.subr.mxu0 0.0
        %989 = vmatpush1.msra.mxu0 0.0
        %990 = vmatprep.subr.mxu0 0.0
        %991 = vmatpush1.msra.mxu0 0.0
        %992 = vmatprep.subr.mxu0 0.0
        %993 = vmatpush1.msra.mxu0 0.0
        %994 = vmatprep.subr.mxu0 0.0
        %995 = vmatpush1.msra.mxu0 0.0
        %996 = vmatprep.subr.mxu0 0.0
        %997 = vmatpush1.msra.mxu0 0.0
        %998 = vmatprep.subr.mxu0 0.0
        %999 = vmatpush1.msra.mxu0 0.0
        %1000 = vmatprep.subr.mxu0 0.0
        %1001 = vmatpush1.msra.mxu0 0.0
        %1002 = vmatprep.subr.mxu0 0.0
        %1003 = vmatpush1.msra.mxu0 0.0
        %1004 = vmatprep.subr.mxu0 0.0
        %1005 = vmatpush1.msra.mxu0 0.0
        %1006 = vmatprep.subr.mxu0 0.0
        %1007 = vmatpush1.msra.mxu0 0.0
        %1008 = vmatprep.subr.mxu0 0.0
        %1009 = vmatpush1.msra.mxu0 0.0
        %1010 = vmatprep.subr.mxu0 0.0
        %1011 = vmatpush1.msra.mxu0 0.0
        %1012 = vmatprep.subr.mxu0 0.0
        %1013 = vmatpush1.msra.mxu0 0.0
        %1014 = vmatprep.subr.mxu0 0.0
        %1015 = vmatpush1.msra.mxu0 0.0
        %1016 = vmatprep.subr.mxu0 0.0
        %1017 = vmatpush1.msra.mxu0 0.0
        %1018 = vmatprep.subr.mxu0 0.0
        %1019 = vmatpush1.msra.mxu0 0.0
        %1020 = vmatprep.subr.mxu0 0.0
        %1021 = vmatpush1.msra.mxu0 0.0
        %1022 = vmatprep.subr.mxu0 0.0
        %1023 = vmatpush1.msra.mxu0 0.0
        %1024 = vmatprep.subr.mxu0 0.0
        %1025 = vmatpush1.msra.mxu0 0.0
        %1026 = vmatprep.subr.mxu0 0.0
        %1027 = vmatpush1.msra.mxu0 0.0
        %1028 = vmatprep.subr.mxu0 0.0
        %1029 = vmatpush1.msra.mxu0 0.0
        %1030 = vmatprep.subr.mxu0 0.0
        %1031 = vmatpush1.msra.mxu0 0.0
        %1032 = vmatprep.subr.mxu0 0.0
        %1033 = vmatpush1.msra.mxu0 0.0
        %1034 = vmatprep.subr.mxu0 0.0
        %1035 = vmatpush1.msra.mxu0 0.0
        %1036 = vmatprep.mubr.f32.mxu0 0.0
        %1037 = vmatmul.mubr.f32.gmra.mrb[0].mxu0 %v970
        %v1038 = vpop.f32.mrb[0].mxu0
        %v1039 = vadd.f32 0.0, %v1038
        %v1040 = vpop.f32.mrb[0].mxu0
        %v1041 = vadd.f32 0.0, %v1040
        %1042 = vdwg.mxu0
        %1043 = vmatprep.subr.mxu0 0.0
        %1044 = vmatpush1.msra.mxu0 %v317
        %1045 = vmatprep.subr.mxu0 0.0
        %1046 = vmatpush1.msra.mxu0 0.0
        %1047 = vmatprep.subr.mxu0 0.0
        %1048 = vmatpush1.msra.mxu0 0.0
        %1049 = vmatprep.subr.mxu0 0.0
        %1050 = vmatpush1.msra.mxu0 0.0
        %1051 = vmatprep.subr.mxu0 0.0
        %1052 = vmatpush1.msra.mxu0 0.0
        %1053 = vmatprep.subr.mxu0 0.0
        %1054 = vmatpush1.msra.mxu0 0.0
        %1055 = vmatprep.subr.mxu0 0.0
        %1056 = vmatpush1.msra.mxu0 0.0
        %1057 = vmatprep.subr.mxu0 0.0
        %1058 = vmatpush1.msra.mxu0 0.0
        %1059 = vmatprep.subr.mxu0 0.0
        %1060 = vmatpush1.msra.mxu0 0.0
        %1061 = vmatprep.subr.mxu0 0.0
        %1062 = vmatpush1.msra.mxu0 0.0
        %1063 = vmatprep.subr.mxu0 0.0
        %1064 = vmatpush1.msra.mxu0 0.0
        %1065 = vmatprep.subr.mxu0 0.0
        %1066 = vmatpush1.msra.mxu0 0.0
        %1067 = vmatprep.subr.mxu0 0.0
        %1068 = vmatpush1.msra.mxu0 0.0
        %1069 = vmatprep.subr.mxu0 0.0
        %1070 = vmatpush1.msra.mxu0 0.0
        %1071 = vmatprep.subr.mxu0 0.0
        %1072 = vmatpush1.msra.mxu0 0.0
        %1073 = vmatprep.subr.mxu0 0.0
        %1074 = vmatpush1.msra.mxu0 0.0
        %1075 = vmatprep.subr.mxu0 0.0
        %1076 = vmatpush1.msra.mxu0 0.0
        %1077 = vmatprep.subr.mxu0 0.0
        %1078 = vmatpush1.msra.mxu0 0.0
        %1079 = vmatprep.subr.mxu0 0.0
        %1080 = vmatpush1.msra.mxu0 0.0
        %1081 = vmatprep.subr.mxu0 0.0
        %1082 = vmatpush1.msra.mxu0 0.0
        %1083 = vmatprep.subr.mxu0 0.0
        %1084 = vmatpush1.msra.mxu0 0.0
        %1085 = vmatprep.subr.mxu0 0.0
        %1086 = vmatpush1.msra.mxu0 0.0
        %1087 = vmatprep.subr.mxu0 0.0
        %1088 = vmatpush1.msra.mxu0 0.0
        %1089 = vmatprep.subr.mxu0 0.0
        %1090 = vmatpush1.msra.mxu0 0.0
        %1091 = vmatprep.subr.mxu0 0.0
        %1092 = vmatpush1.msra.mxu0 0.0
        %1093 = vmatprep.subr.mxu0 0.0
        %1094 = vmatpush1.msra.mxu0 0.0
        %1095 = vmatprep.subr.mxu0 0.0
        %1096 = vmatpush1.msra.mxu0 0.0
        %1097 = vmatprep.subr.mxu0 0.0
        %1098 = vmatpush1.msra.mxu0 0.0
        %1099 = vmatprep.subr.mxu0 0.0
        %1100 = vmatpush1.msra.mxu0 0.0
        %1101 = vmatprep.subr.mxu0 0.0
        %1102 = vmatpush1.msra.mxu0 0.0
        %1103 = vmatprep.subr.mxu0 0.0
        %1104 = vmatpush1.msra.mxu0 0.0
        %1105 = vmatprep.subr.mxu0 0.0
        %1106 = vmatpush1.msra.mxu0 0.0
        %1107 = vmatprep.mubr.f32.mxu0 0.0
        %1108 = vmatmul.mubr.f32.gmra.mrb[0].mxu0 %v970
        %v1109 = vpop.f32.mrb[0].mxu0
        %v1110 = vadd.f32 0.0, %v1109
        %v1111 = vpop.f32.mrb[0].mxu0
        %1112 = vdwg.mxu0
        %v1113 = vadd.f32 %v964, %v1039
        %v1114 = vadd.f32 %v965, %v1041
        %v1115 = vadd.f32 %v966, %v1110
        %1116 = vrot.lane.b32.xlu0 %v315, 127
        %v1117 = vpop.permute.xlu0 %1116
        %1118 = vrot.lane.b32.xlu0 %v316, 127
        %v1119 = vpop.permute.xlu0 %1118
        %1120 = vrot.lane.b32.xlu0 %v317, 127
        %v1121 = vpop.permute.xlu0 %1120
        %vm1122 = vcmp.lt.s32.totalorder %v342, 127
        %v1123 = vsel %vm1122, %v1119, %v1121
        %v1124 = vsel %vm1122, %v1117, %v1119
        %v1125 = vsel %vm1122, %v1121, %v1117
        %s1126 = scalar_lea.vmem %s1, 40
        %v1127 = vld [vmem:[%s1126] sm:$0xff]
        %v1129 = vsel %vm360, %v1127, 0
        %1131 = vmatprep.subr.mxu0 %v1123
        %1132 = vmatpush1.msra.mxu0 %v1124
        %1133 = vmatprep.subr.mxu0 0.0
        %1134 = vmatpush1.msra.mxu0 0.0
        %1135 = vmatprep.subr.mxu0 0.0
        %1136 = vmatpush1.msra.mxu0 0.0
        %1137 = vmatprep.subr.mxu0 0.0
        %1138 = vmatpush1.msra.mxu0 0.0
        %1139 = vmatprep.subr.mxu0 0.0
        %1140 = vmatpush1.msra.mxu0 0.0
        %1141 = vmatprep.subr.mxu0 0.0
        %1142 = vmatpush1.msra.mxu0 0.0
        %1143 = vmatprep.subr.mxu0 0.0
        %1144 = vmatpush1.msra.mxu0 0.0
        %1145 = vmatprep.subr.mxu0 0.0
        %1146 = vmatpush1.msra.mxu0 0.0
        %1147 = vmatprep.subr.mxu0 0.0
        %1148 = vmatpush1.msra.mxu0 0.0
        %1149 = vmatprep.subr.mxu0 0.0
        %1150 = vmatpush1.msra.mxu0 0.0
        %1151 = vmatprep.subr.mxu0 0.0
        %1152 = vmatpush1.msra.mxu0 0.0
        %1153 = vmatprep.subr.mxu0 0.0
        %1154 = vmatpush1.msra.mxu0 0.0
        %1155 = vmatprep.subr.mxu0 0.0
        %1156 = vmatpush1.msra.mxu0 0.0
        %1157 = vmatprep.subr.mxu0 0.0
        %1158 = vmatpush1.msra.mxu0 0.0
        %1159 = vmatprep.subr.mxu0 0.0
        %1160 = vmatpush1.msra.mxu0 0.0
        %1161 = vmatprep.subr.mxu0 0.0
        %1162 = vmatpush1.msra.mxu0 0.0
        %1163 = vmatprep.subr.mxu0 0.0
        %1164 = vmatpush1.msra.mxu0 0.0
        %1165 = vmatprep.subr.mxu0 0.0
        %1166 = vmatpush1.msra.mxu0 0.0
        %1167 = vmatprep.subr.mxu0 0.0
        %1168 = vmatpush1.msra.mxu0 0.0
        %1169 = vmatprep.subr.mxu0 0.0
        %1170 = vmatpush1.msra.mxu0 0.0
        %1171 = vmatprep.subr.mxu0 0.0
        %1172 = vmatpush1.msra.mxu0 0.0
        %1173 = vmatprep.subr.mxu0 0.0
        %1174 = vmatpush1.msra.mxu0 0.0
        %1175 = vmatprep.subr.mxu0 0.0
        %1176 = vmatpush1.msra.mxu0 0.0
        %1177 = vmatprep.subr.mxu0 0.0
        %1178 = vmatpush1.msra.mxu0 0.0
        %1179 = vmatprep.subr.mxu0 0.0
        %1180 = vmatpush1.msra.mxu0 0.0
        %1181 = vmatprep.subr.mxu0 0.0
        %1182 = vmatpush1.msra.mxu0 0.0
        %1183 = vmatprep.subr.mxu0 0.0
        %1184 = vmatpush1.msra.mxu0 0.0
        %1185 = vmatprep.subr.mxu0 0.0
        %1186 = vmatpush1.msra.mxu0 0.0
        %1187 = vmatprep.subr.mxu0 0.0
        %1188 = vmatpush1.msra.mxu0 0.0
        %1189 = vmatprep.subr.mxu0 0.0
        %1190 = vmatpush1.msra.mxu0 0.0
        %1191 = vmatprep.subr.mxu0 0.0
        %1192 = vmatpush1.msra.mxu0 0.0
        %1193 = vmatprep.subr.mxu0 0.0
        %1194 = vmatpush1.msra.mxu0 0.0
        %1195 = vmatprep.mubr.f32.mxu0 0.0
        %1196 = vmatmul.mubr.f32.gmra.mrb[0].mxu0 %v1129
        %v1197 = vpop.f32.mrb[0].mxu0
        %v1198 = vadd.f32 0.0, %v1197
        %v1199 = vpop.f32.mrb[0].mxu0
        %v1200 = vadd.f32 0.0, %v1199
        %1201 = vdwg.mxu0
        %1202 = vmatprep.subr.mxu0 0.0
        %1203 = vmatpush1.msra.mxu0 %v1125
        %1204 = vmatprep.subr.mxu0 0.0
        %1205 = vmatpush1.msra.mxu0 0.0
        %1206 = vmatprep.subr.mxu0 0.0
        %1207 = vmatpush1.msra.mxu0 0.0
        %1208 = vmatprep.subr.mxu0 0.0
        %1209 = vmatpush1.msra.mxu0 0.0
        %1210 = vmatprep.subr.mxu0 0.0
        %1211 = vmatpush1.msra.mxu0 0.0
        %1212 = vmatprep.subr.mxu0 0.0
        %1213 = vmatpush1.msra.mxu0 0.0
        %1214 = vmatprep.subr.mxu0 0.0
        %1215 = vmatpush1.msra.mxu0 0.0
        %1216 = vmatprep.subr.mxu0 0.0
        %1217 = vmatpush1.msra.mxu0 0.0
        %1218 = vmatprep.subr.mxu0 0.0
        %1219 = vmatpush1.msra.mxu0 0.0
        %1220 = vmatprep.subr.mxu0 0.0
        %1221 = vmatpush1.msra.mxu0 0.0
        %1222 = vmatprep.subr.mxu0 0.0
        %1223 = vmatpush1.msra.mxu0 0.0
        %1224 = vmatprep.subr.mxu0 0.0
        %1225 = vmatpush1.msra.mxu0 0.0
        %1226 = vmatprep.subr.mxu0 0.0
        %1227 = vmatpush1.msra.mxu0 0.0
        %1228 = vmatprep.subr.mxu0 0.0
        %1229 = vmatpush1.msra.mxu0 0.0
        %1230 = vmatprep.subr.mxu0 0.0
        %1231 = vmatpush1.msra.mxu0 0.0
        %1232 = vmatprep.subr.mxu0 0.0
        %1233 = vmatpush1.msra.mxu0 0.0
        %1234 = vmatprep.subr.mxu0 0.0
        %1235 = vmatpush1.msra.mxu0 0.0
        %1236 = vmatprep.subr.mxu0 0.0
        %1237 = vmatpush1.msra.mxu0 0.0
        %1238 = vmatprep.subr.mxu0 0.0
        %1239 = vmatpush1.msra.mxu0 0.0
        %1240 = vmatprep.subr.mxu0 0.0
        %1241 = vmatpush1.msra.mxu0 0.0
        %1242 = vmatprep.subr.mxu0 0.0
        %1243 = vmatpush1.msra.mxu0 0.0
        %1244 = vmatprep.subr.mxu0 0.0
        %1245 = vmatpush1.msra.mxu0 0.0
        %1246 = vmatprep.subr.mxu0 0.0
        %1247 = vmatpush1.msra.mxu0 0.0
        %1248 = vmatprep.subr.mxu0 0.0
        %1249 = vmatpush1.msra.mxu0 0.0
        %1250 = vmatprep.subr.mxu0 0.0
        %1251 = vmatpush1.msra.mxu0 0.0
        %1252 = vmatprep.subr.mxu0 0.0
        %1253 = vmatpush1.msra.mxu0 0.0
        %1254 = vmatprep.subr.mxu0 0.0
        %1255 = vmatpush1.msra.mxu0 0.0
        %1256 = vmatprep.subr.mxu0 0.0
        %1257 = vmatpush1.msra.mxu0 0.0
        %1258 = vmatprep.subr.mxu0 0.0
        %1259 = vmatpush1.msra.mxu0 0.0
        %1260 = vmatprep.subr.mxu0 0.0
        %1261 = vmatpush1.msra.mxu0 0.0
        %1262 = vmatprep.subr.mxu0 0.0
        %1263 = vmatpush1.msra.mxu0 0.0
        %1264 = vmatprep.subr.mxu0 0.0
        %1265 = vmatpush1.msra.mxu0 0.0
        %1266 = vmatprep.mubr.f32.mxu0 0.0
        %1267 = vmatmul.mubr.f32.gmra.mrb[0].mxu0 %v1129
        %v1268 = vpop.f32.mrb[0].mxu0
        %v1269 = vadd.f32 0.0, %v1268
        %v1270 = vpop.f32.mrb[0].mxu0
        %1271 = vdwg.mxu0
        %v1272 = vadd.f32 %v1113, %v1198
        %v1273 = vadd.f32 %v1114, %v1200
        %v1274 = vadd.f32 %v1115, %v1269
        %1275 = vrot.lane.b32.xlu0 %v315, 111
        %v1276 = vpop.permute.xlu0 %1275
        %1277 = vrot.lane.b32.xlu0 %v316, 111
        %v1278 = vpop.permute.xlu0 %1277
        %1279 = vrot.lane.b32.xlu0 %v317, 111
        %v1280 = vpop.permute.xlu0 %1279
        %vm1281 = vcmp.lt.s32.totalorder %v342, 111
        %v1282 = vsel %vm1281, %v1278, %v1280
        %v1283 = vsel %vm1281, %v1276, %v1278
        %v1284 = vsel %vm1281, %v1280, %v1276
        %s1285 = scalar_lea.vmem %s1, 48
        %v1286 = vld [vmem:[%s1285] sm:$0xff]
        %v1288 = vsel %vm360, %v1286, 0
        %1290 = vmatprep.subr.mxu0 %v1282
        %1291 = vmatpush1.msra.mxu0 %v1283
        %1292 = vmatprep.subr.mxu0 0.0
        %1293 = vmatpush1.msra.mxu0 0.0
        %1294 = vmatprep.subr.mxu0 0.0
        %1295 = vmatpush1.msra.mxu0 0.0
        %1296 = vmatprep.subr.mxu0 0.0
        %1297 = vmatpush1.msra.mxu0 0.0
        %1298 = vmatprep.subr.mxu0 0.0
        %1299 = vmatpush1.msra.mxu0 0.0
        %1300 = vmatprep.subr.mxu0 0.0
        %1301 = vmatpush1.msra.mxu0 0.0
        %1302 = vmatprep.subr.mxu0 0.0
        %1303 = vmatpush1.msra.mxu0 0.0
        %1304 = vmatprep.subr.mxu0 0.0
        %1305 = vmatpush1.msra.mxu0 0.0
        %1306 = vmatprep.subr.mxu0 0.0
        %1307 = vmatpush1.msra.mxu0 0.0
        %1308 = vmatprep.subr.mxu0 0.0
        %1309 = vmatpush1.msra.mxu0 0.0
        %1310 = vmatprep.subr.mxu0 0.0
        %1311 = vmatpush1.msra.mxu0 0.0
        %1312 = vmatprep.subr.mxu0 0.0
        %1313 = vmatpush1.msra.mxu0 0.0
        %1314 = vmatprep.subr.mxu0 0.0
        %1315 = vmatpush1.msra.mxu0 0.0
        %1316 = vmatprep.subr.mxu0 0.0
        %1317 = vmatpush1.msra.mxu0 0.0
        %1318 = vmatprep.subr.mxu0 0.0
        %1319 = vmatpush1.msra.mxu0 0.0
        %1320 = vmatprep.subr.mxu0 0.0
        %1321 = vmatpush1.msra.mxu0 0.0
        %1322 = vmatprep.subr.mxu0 0.0
        %1323 = vmatpush1.msra.mxu0 0.0
        %1324 = vmatprep.subr.mxu0 0.0
        %1325 = vmatpush1.msra.mxu0 0.0
        %1326 = vmatprep.subr.mxu0 0.0
        %1327 = vmatpush1.msra.mxu0 0.0
        %1328 = vmatprep.subr.mxu0 0.0
        %1329 = vmatpush1.msra.mxu0 0.0
        %1330 = vmatprep.subr.mxu0 0.0
        %1331 = vmatpush1.msra.mxu0 0.0
        %1332 = vmatprep.subr.mxu0 0.0
        %1333 = vmatpush1.msra.mxu0 0.0
        %1334 = vmatprep.subr.mxu0 0.0
        %1335 = vmatpush1.msra.mxu0 0.0
        %1336 = vmatprep.subr.mxu0 0.0
        %1337 = vmatpush1.msra.mxu0 0.0
        %1338 = vmatprep.subr.mxu0 0.0
        %1339 = vmatpush1.msra.mxu0 0.0
        %1340 = vmatprep.subr.mxu0 0.0
        %1341 = vmatpush1.msra.mxu0 0.0
        %1342 = vmatprep.subr.mxu0 0.0
        %1343 = vmatpush1.msra.mxu0 0.0
        %1344 = vmatprep.subr.mxu0 0.0
        %1345 = vmatpush1.msra.mxu0 0.0
        %1346 = vmatprep.subr.mxu0 0.0
        %1347 = vmatpush1.msra.mxu0 0.0
        %1348 = vmatprep.subr.mxu0 0.0
        %1349 = vmatpush1.msra.mxu0 0.0
        %1350 = vmatprep.subr.mxu0 0.0
        %1351 = vmatpush1.msra.mxu0 0.0
        %1352 = vmatprep.subr.mxu0 0.0
        %1353 = vmatpush1.msra.mxu0 0.0
        %1354 = vmatprep.mubr.f32.mxu0 0.0
        %1355 = vmatmul.mubr.f32.gmra.mrb[0].mxu0 %v1288
        %v1356 = vpop.f32.mrb[0].mxu0
        %v1357 = vadd.f32 0.0, %v1356
        %v1358 = vpop.f32.mrb[0].mxu0
        %v1359 = vadd.f32 0.0, %v1358
        %1360 = vdwg.mxu0
        %1361 = vmatprep.subr.mxu0 0.0
        %1362 = vmatpush1.msra.mxu0 %v1284
        %1363 = vmatprep.subr.mxu0 0.0
        %1364 = vmatpush1.msra.mxu0 0.0
        %1365 = vmatprep.subr.mxu0 0.0
        %1366 = vmatpush1.msra.mxu0 0.0
        %1367 = vmatprep.subr.mxu0 0.0
        %1368 = vmatpush1.msra.mxu0 0.0
        %1369 = vmatprep.subr.mxu0 0.0
        %1370 = vmatpush1.msra.mxu0 0.0
        %1371 = vmatprep.subr.mxu0 0.0
        %1372 = vmatpush1.msra.mxu0 0.0
        %1373 = vmatprep.subr.mxu0 0.0
        %1374 = vmatpush1.msra.mxu0 0.0
        %1375 = vmatprep.subr.mxu0 0.0
        %1376 = vmatpush1.msra.mxu0 0.0
        %1377 = vmatprep.subr.mxu0 0.0
        %1378 = vmatpush1.msra.mxu0 0.0
        %1379 = vmatprep.subr.mxu0 0.0
        %1380 = vmatpush1.msra.mxu0 0.0
        %1381 = vmatprep.subr.mxu0 0.0
        %1382 = vmatpush1.msra.mxu0 0.0
        %1383 = vmatprep.subr.mxu0 0.0
        %1384 = vmatpush1.msra.mxu0 0.0
        %1385 = vmatprep.subr.mxu0 0.0
        %1386 = vmatpush1.msra.mxu0 0.0
        %1387 = vmatprep.subr.mxu0 0.0
        %1388 = vmatpush1.msra.mxu0 0.0
        %1389 = vmatprep.subr.mxu0 0.0
        %1390 = vmatpush1.msra.mxu0 0.0
        %1391 = vmatprep.subr.mxu0 0.0
        %1392 = vmatpush1.msra.mxu0 0.0
        %1393 = vmatprep.subr.mxu0 0.0
        %1394 = vmatpush1.msra.mxu0 0.0
        %1395 = vmatprep.subr.mxu0 0.0
        %1396 = vmatpush1.msra.mxu0 0.0
        %1397 = vmatprep.subr.mxu0 0.0
        %1398 = vmatpush1.msra.mxu0 0.0
        %1399 = vmatprep.subr.mxu0 0.0
        %1400 = vmatpush1.msra.mxu0 0.0
        %1401 = vmatprep.subr.mxu0 0.0
        %1402 = vmatpush1.msra.mxu0 0.0
        %1403 = vmatprep.subr.mxu0 0.0
        %1404 = vmatpush1.msra.mxu0 0.0
        %1405 = vmatprep.subr.mxu0 0.0
        %1406 = vmatpush1.msra.mxu0 0.0
        %1407 = vmatprep.subr.mxu0 0.0
        %1408 = vmatpush1.msra.mxu0 0.0
        %1409 = vmatprep.subr.mxu0 0.0
        %1410 = vmatpush1.msra.mxu0 0.0
        %1411 = vmatprep.subr.mxu0 0.0
        %1412 = vmatpush1.msra.mxu0 0.0
        %1413 = vmatprep.subr.mxu0 0.0
        %1414 = vmatpush1.msra.mxu0 0.0
        %1415 = vmatprep.subr.mxu0 0.0
        %1416 = vmatpush1.msra.mxu0 0.0
        %1417 = vmatprep.subr.mxu0 0.0
        %1418 = vmatpush1.msra.mxu0 0.0
        %1419 = vmatprep.subr.mxu0 0.0
        %1420 = vmatpush1.msra.mxu0 0.0
        %1421 = vmatprep.subr.mxu0 0.0
        %1422 = vmatpush1.msra.mxu0 0.0
        %1423 = vmatprep.subr.mxu0 0.0
        %1424 = vmatpush1.msra.mxu0 0.0
        %1425 = vmatprep.mubr.f32.mxu0 0.0
        %1426 = vmatmul.mubr.f32.gmra.mrb[0].mxu0 %v1288
        %v1427 = vpop.f32.mrb[0].mxu0
        %v1428 = vadd.f32 0.0, %v1427
        %v1429 = vpop.f32.mrb[0].mxu0
        %1430 = vdwg.mxu0
        %v1431 = vadd.f32 %v1272, %v1357
        %v1432 = vadd.f32 %v1273, %v1359
        %v1433 = vadd.f32 %v1274, %v1428
        %1434 = vrot.lane.b32.xlu0 %v315, 110
        %v1435 = vpop.permute.xlu0 %1434
        %1436 = vrot.lane.b32.xlu0 %v316, 110
        %v1437 = vpop.permute.xlu0 %1436
        %1438 = vrot.lane.b32.xlu0 %v317, 110
        %v1439 = vpop.permute.xlu0 %1438
        %vm1440 = vcmp.lt.s32.totalorder %v342, 110
        %v1441 = vsel %vm1440, %v1437, %v1439
        %v1442 = vsel %vm1440, %v1435, %v1437
        %v1443 = vsel %vm1440, %v1439, %v1435
        %s1444 = scalar_lea.vmem %s1, 56
        %v1445 = vld [vmem:[%s1444] sm:$0xff]
        %v1447 = vsel %vm360, %v1445, 0
        %1449 = vmatprep.subr.mxu0 %v1441
        %1450 = vmatpush1.msra.mxu0 %v1442
        %1451 = vmatprep.subr.mxu0 0.0
        %1452 = vmatpush1.msra.mxu0 0.0
        %1453 = vmatprep.subr.mxu0 0.0
        %1454 = vmatpush1.msra.mxu0 0.0
        %1455 = vmatprep.subr.mxu0 0.0
        %1456 = vmatpush1.msra.mxu0 0.0
        %1457 = vmatprep.subr.mxu0 0.0
        %1458 = vmatpush1.msra.mxu0 0.0
        %1459 = vmatprep.subr.mxu0 0.0
        %1460 = vmatpush1.msra.mxu0 0.0
        %1461 = vmatprep.subr.mxu0 0.0
        %1462 = vmatpush1.msra.mxu0 0.0
        %1463 = vmatprep.subr.mxu0 0.0
        %1464 = vmatpush1.msra.mxu0 0.0
        %1465 = vmatprep.subr.mxu0 0.0
        %1466 = vmatpush1.msra.mxu0 0.0
        %1467 = vmatprep.subr.mxu0 0.0
        %1468 = vmatpush1.msra.mxu0 0.0
        %1469 = vmatprep.subr.mxu0 0.0
        %1470 = vmatpush1.msra.mxu0 0.0
        %1471 = vmatprep.subr.mxu0 0.0
        %1472 = vmatpush1.msra.mxu0 0.0
        %1473 = vmatprep.subr.mxu0 0.0
        %1474 = vmatpush1.msra.mxu0 0.0
        %1475 = vmatprep.subr.mxu0 0.0
        %1476 = vmatpush1.msra.mxu0 0.0
        %1477 = vmatprep.subr.mxu0 0.0
        %1478 = vmatpush1.msra.mxu0 0.0
        %1479 = vmatprep.subr.mxu0 0.0
        %1480 = vmatpush1.msra.mxu0 0.0
        %1481 = vmatprep.subr.mxu0 0.0
        %1482 = vmatpush1.msra.mxu0 0.0
        %1483 = vmatprep.subr.mxu0 0.0
        %1484 = vmatpush1.msra.mxu0 0.0
        %1485 = vmatprep.subr.mxu0 0.0
        %1486 = vmatpush1.msra.mxu0 0.0
        %1487 = vmatprep.subr.mxu0 0.0
        %1488 = vmatpush1.msra.mxu0 0.0
        %1489 = vmatprep.subr.mxu0 0.0
        %1490 = vmatpush1.msra.mxu0 0.0
        %1491 = vmatprep.subr.mxu0 0.0
        %1492 = vmatpush1.msra.mxu0 0.0
        %1493 = vmatprep.subr.mxu0 0.0
        %1494 = vmatpush1.msra.mxu0 0.0
        %1495 = vmatprep.subr.mxu0 0.0
        %1496 = vmatpush1.msra.mxu0 0.0
        %1497 = vmatprep.subr.mxu0 0.0
        %1498 = vmatpush1.msra.mxu0 0.0
        %1499 = vmatprep.subr.mxu0 0.0
        %1500 = vmatpush1.msra.mxu0 0.0
        %1501 = vmatprep.subr.mxu0 0.0
        %1502 = vmatpush1.msra.mxu0 0.0
        %1503 = vmatprep.subr.mxu0 0.0
        %1504 = vmatpush1.msra.mxu0 0.0
        %1505 = vmatprep.subr.mxu0 0.0
        %1506 = vmatpush1.msra.mxu0 0.0
        %1507 = vmatprep.subr.mxu0 0.0
        %1508 = vmatpush1.msra.mxu0 0.0
        %1509 = vmatprep.subr.mxu0 0.0
        %1510 = vmatpush1.msra.mxu0 0.0
        %1511 = vmatprep.subr.mxu0 0.0
        %1512 = vmatpush1.msra.mxu0 0.0
        %1513 = vmatprep.mubr.f32.mxu0 0.0
        %1514 = vmatmul.mubr.f32.gmra.mrb[0].mxu0 %v1447
        %v1515 = vpop.f32.mrb[0].mxu0
        %v1516 = vadd.f32 0.0, %v1515
        %v1517 = vpop.f32.mrb[0].mxu0
        %v1518 = vadd.f32 0.0, %v1517
        %1519 = vdwg.mxu0
        %1520 = vmatprep.subr.mxu0 0.0
        %1521 = vmatpush1.msra.mxu0 %v1443
        %1522 = vmatprep.subr.mxu0 0.0
        %1523 = vmatpush1.msra.mxu0 0.0
        %1524 = vmatprep.subr.mxu0 0.0
        %1525 = vmatpush1.msra.mxu0 0.0
        %1526 = vmatprep.subr.mxu0 0.0
        %1527 = vmatpush1.msra.mxu0 0.0
        %1528 = vmatprep.subr.mxu0 0.0
        %1529 = vmatpush1.msra.mxu0 0.0
        %1530 = vmatprep.subr.mxu0 0.0
        %1531 = vmatpush1.msra.mxu0 0.0
        %1532 = vmatprep.subr.mxu0 0.0
        %1533 = vmatpush1.msra.mxu0 0.0
        %1534 = vmatprep.subr.mxu0 0.0
        %1535 = vmatpush1.msra.mxu0 0.0
        %1536 = vmatprep.subr.mxu0 0.0
        %1537 = vmatpush1.msra.mxu0 0.0
        %1538 = vmatprep.subr.mxu0 0.0
        %1539 = vmatpush1.msra.mxu0 0.0
        %1540 = vmatprep.subr.mxu0 0.0
        %1541 = vmatpush1.msra.mxu0 0.0
        %1542 = vmatprep.subr.mxu0 0.0
        %1543 = vmatpush1.msra.mxu0 0.0
        %1544 = vmatprep.subr.mxu0 0.0
        %1545 = vmatpush1.msra.mxu0 0.0
        %1546 = vmatprep.subr.mxu0 0.0
        %1547 = vmatpush1.msra.mxu0 0.0
        %1548 = vmatprep.subr.mxu0 0.0
        %1549 = vmatpush1.msra.mxu0 0.0
        %1550 = vmatprep.subr.mxu0 0.0
        %1551 = vmatpush1.msra.mxu0 0.0
        %1552 = vmatprep.subr.mxu0 0.0
        %1553 = vmatpush1.msra.mxu0 0.0
        %1554 = vmatprep.subr.mxu0 0.0
        %1555 = vmatpush1.msra.mxu0 0.0
        %1556 = vmatprep.subr.mxu0 0.0
        %1557 = vmatpush1.msra.mxu0 0.0
        %1558 = vmatprep.subr.mxu0 0.0
        %1559 = vmatpush1.msra.mxu0 0.0
        %1560 = vmatprep.subr.mxu0 0.0
        %1561 = vmatpush1.msra.mxu0 0.0
        %1562 = vmatprep.subr.mxu0 0.0
        %1563 = vmatpush1.msra.mxu0 0.0
        %1564 = vmatprep.subr.mxu0 0.0
        %1565 = vmatpush1.msra.mxu0 0.0
        %1566 = vmatprep.subr.mxu0 0.0
        %1567 = vmatpush1.msra.mxu0 0.0
        %1568 = vmatprep.subr.mxu0 0.0
        %1569 = vmatpush1.msra.mxu0 0.0
        %1570 = vmatprep.subr.mxu0 0.0
        %1571 = vmatpush1.msra.mxu0 0.0
        %1572 = vmatprep.subr.mxu0 0.0
        %1573 = vmatpush1.msra.mxu0 0.0
        %1574 = vmatprep.subr.mxu0 0.0
        %1575 = vmatpush1.msra.mxu0 0.0
        %1576 = vmatprep.subr.mxu0 0.0
        %1577 = vmatpush1.msra.mxu0 0.0
        %1578 = vmatprep.subr.mxu0 0.0
        %1579 = vmatpush1.msra.mxu0 0.0
        %1580 = vmatprep.subr.mxu0 0.0
        %1581 = vmatpush1.msra.mxu0 0.0
        %1582 = vmatprep.subr.mxu0 0.0
        %1583 = vmatpush1.msra.mxu0 0.0
        %1584 = vmatprep.mubr.f32.mxu0 0.0
        %1585 = vmatmul.mubr.f32.gmra.mrb[0].mxu0 %v1447
        %v1586 = vpop.f32.mrb[0].mxu0
        %v1587 = vadd.f32 0.0, %v1586
        %v1588 = vpop.f32.mrb[0].mxu0
        %1589 = vdwg.mxu0
        %v1590 = vadd.f32 %v1431, %v1516
        %v1591 = vadd.f32 %v1432, %v1518
        %v1592 = vadd.f32 %v1433, %v1587
        %1593 = vrot.lane.b32.xlu0 %v315, 109
        %v1594 = vpop.permute.xlu0 %1593
        %1595 = vrot.lane.b32.xlu0 %v316, 109
        %v1596 = vpop.permute.xlu0 %1595
        %1597 = vrot.lane.b32.xlu0 %v317, 109
        %v1598 = vpop.permute.xlu0 %1597
        %vm1599 = vcmp.lt.s32.totalorder %v342, 109
        %v1600 = vsel %vm1599, %v1596, %v1598
        %v1601 = vsel %vm1599, %v1594, %v1596
        %v1602 = vsel %vm1599, %v1598, %v1594
        %s1603 = scalar_lea.vmem %s1, 64
        %v1604 = vld [vmem:[%s1603] sm:$0xff]
        %v1606 = vsel %vm360, %v1604, 0
        %1608 = vmatprep.subr.mxu0 %v1600
        %1609 = vmatpush1.msra.mxu0 %v1601
        %1610 = vmatprep.subr.mxu0 0.0
        %1611 = vmatpush1.msra.mxu0 0.0
        %1612 = vmatprep.subr.mxu0 0.0
        %1613 = vmatpush1.msra.mxu0 0.0
        %1614 = vmatprep.subr.mxu0 0.0
        %1615 = vmatpush1.msra.mxu0 0.0
        %1616 = vmatprep.subr.mxu0 0.0
        %1617 = vmatpush1.msra.mxu0 0.0
        %1618 = vmatprep.subr.mxu0 0.0
        %1619 = vmatpush1.msra.mxu0 0.0
        %1620 = vmatprep.subr.mxu0 0.0
        %1621 = vmatpush1.msra.mxu0 0.0
        %1622 = vmatprep.subr.mxu0 0.0
        %1623 = vmatpush1.msra.mxu0 0.0
        %1624 = vmatprep.subr.mxu0 0.0
        %1625 = vmatpush1.msra.mxu0 0.0
        %1626 = vmatprep.subr.mxu0 0.0
        %1627 = vmatpush1.msra.mxu0 0.0
        %1628 = vmatprep.subr.mxu0 0.0
        %1629 = vmatpush1.msra.mxu0 0.0
        %1630 = vmatprep.subr.mxu0 0.0
        %1631 = vmatpush1.msra.mxu0 0.0
        %1632 = vmatprep.subr.mxu0 0.0
        %1633 = vmatpush1.msra.mxu0 0.0
        %1634 = vmatprep.subr.mxu0 0.0
        %1635 = vmatpush1.msra.mxu0 0.0
        %1636 = vmatprep.subr.mxu0 0.0
        %1637 = vmatpush1.msra.mxu0 0.0
        %1638 = vmatprep.subr.mxu0 0.0
        %1639 = vmatpush1.msra.mxu0 0.0
        %1640 = vmatprep.subr.mxu0 0.0
        %1641 = vmatpush1.msra.mxu0 0.0
        %1642 = vmatprep.subr.mxu0 0.0
        %1643 = vmatpush1.msra.mxu0 0.0
        %1644 = vmatprep.subr.mxu0 0.0
        %1645 = vmatpush1.msra.mxu0 0.0
        %1646 = vmatprep.subr.mxu0 0.0
        %1647 = vmatpush1.msra.mxu0 0.0
        %1648 = vmatprep.subr.mxu0 0.0
        %1649 = vmatpush1.msra.mxu0 0.0
        %1650 = vmatprep.subr.mxu0 0.0
        %1651 = vmatpush1.msra.mxu0 0.0
        %1652 = vmatprep.subr.mxu0 0.0
        %1653 = vmatpush1.msra.mxu0 0.0
        %1654 = vmatprep.subr.mxu0 0.0
        %1655 = vmatpush1.msra.mxu0 0.0
        %1656 = vmatprep.subr.mxu0 0.0
        %1657 = vmatpush1.msra.mxu0 0.0
        %1658 = vmatprep.subr.mxu0 0.0
        %1659 = vmatpush1.msra.mxu0 0.0
        %1660 = vmatprep.subr.mxu0 0.0
        %1661 = vmatpush1.msra.mxu0 0.0
        %1662 = vmatprep.subr.mxu0 0.0
        %1663 = vmatpush1.msra.mxu0 0.0
        %1664 = vmatprep.subr.mxu0 0.0
        %1665 = vmatpush1.msra.mxu0 0.0
        %1666 = vmatprep.subr.mxu0 0.0
        %1667 = vmatpush1.msra.mxu0 0.0
        %1668 = vmatprep.subr.mxu0 0.0
        %1669 = vmatpush1.msra.mxu0 0.0
        %1670 = vmatprep.subr.mxu0 0.0
        %1671 = vmatpush1.msra.mxu0 0.0
        %1672 = vmatprep.mubr.f32.mxu0 0.0
        %1673 = vmatmul.mubr.f32.gmra.mrb[0].mxu0 %v1606
        %v1674 = vpop.f32.mrb[0].mxu0
        %v1675 = vadd.f32 0.0, %v1674
        %v1676 = vpop.f32.mrb[0].mxu0
        %v1677 = vadd.f32 0.0, %v1676
        %1678 = vdwg.mxu0
        %1679 = vmatprep.subr.mxu0 0.0
        %1680 = vmatpush1.msra.mxu0 %v1602
        %1681 = vmatprep.subr.mxu0 0.0
        %1682 = vmatpush1.msra.mxu0 0.0
        %1683 = vmatprep.subr.mxu0 0.0
        %1684 = vmatpush1.msra.mxu0 0.0
        %1685 = vmatprep.subr.mxu0 0.0
        %1686 = vmatpush1.msra.mxu0 0.0
        %1687 = vmatprep.subr.mxu0 0.0
        %1688 = vmatpush1.msra.mxu0 0.0
        %1689 = vmatprep.subr.mxu0 0.0
        %1690 = vmatpush1.msra.mxu0 0.0
        %1691 = vmatprep.subr.mxu0 0.0
        %1692 = vmatpush1.msra.mxu0 0.0
        %1693 = vmatprep.subr.mxu0 0.0
        %1694 = vmatpush1.msra.mxu0 0.0
        %1695 = vmatprep.subr.mxu0 0.0
        %1696 = vmatpush1.msra.mxu0 0.0
        %1697 = vmatprep.subr.mxu0 0.0
        %1698 = vmatpush1.msra.mxu0 0.0
        %1699 = vmatprep.subr.mxu0 0.0
        %1700 = vmatpush1.msra.mxu0 0.0
        %1701 = vmatprep.subr.mxu0 0.0
        %1702 = vmatpush1.msra.mxu0 0.0
        %1703 = vmatprep.subr.mxu0 0.0
        %1704 = vmatpush1.msra.mxu0 0.0
        %1705 = vmatprep.subr.mxu0 0.0
        %1706 = vmatpush1.msra.mxu0 0.0
        %1707 = vmatprep.subr.mxu0 0.0
        %1708 = vmatpush1.msra.mxu0 0.0
        %1709 = vmatprep.subr.mxu0 0.0
        %1710 = vmatpush1.msra.mxu0 0.0
        %1711 = vmatprep.subr.mxu0 0.0
        %1712 = vmatpush1.msra.mxu0 0.0
        %1713 = vmatprep.subr.mxu0 0.0
        %1714 = vmatpush1.msra.mxu0 0.0
        %1715 = vmatprep.subr.mxu0 0.0
        %1716 = vmatpush1.msra.mxu0 0.0
        %1717 = vmatprep.subr.mxu0 0.0
        %1718 = vmatpush1.msra.mxu0 0.0
        %1719 = vmatprep.subr.mxu0 0.0
        %1720 = vmatpush1.msra.mxu0 0.0
        %1721 = vmatprep.subr.mxu0 0.0
        %1722 = vmatpush1.msra.mxu0 0.0
        %1723 = vmatprep.subr.mxu0 0.0
        %1724 = vmatpush1.msra.mxu0 0.0
        %1725 = vmatprep.subr.mxu0 0.0
        %1726 = vmatpush1.msra.mxu0 0.0
        %1727 = vmatprep.subr.mxu0 0.0
        %1728 = vmatpush1.msra.mxu0 0.0
        %1729 = vmatprep.subr.mxu0 0.0
        %1730 = vmatpush1.msra.mxu0 0.0
        %1731 = vmatprep.subr.mxu0 0.0
        %1732 = vmatpush1.msra.mxu0 0.0
        %1733 = vmatprep.subr.mxu0 0.0
        %1734 = vmatpush1.msra.mxu0 0.0
        %1735 = vmatprep.subr.mxu0 0.0
        %1736 = vmatpush1.msra.mxu0 0.0
        %1737 = vmatprep.subr.mxu0 0.0
        %1738 = vmatpush1.msra.mxu0 0.0
        %1739 = vmatprep.subr.mxu0 0.0
        %1740 = vmatpush1.msra.mxu0 0.0
        %1741 = vmatprep.subr.mxu0 0.0
        %1742 = vmatpush1.msra.mxu0 0.0
        %1743 = vmatprep.mubr.f32.mxu0 0.0
        %1744 = vmatmul.mubr.f32.gmra.mrb[0].mxu0 %v1606
        %v1745 = vpop.f32.mrb[0].mxu0
        %v1746 = vadd.f32 0.0, %v1745
        %v1747 = vpop.f32.mrb[0].mxu0
        %1748 = vdwg.mxu0
        %v1749 = vadd.f32 %v1590, %v1675
        %v1750 = vadd.f32 %v1591, %v1677
        %v1751 = vadd.f32 %v1592, %v1746
        %v1752 = vmul.f32 %v1749, %v323
        %v1753 = vmul.f32 %v1750, %v327
        %v1754 = vmul.f32 %v1751, %v331
        %v1755 = vadd.f32 %v1752, %v1753
        %v1756 = vadd.f32 %v1755, %v1754
        %1757 = vadd.xlane.f32.xlu0 %v1756
        %v1758 = vpop.xlane.xlu0 %1757
        %v1759 = vmul.f32 %v1758, 0.00390625
        %v1760 = vmul.f32 %v1752, %v1749
        %v1761 = vmul.f32 %v1753, %v1750
        %v1762 = vmul.f32 %v1754, %v1751
        %v1763 = vadd.f32 %v1760, %v1761
        %v1764 = vadd.f32 %v1763, %v1762
        %1765 = vadd.xlane.f32.xlu0 %v1764
        %v1766 = vpop.xlane.xlu0 %1765
        %v1767 = vmul.f32 %v1766, 0.00390625
        %v1768 = vmul.f32 %v1759, %v1759
        %v1769 = vsub.f32 %v1767, %v1768
        %v1770 = vsub.f32 %v1749, %v1759
        %v1771 = vsub.f32 %v1750, %v1759
        %v1772 = vsub.f32 %v1751, %v1759
        %v1773 = vadd.f32 %v1769, 1e-05
        %v1774 = vrsqrt.pop %v1773
        %v1775 = vmul.f32 %v1770, %v1774
        %v1776 = vmul.f32 %v1771, %v1774
        %v1777 = vmul.f32 %v1772, %v1774
        %v1778 = vmul.f32 %v1775, %v323
        %v1779 = vmul.f32 %v1776, %v327
        %v1780 = vmul.f32 %v1777, %v331
        %v1781 = vmax.f32 %v1778, 0.0
        %v1782 = vmax.f32 %v1779, 0.0
        %v1783 = vmax.f32 %v1780, 0.0
        %1784 = vrot.lane.b32.xlu0 %v1781, 19
        %v1785 = vpop.permute.xlu0 %1784
        %1786 = vrot.lane.b32.xlu0 %v1782, 19
        %v1787 = vpop.permute.xlu0 %1786
        %1788 = vrot.lane.b32.xlu0 %v1783, 19
        %v1789 = vpop.permute.xlu0 %1788
        %v1790 = vsel %vm343, %v1787, %v1789
        %v1791 = vsel %vm343, %v1785, %v1787
        %v1792 = vsel %vm343, %v1789, %v1785
        %v1793 = vld [vmem:[%s2] sm:$0xff]
        %1794 = vrot.lane.b32.xlu0 %v1781, 18
        %v1795 = vpop.permute.xlu0 %1794
        %1796 = vrot.lane.b32.xlu0 %v1782, 18
        %v1797 = vpop.permute.xlu0 %1796
        %1798 = vrot.lane.b32.xlu0 %v1783, 18
        %v1799 = vpop.permute.xlu0 %1798
        %v1800 = vsel %vm354, %v1797, %v1799
        %v1801 = vsel %vm354, %v1795, %v1797
        %v1802 = vsel %vm354, %v1799, %v1795
        %s1803 = scalar_lea.vmem %s2, 8
        %v1804 = vld [vmem:[%s1803] sm:$0xff]
        %v1806 = vsel %vm360, %v1804, 0
        %1808 = vmatprep.subr.mxu0 %v1801
        %1809 = vmatpush1.msra.mxu0 %v1802
        %1810 = vmatprep.subr.mxu0 0.0
        %1811 = vmatpush1.msra.mxu0 0.0
        %1812 = vmatprep.subr.mxu0 0.0
        %1813 = vmatpush1.msra.mxu0 0.0
        %1814 = vmatprep.subr.mxu0 0.0
        %1815 = vmatpush1.msra.mxu0 0.0
        %1816 = vmatprep.subr.mxu0 0.0
        %1817 = vmatpush1.msra.mxu0 0.0
        %1818 = vmatprep.subr.mxu0 0.0
        %1819 = vmatpush1.msra.mxu0 0.0
        %1820 = vmatprep.subr.mxu0 0.0
        %1821 = vmatpush1.msra.mxu0 0.0
        %1822 = vmatprep.subr.mxu0 0.0
        %1823 = vmatpush1.msra.mxu0 0.0
        %1824 = vmatprep.subr.mxu0 0.0
        %1825 = vmatpush1.msra.mxu0 0.0
        %1826 = vmatprep.subr.mxu0 0.0
        %1827 = vmatpush1.msra.mxu0 0.0
        %1828 = vmatprep.subr.mxu0 0.0
        %1829 = vmatpush1.msra.mxu0 0.0
        %1830 = vmatprep.subr.mxu0 0.0
        %1831 = vmatpush1.msra.mxu0 0.0
        %1832 = vmatprep.subr.mxu0 0.0
        %1833 = vmatpush1.msra.mxu0 0.0
        %1834 = vmatprep.subr.mxu0 0.0
        %1835 = vmatpush1.msra.mxu0 0.0
        %1836 = vmatprep.subr.mxu0 0.0
        %1837 = vmatpush1.msra.mxu0 0.0
        %1838 = vmatprep.subr.mxu0 0.0
        %1839 = vmatpush1.msra.mxu0 0.0
        %1840 = vmatprep.subr.mxu0 0.0
        %1841 = vmatpush1.msra.mxu0 0.0
        %1842 = vmatprep.subr.mxu0 0.0
        %1843 = vmatpush1.msra.mxu0 0.0
        %1844 = vmatprep.subr.mxu0 0.0
        %1845 = vmatpush1.msra.mxu0 0.0
        %1846 = vmatprep.subr.mxu0 0.0
        %1847 = vmatpush1.msra.mxu0 0.0
        %1848 = vmatprep.subr.mxu0 0.0
        %1849 = vmatpush1.msra.mxu0 0.0
        %1850 = vmatprep.subr.mxu0 0.0
        %1851 = vmatpush1.msra.mxu0 0.0
        %1852 = vmatprep.subr.mxu0 0.0
        %1853 = vmatpush1.msra.mxu0 0.0
        %1854 = vmatprep.subr.mxu0 0.0
        %1855 = vmatpush1.msra.mxu0 0.0
        %1856 = vmatprep.subr.mxu0 0.0
        %1857 = vmatpush1.msra.mxu0 0.0
        %1858 = vmatprep.subr.mxu0 0.0
        %1859 = vmatpush1.msra.mxu0 0.0
        %1860 = vmatprep.subr.mxu0 0.0
        %1861 = vmatpush1.msra.mxu0 0.0
        %1862 = vmatprep.subr.mxu0 0.0
        %1863 = vmatpush1.msra.mxu0 0.0
        %1864 = vmatprep.subr.mxu0 0.0
        %1865 = vmatpush1.msra.mxu0 0.0
        %1866 = vmatprep.subr.mxu0 0.0
        %1867 = vmatpush1.msra.mxu0 0.0
        %1868 = vmatprep.subr.mxu0 0.0
        %1869 = vmatpush1.msra.mxu0 0.0
        %1870 = vmatprep.subr.mxu0 0.0
        %1871 = vmatpush1.msra.mxu0 0.0
        %1872 = vmatprep.mubr.f32.mxu0 0.0
        %1873 = vmatmul.mubr.f32.gmra.mrb[0].mxu0 %v1806
        %v1874 = vpop.f32.mrb[0].mxu0
        %v1875 = vadd.f32 0.0, %v1874
        %v1876 = vpop.f32.mrb[0].mxu0
        %v1877 = vadd.f32 0.0, %v1876
        %1878 = vdwg.mxu0
        %1879 = vmatprep.subr.mxu0 0.0
        %1880 = vmatpush1.msra.mxu0 %v1800
        %1881 = vmatprep.subr.mxu0 0.0
        %1882 = vmatpush1.msra.mxu0 0.0
        %1883 = vmatprep.subr.mxu0 0.0
        %1884 = vmatpush1.msra.mxu0 0.0
        %1885 = vmatprep.subr.mxu0 0.0
        %1886 = vmatpush1.msra.mxu0 0.0
        %1887 = vmatprep.subr.mxu0 0.0
        %1888 = vmatpush1.msra.mxu0 0.0
        %1889 = vmatprep.subr.mxu0 0.0
        %1890 = vmatpush1.msra.mxu0 0.0
        %1891 = vmatprep.subr.mxu0 0.0
        %1892 = vmatpush1.msra.mxu0 0.0
        %1893 = vmatprep.subr.mxu0 0.0
        %1894 = vmatpush1.msra.mxu0 0.0
        %1895 = vmatprep.subr.mxu0 0.0
        %1896 = vmatpush1.msra.mxu0 0.0
        %1897 = vmatprep.subr.mxu0 0.0
        %1898 = vmatpush1.msra.mxu0 0.0
        %1899 = vmatprep.subr.mxu0 0.0
        %1900 = vmatpush1.msra.mxu0 0.0
        %1901 = vmatprep.subr.mxu0 0.0
        %1902 = vmatpush1.msra.mxu0 0.0
        %1903 = vmatprep.subr.mxu0 0.0
        %1904 = vmatpush1.msra.mxu0 0.0
        %1905 = vmatprep.subr.mxu0 0.0
        %1906 = vmatpush1.msra.mxu0 0.0
        %1907 = vmatprep.subr.mxu0 0.0
        %1908 = vmatpush1.msra.mxu0 0.0
        %1909 = vmatprep.subr.mxu0 0.0
        %1910 = vmatpush1.msra.mxu0 0.0
        %1911 = vmatprep.subr.mxu0 0.0
        %1912 = vmatpush1.msra.mxu0 0.0
        %1913 = vmatprep.subr.mxu0 0.0
        %1914 = vmatpush1.msra.mxu0 0.0
        %1915 = vmatprep.subr.mxu0 0.0
        %1916 = vmatpush1.msra.mxu0 0.0
        %1917 = vmatprep.subr.mxu0 0.0
        %1918 = vmatpush1.msra.mxu0 0.0
        %1919 = vmatprep.subr.mxu0 0.0
        %1920 = vmatpush1.msra.mxu0 0.0
        %1921 = vmatprep.subr.mxu0 0.0
        %1922 = vmatpush1.msra.mxu0 0.0
        %1923 = vmatprep.subr.mxu0 0.0
        %1924 = vmatpush1.msra.mxu0 0.0
        %1925 = vmatprep.subr.mxu0 0.0
        %1926 = vmatpush1.msra.mxu0 0.0
        %1927 = vmatprep.subr.mxu0 0.0
        %1928 = vmatpush1.msra.mxu0 0.0
        %1929 = vmatprep.subr.mxu0 0.0
        %1930 = vmatpush1.msra.mxu0 0.0
        %1931 = vmatprep.subr.mxu0 0.0
        %1932 = vmatpush1.msra.mxu0 0.0
        %1933 = vmatprep.subr.mxu0 0.0
        %1934 = vmatpush1.msra.mxu0 0.0
        %1935 = vmatprep.subr.mxu0 0.0
        %1936 = vmatpush1.msra.mxu0 0.0
        %1937 = vmatprep.subr.mxu0 0.0
        %1938 = vmatpush1.msra.mxu0 0.0
        %1939 = vmatprep.subr.mxu0 0.0
        %1940 = vmatpush1.msra.mxu0 0.0
        %1941 = vmatprep.subr.mxu0 0.0
        %1942 = vmatpush1.msra.mxu0 0.0
        %1943 = vmatprep.mubr.f32.mxu0 0.0
        %1944 = vmatmul.mubr.f32.gmra.mrb[0].mxu0 %v1806
        %v1945 = vpop.f32.mrb[0].mxu0
        %v1946 = vadd.f32 0.0, %v1945
        %v1947 = vpop.f32.mrb[0].mxu0
        %1948 = vdwg.mxu0
        %v1950 = vsel %vm360, %v1793, 0
        %1952 = vmatprep.subr.mxu0 %v1791
        %1953 = vmatpush1.msra.mxu0 %v1792
        %1954 = vmatprep.subr.mxu0 0.0
        %1955 = vmatpush1.msra.mxu0 0.0
        %1956 = vmatprep.subr.mxu0 0.0
        %1957 = vmatpush1.msra.mxu0 0.0
        %1958 = vmatprep.subr.mxu0 0.0
        %1959 = vmatpush1.msra.mxu0 0.0
        %1960 = vmatprep.subr.mxu0 0.0
        %1961 = vmatpush1.msra.mxu0 0.0
        %1962 = vmatprep.subr.mxu0 0.0
        %1963 = vmatpush1.msra.mxu0 0.0
        %1964 = vmatprep.subr.mxu0 0.0
        %1965 = vmatpush1.msra.mxu0 0.0
        %1966 = vmatprep.subr.mxu0 0.0
        %1967 = vmatpush1.msra.mxu0 0.0
        %1968 = vmatprep.subr.mxu0 0.0
        %1969 = vmatpush1.msra.mxu0 0.0
        %1970 = vmatprep.subr.mxu0 0.0
        %1971 = vmatpush1.msra.mxu0 0.0
        %1972 = vmatprep.subr.mxu0 0.0
        %1973 = vmatpush1.msra.mxu0 0.0
        %1974 = vmatprep.subr.mxu0 0.0
        %1975 = vmatpush1.msra.mxu0 0.0
        %1976 = vmatprep.subr.mxu0 0.0
        %1977 = vmatpush1.msra.mxu0 0.0
        %1978 = vmatprep.subr.mxu0 0.0
        %1979 = vmatpush1.msra.mxu0 0.0
        %1980 = vmatprep.subr.mxu0 0.0
        %1981 = vmatpush1.msra.mxu0 0.0
        %1982 = vmatprep.subr.mxu0 0.0
        %1983 = vmatpush1.msra.mxu0 0.0
        %1984 = vmatprep.subr.mxu0 0.0
        %1985 = vmatpush1.msra.mxu0 0.0
        %1986 = vmatprep.subr.mxu0 0.0
        %1987 = vmatpush1.msra.mxu0 0.0
        %1988 = vmatprep.subr.mxu0 0.0
        %1989 = vmatpush1.msra.mxu0 0.0
        %1990 = vmatprep.subr.mxu0 0.0
        %1991 = vmatpush1.msra.mxu0 0.0
        %1992 = vmatprep.subr.mxu0 0.0
        %1993 = vmatpush1.msra.mxu0 0.0
        %1994 = vmatprep.subr.mxu0 0.0
        %1995 = vmatpush1.msra.mxu0 0.0
        %1996 = vmatprep.subr.mxu0 0.0
        %1997 = vmatpush1.msra.mxu0 0.0
        %1998 = vmatprep.subr.mxu0 0.0
        %1999 = vmatpush1.msra.mxu0 0.0
        %2000 = vmatprep.subr.mxu0 0.0
        %2001 = vmatpush1.msra.mxu0 0.0
        %2002 = vmatprep.subr.mxu0 0.0
        %2003 = vmatpush1.msra.mxu0 0.0
        %2004 = vmatprep.subr.mxu0 0.0
        %2005 = vmatpush1.msra.mxu0 0.0
        %2006 = vmatprep.subr.mxu0 0.0
        %2007 = vmatpush1.msra.mxu0 0.0
        %2008 = vmatprep.subr.mxu0 0.0
        %2009 = vmatpush1.msra.mxu0 0.0
        %2010 = vmatprep.subr.mxu0 0.0
        %2011 = vmatpush1.msra.mxu0 0.0
        %2012 = vmatprep.subr.mxu0 0.0
        %2013 = vmatpush1.msra.mxu0 0.0
        %2014 = vmatprep.subr.mxu0 0.0
        %2015 = vmatpush1.msra.mxu0 0.0
        %2016 = vmatprep.mubr.f32.mxu0 0.0
        %2017 = vmatmul.mubr.f32.gmra.mrb[0].mxu0 %v1950
        %v2018 = vpop.f32.mrb[0].mxu0
        %v2019 = vadd.f32 %v1875, %v2018
        %v2020 = vpop.f32.mrb[0].mxu0
        %v2021 = vadd.f32 %v1877, %v2020
        %2022 = vdwg.mxu0
        %2023 = vmatprep.subr.mxu0 0.0
        %2024 = vmatpush1.msra.mxu0 %v1790
        %2025 = vmatprep.subr.mxu0 0.0
        %2026 = vmatpush1.msra.mxu0 0.0
        %2027 = vmatprep.subr.mxu0 0.0
        %2028 = vmatpush1.msra.mxu0 0.0
        %2029 = vmatprep.subr.mxu0 0.0
        %2030 = vmatpush1.msra.mxu0 0.0
        %2031 = vmatprep.subr.mxu0 0.0
        %2032 = vmatpush1.msra.mxu0 0.0
        %2033 = vmatprep.subr.mxu0 0.0
        %2034 = vmatpush1.msra.mxu0 0.0
        %2035 = vmatprep.subr.mxu0 0.0
        %2036 = vmatpush1.msra.mxu0 0.0
        %2037 = vmatprep.subr.mxu0 0.0
        %2038 = vmatpush1.msra.mxu0 0.0
        %2039 = vmatprep.subr.mxu0 0.0
        %2040 = vmatpush1.msra.mxu0 0.0
        %2041 = vmatprep.subr.mxu0 0.0
        %2042 = vmatpush1.msra.mxu0 0.0
        %2043 = vmatprep.subr.mxu0 0.0
        %2044 = vmatpush1.msra.mxu0 0.0
        %2045 = vmatprep.subr.mxu0 0.0
        %2046 = vmatpush1.msra.mxu0 0.0
        %2047 = vmatprep.subr.mxu0 0.0
        %2048 = vmatpush1.msra.mxu0 0.0
        %2049 = vmatprep.subr.mxu0 0.0
        %2050 = vmatpush1.msra.mxu0 0.0
        %2051 = vmatprep.subr.mxu0 0.0
        %2052 = vmatpush1.msra.mxu0 0.0
        %2053 = vmatprep.subr.mxu0 0.0
        %2054 = vmatpush1.msra.mxu0 0.0
        %2055 = vmatprep.subr.mxu0 0.0
        %2056 = vmatpush1.msra.mxu0 0.0
        %2057 = vmatprep.subr.mxu0 0.0
        %2058 = vmatpush1.msra.mxu0 0.0
        %2059 = vmatprep.subr.mxu0 0.0
        %2060 = vmatpush1.msra.mxu0 0.0
        %2061 = vmatprep.subr.mxu0 0.0
        %2062 = vmatpush1.msra.mxu0 0.0
        %2063 = vmatprep.subr.mxu0 0.0
        %2064 = vmatpush1.msra.mxu0 0.0
        %2065 = vmatprep.subr.mxu0 0.0
        %2066 = vmatpush1.msra.mxu0 0.0
        %2067 = vmatprep.subr.mxu0 0.0
        %2068 = vmatpush1.msra.mxu0 0.0
        %2069 = vmatprep.subr.mxu0 0.0
        %2070 = vmatpush1.msra.mxu0 0.0
        %2071 = vmatprep.subr.mxu0 0.0
        %2072 = vmatpush1.msra.mxu0 0.0
        %2073 = vmatprep.subr.mxu0 0.0
        %2074 = vmatpush1.msra.mxu0 0.0
        %2075 = vmatprep.subr.mxu0 0.0
        %2076 = vmatpush1.msra.mxu0 0.0
        %2077 = vmatprep.subr.mxu0 0.0
        %2078 = vmatpush1.msra.mxu0 0.0
        %2079 = vmatprep.subr.mxu0 0.0
        %2080 = vmatpush1.msra.mxu0 0.0
        %2081 = vmatprep.subr.mxu0 0.0
        %2082 = vmatpush1.msra.mxu0 0.0
        %2083 = vmatprep.subr.mxu0 0.0
        %2084 = vmatpush1.msra.mxu0 0.0
        %2085 = vmatprep.subr.mxu0 0.0
        %2086 = vmatpush1.msra.mxu0 0.0
        %2087 = vmatprep.mubr.f32.mxu0 0.0
        %2088 = vmatmul.mubr.f32.gmra.mrb[0].mxu0 %v1950
        %v2089 = vpop.f32.mrb[0].mxu0
        %v2090 = vadd.f32 %v1946, %v2089
        %v2091 = vpop.f32.mrb[0].mxu0
        %2092 = vdwg.mxu0
        %2093 = vrot.lane.b32.xlu0 %v1781, 17
        %v2094 = vpop.permute.xlu0 %2093
        %2095 = vrot.lane.b32.xlu0 %v1782, 17
        %v2096 = vpop.permute.xlu0 %2095
        %2097 = vrot.lane.b32.xlu0 %v1783, 17
        %v2098 = vpop.permute.xlu0 %2097
        %v2099 = vsel %vm655, %v2096, %v2098
        %v2100 = vsel %vm655, %v2094, %v2096
        %v2101 = vsel %vm655, %v2098, %v2094
        %s2102 = scalar_lea.vmem %s2, 16
        %v2103 = vld [vmem:[%s2102] sm:$0xff]
        %v2105 = vsel %vm360, %v2103, 0
        %2107 = vmatprep.subr.mxu0 %v2100
        %2108 = vmatpush1.msra.mxu0 %v2101
        %2109 = vmatprep.subr.mxu0 0.0
        %2110 = vmatpush1.msra.mxu0 0.0
        %2111 = vmatprep.subr.mxu0 0.0
        %2112 = vmatpush1.msra.mxu0 0.0
        %2113 = vmatprep.subr.mxu0 0.0
        %2114 = vmatpush1.msra.mxu0 0.0
        %2115 = vmatprep.subr.mxu0 0.0
        %2116 = vmatpush1.msra.mxu0 0.0
        %2117 = vmatprep.subr.mxu0 0.0
        %2118 = vmatpush1.msra.mxu0 0.0
        %2119 = vmatprep.subr.mxu0 0.0
        %2120 = vmatpush1.msra.mxu0 0.0
        %2121 = vmatprep.subr.mxu0 0.0
        %2122 = vmatpush1.msra.mxu0 0.0
        %2123 = vmatprep.subr.mxu0 0.0
        %2124 = vmatpush1.msra.mxu0 0.0
        %2125 = vmatprep.subr.mxu0 0.0
        %2126 = vmatpush1.msra.mxu0 0.0
        %2127 = vmatprep.subr.mxu0 0.0
        %2128 = vmatpush1.msra.mxu0 0.0
        %2129 = vmatprep.subr.mxu0 0.0
        %2130 = vmatpush1.msra.mxu0 0.0
        %2131 = vmatprep.subr.mxu0 0.0
        %2132 = vmatpush1.msra.mxu0 0.0
        %2133 = vmatprep.subr.mxu0 0.0
        %2134 = vmatpush1.msra.mxu0 0.0
        %2135 = vmatprep.subr.mxu0 0.0
        %2136 = vmatpush1.msra.mxu0 0.0
        %2137 = vmatprep.subr.mxu0 0.0
        %2138 = vmatpush1.msra.mxu0 0.0
        %2139 = vmatprep.subr.mxu0 0.0
        %2140 = vmatpush1.msra.mxu0 0.0
        %2141 = vmatprep.subr.mxu0 0.0
        %2142 = vmatpush1.msra.mxu0 0.0
        %2143 = vmatprep.subr.mxu0 0.0
        %2144 = vmatpush1.msra.mxu0 0.0
        %2145 = vmatprep.subr.mxu0 0.0
        %2146 = vmatpush1.msra.mxu0 0.0
        %2147 = vmatprep.subr.mxu0 0.0
        %2148 = vmatpush1.msra.mxu0 0.0
        %2149 = vmatprep.subr.mxu0 0.0
        %2150 = vmatpush1.msra.mxu0 0.0
        %2151 = vmatprep.subr.mxu0 0.0
        %2152 = vmatpush1.msra.mxu0 0.0
        %2153 = vmatprep.subr.mxu0 0.0
        %2154 = vmatpush1.msra.mxu0 0.0
        %2155 = vmatprep.subr.mxu0 0.0
        %2156 = vmatpush1.msra.mxu0 0.0
        %2157 = vmatprep.subr.mxu0 0.0
        %2158 = vmatpush1.msra.mxu0 0.0
        %2159 = vmatprep.subr.mxu0 0.0
        %2160 = vmatpush1.msra.mxu0 0.0
        %2161 = vmatprep.subr.mxu0 0.0
        %2162 = vmatpush1.msra.mxu0 0.0
        %2163 = vmatprep.subr.mxu0 0.0
        %2164 = vmatpush1.msra.mxu0 0.0
        %2165 = vmatprep.subr.mxu0 0.0
        %2166 = vmatpush1.msra.mxu0 0.0
        %2167 = vmatprep.subr.mxu0 0.0
        %2168 = vmatpush1.msra.mxu0 0.0
        %2169 = vmatprep.subr.mxu0 0.0
        %2170 = vmatpush1.msra.mxu0 0.0
        %2171 = vmatprep.mubr.f32.mxu0 0.0
        %2172 = vmatmul.mubr.f32.gmra.mrb[0].mxu0 %v2105
        %v2173 = vpop.f32.mrb[0].mxu0
        %v2174 = vadd.f32 0.0, %v2173
        %v2175 = vpop.f32.mrb[0].mxu0
        %v2176 = vadd.f32 0.0, %v2175
        %2177 = vdwg.mxu0
        %2178 = vmatprep.subr.mxu0 0.0
        %2179 = vmatpush1.msra.mxu0 %v2099
        %2180 = vmatprep.subr.mxu0 0.0
        %2181 = vmatpush1.msra.mxu0 0.0
        %2182 = vmatprep.subr.mxu0 0.0
        %2183 = vmatpush1.msra.mxu0 0.0
        %2184 = vmatprep.subr.mxu0 0.0
        %2185 = vmatpush1.msra.mxu0 0.0
        %2186 = vmatprep.subr.mxu0 0.0
        %2187 = vmatpush1.msra.mxu0 0.0
        %2188 = vmatprep.subr.mxu0 0.0
        %2189 = vmatpush1.msra.mxu0 0.0
        %2190 = vmatprep.subr.mxu0 0.0
        %2191 = vmatpush1.msra.mxu0 0.0
        %2192 = vmatprep.subr.mxu0 0.0
        %2193 = vmatpush1.msra.mxu0 0.0
        %2194 = vmatprep.subr.mxu0 0.0
        %2195 = vmatpush1.msra.mxu0 0.0
        %2196 = vmatprep.subr.mxu0 0.0
        %2197 = vmatpush1.msra.mxu0 0.0
        %2198 = vmatprep.subr.mxu0 0.0
        %2199 = vmatpush1.msra.mxu0 0.0
        %2200 = vmatprep.subr.mxu0 0.0
        %2201 = vmatpush1.msra.mxu0 0.0
        %2202 = vmatprep.subr.mxu0 0.0
        %2203 = vmatpush1.msra.mxu0 0.0
        %2204 = vmatprep.subr.mxu0 0.0
        %2205 = vmatpush1.msra.mxu0 0.0
        %2206 = vmatprep.subr.mxu0 0.0
        %2207 = vmatpush1.msra.mxu0 0.0
        %2208 = vmatprep.subr.mxu0 0.0
        %2209 = vmatpush1.msra.mxu0 0.0
        %2210 = vmatprep.subr.mxu0 0.0
        %2211 = vmatpush1.msra.mxu0 0.0
        %2212 = vmatprep.subr.mxu0 0.0
        %2213 = vmatpush1.msra.mxu0 0.0
        %2214 = vmatprep.subr.mxu0 0.0
        %2215 = vmatpush1.msra.mxu0 0.0
        %2216 = vmatprep.subr.mxu0 0.0
        %2217 = vmatpush1.msra.mxu0 0.0
        %2218 = vmatprep.subr.mxu0 0.0
        %2219 = vmatpush1.msra.mxu0 0.0
        %2220 = vmatprep.subr.mxu0 0.0
        %2221 = vmatpush1.msra.mxu0 0.0
        %2222 = vmatprep.subr.mxu0 0.0
        %2223 = vmatpush1.msra.mxu0 0.0
        %2224 = vmatprep.subr.mxu0 0.0
        %2225 = vmatpush1.msra.mxu0 0.0
        %2226 = vmatprep.subr.mxu0 0.0
        %2227 = vmatpush1.msra.mxu0 0.0
        %2228 = vmatprep.subr.mxu0 0.0
        %2229 = vmatpush1.msra.mxu0 0.0
        %2230 = vmatprep.subr.mxu0 0.0
        %2231 = vmatpush1.msra.mxu0 0.0
        %2232 = vmatprep.subr.mxu0 0.0
        %2233 = vmatpush1.msra.mxu0 0.0
        %2234 = vmatprep.subr.mxu0 0.0
        %2235 = vmatpush1.msra.mxu0 0.0
        %2236 = vmatprep.subr.mxu0 0.0
        %2237 = vmatpush1.msra.mxu0 0.0
        %2238 = vmatprep.subr.mxu0 0.0
        %2239 = vmatpush1.msra.mxu0 0.0
        %2240 = vmatprep.subr.mxu0 0.0
        %2241 = vmatpush1.msra.mxu0 0.0
        %2242 = vmatprep.mubr.f32.mxu0 0.0
        %2243 = vmatmul.mubr.f32.gmra.mrb[0].mxu0 %v2105
        %v2244 = vpop.f32.mrb[0].mxu0
        %v2245 = vadd.f32 0.0, %v2244
        %v2246 = vpop.f32.mrb[0].mxu0
        %2247 = vdwg.mxu0
        %v2248 = vadd.f32 %v2019, %v2174
        %v2249 = vadd.f32 %v2021, %v2176
        %v2250 = vadd.f32 %v2090, %v2245
        %2251 = vrot.lane.b32.xlu0 %v1781, 1
        %v2252 = vpop.permute.xlu0 %2251
        %2253 = vrot.lane.b32.xlu0 %v1782, 1
        %v2254 = vpop.permute.xlu0 %2253
        %2255 = vrot.lane.b32.xlu0 %v1783, 1
        %v2256 = vpop.permute.xlu0 %2255
        %v2257 = vsel %vm814, %v2254, %v2256
        %v2258 = vsel %vm814, %v2252, %v2254
        %v2259 = vsel %vm814, %v2256, %v2252
        %s2260 = scalar_lea.vmem %s2, 24
        %v2261 = vld [vmem:[%s2260] sm:$0xff]
        %v2263 = vsel %vm360, %v2261, 0
        %2265 = vmatprep.subr.mxu0 %v2258
        %2266 = vmatpush1.msra.mxu0 %v2259
        %2267 = vmatprep.subr.mxu0 0.0
        %2268 = vmatpush1.msra.mxu0 0.0
        %2269 = vmatprep.subr.mxu0 0.0
        %2270 = vmatpush1.msra.mxu0 0.0
        %2271 = vmatprep.subr.mxu0 0.0
        %2272 = vmatpush1.msra.mxu0 0.0
        %2273 = vmatprep.subr.mxu0 0.0
        %2274 = vmatpush1.msra.mxu0 0.0
        %2275 = vmatprep.subr.mxu0 0.0
        %2276 = vmatpush1.msra.mxu0 0.0
        %2277 = vmatprep.subr.mxu0 0.0
        %2278 = vmatpush1.msra.mxu0 0.0
        %2279 = vmatprep.subr.mxu0 0.0
        %2280 = vmatpush1.msra.mxu0 0.0
        %2281 = vmatprep.subr.mxu0 0.0
        %2282 = vmatpush1.msra.mxu0 0.0
        %2283 = vmatprep.subr.mxu0 0.0
        %2284 = vmatpush1.msra.mxu0 0.0
        %2285 = vmatprep.subr.mxu0 0.0
        %2286 = vmatpush1.msra.mxu0 0.0
        %2287 = vmatprep.subr.mxu0 0.0
        %2288 = vmatpush1.msra.mxu0 0.0
        %2289 = vmatprep.subr.mxu0 0.0
        %2290 = vmatpush1.msra.mxu0 0.0
        %2291 = vmatprep.subr.mxu0 0.0
        %2292 = vmatpush1.msra.mxu0 0.0
        %2293 = vmatprep.subr.mxu0 0.0
        %2294 = vmatpush1.msra.mxu0 0.0
        %2295 = vmatprep.subr.mxu0 0.0
        %2296 = vmatpush1.msra.mxu0 0.0
        %2297 = vmatprep.subr.mxu0 0.0
        %2298 = vmatpush1.msra.mxu0 0.0
        %2299 = vmatprep.subr.mxu0 0.0
        %2300 = vmatpush1.msra.mxu0 0.0
        %2301 = vmatprep.subr.mxu0 0.0
        %2302 = vmatpush1.msra.mxu0 0.0
        %2303 = vmatprep.subr.mxu0 0.0
        %2304 = vmatpush1.msra.mxu0 0.0
        %2305 = vmatprep.subr.mxu0 0.0
        %2306 = vmatpush1.msra.mxu0 0.0
        %2307 = vmatprep.subr.mxu0 0.0
        %2308 = vmatpush1.msra.mxu0 0.0
        %2309 = vmatprep.subr.mxu0 0.0
        %2310 = vmatpush1.msra.mxu0 0.0
        %2311 = vmatprep.subr.mxu0 0.0
        %2312 = vmatpush1.msra.mxu0 0.0
        %2313 = vmatprep.subr.mxu0 0.0
        %2314 = vmatpush1.msra.mxu0 0.0
        %2315 = vmatprep.subr.mxu0 0.0
        %2316 = vmatpush1.msra.mxu0 0.0
        %2317 = vmatprep.subr.mxu0 0.0
        %2318 = vmatpush1.msra.mxu0 0.0
        %2319 = vmatprep.subr.mxu0 0.0
        %2320 = vmatpush1.msra.mxu0 0.0
        %2321 = vmatprep.subr.mxu0 0.0
        %2322 = vmatpush1.msra.mxu0 0.0
        %2323 = vmatprep.subr.mxu0 0.0
        %2324 = vmatpush1.msra.mxu0 0.0
        %2325 = vmatprep.subr.mxu0 0.0
        %2326 = vmatpush1.msra.mxu0 0.0
        %2327 = vmatprep.subr.mxu0 0.0
        %2328 = vmatpush1.msra.mxu0 0.0
        %2329 = vmatprep.mubr.f32.mxu0 0.0
        %2330 = vmatmul.mubr.f32.gmra.mrb[0].mxu0 %v2263
        %v2331 = vpop.f32.mrb[0].mxu0
        %v2332 = vadd.f32 0.0, %v2331
        %v2333 = vpop.f32.mrb[0].mxu0
        %v2334 = vadd.f32 0.0, %v2333
        %2335 = vdwg.mxu0
        %2336 = vmatprep.subr.mxu0 0.0
        %2337 = vmatpush1.msra.mxu0 %v2257
        %2338 = vmatprep.subr.mxu0 0.0
        %2339 = vmatpush1.msra.mxu0 0.0
        %2340 = vmatprep.subr.mxu0 0.0
        %2341 = vmatpush1.msra.mxu0 0.0
        %2342 = vmatprep.subr.mxu0 0.0
        %2343 = vmatpush1.msra.mxu0 0.0
        %2344 = vmatprep.subr.mxu0 0.0
        %2345 = vmatpush1.msra.mxu0 0.0
        %2346 = vmatprep.subr.mxu0 0.0
        %2347 = vmatpush1.msra.mxu0 0.0
        %2348 = vmatprep.subr.mxu0 0.0
        %2349 = vmatpush1.msra.mxu0 0.0
        %2350 = vmatprep.subr.mxu0 0.0
        %2351 = vmatpush1.msra.mxu0 0.0
        %2352 = vmatprep.subr.mxu0 0.0
        %2353 = vmatpush1.msra.mxu0 0.0
        %2354 = vmatprep.subr.mxu0 0.0
        %2355 = vmatpush1.msra.mxu0 0.0
        %2356 = vmatprep.subr.mxu0 0.0
        %2357 = vmatpush1.msra.mxu0 0.0
        %2358 = vmatprep.subr.mxu0 0.0
        %2359 = vmatpush1.msra.mxu0 0.0
        %2360 = vmatprep.subr.mxu0 0.0
        %2361 = vmatpush1.msra.mxu0 0.0
        %2362 = vmatprep.subr.mxu0 0.0
        %2363 = vmatpush1.msra.mxu0 0.0
        %2364 = vmatprep.subr.mxu0 0.0
        %2365 = vmatpush1.msra.mxu0 0.0
        %2366 = vmatprep.subr.mxu0 0.0
        %2367 = vmatpush1.msra.mxu0 0.0
        %2368 = vmatprep.subr.mxu0 0.0
        %2369 = vmatpush1.msra.mxu0 0.0
        %2370 = vmatprep.subr.mxu0 0.0
        %2371 = vmatpush1.msra.mxu0 0.0
        %2372 = vmatprep.subr.mxu0 0.0
        %2373 = vmatpush1.msra.mxu0 0.0
        %2374 = vmatprep.subr.mxu0 0.0
        %2375 = vmatpush1.msra.mxu0 0.0
        %2376 = vmatprep.subr.mxu0 0.0
        %2377 = vmatpush1.msra.mxu0 0.0
        %2378 = vmatprep.subr.mxu0 0.0
        %2379 = vmatpush1.msra.mxu0 0.0
        %2380 = vmatprep.subr.mxu0 0.0
        %2381 = vmatpush1.msra.mxu0 0.0
        %2382 = vmatprep.subr.mxu0 0.0
        %2383 = vmatpush1.msra.mxu0 0.0
        %2384 = vmatprep.subr.mxu0 0.0
        %2385 = vmatpush1.msra.mxu0 0.0
        %2386 = vmatprep.subr.mxu0 0.0
        %2387 = vmatpush1.msra.mxu0 0.0
        %2388 = vmatprep.subr.mxu0 0.0
        %2389 = vmatpush1.msra.mxu0 0.0
        %2390 = vmatprep.subr.mxu0 0.0
        %2391 = vmatpush1.msra.mxu0 0.0
        %2392 = vmatprep.subr.mxu0 0.0
        %2393 = vmatpush1.msra.mxu0 0.0
        %2394 = vmatprep.subr.mxu0 0.0
        %2395 = vmatpush1.msra.mxu0 0.0
        %2396 = vmatprep.subr.mxu0 0.0
        %2397 = vmatpush1.msra.mxu0 0.0
        %2398 = vmatprep.subr.mxu0 0.0
        %2399 = vmatpush1.msra.mxu0 0.0
        %2400 = vmatprep.mubr.f32.mxu0 0.0
        %2401 = vmatmul.mubr.f32.gmra.mrb[0].mxu0 %v2263
        %v2402 = vpop.f32.mrb[0].mxu0
        %v2403 = vadd.f32 0.0, %v2402
        %v2404 = vpop.f32.mrb[0].mxu0
        %2405 = vdwg.mxu0
        %v2406 = vadd.f32 %v2248, %v2332
        %v2407 = vadd.f32 %v2249, %v2334
        %v2408 = vadd.f32 %v2250, %v2403
        %s2409 = scalar_lea.vmem %s2, 32
        %v2410 = vld [vmem:[%s2409] sm:$0xff]
        %v2412 = vsel %vm360, %v2410, 0
        %2414 = vmatprep.subr.mxu0 %v1782
        %2415 = vmatpush1.msra.mxu0 %v1781
        %2416 = vmatprep.subr.mxu0 0.0
        %2417 = vmatpush1.msra.mxu0 0.0
        %2418 = vmatprep.subr.mxu0 0.0
        %2419 = vmatpush1.msra.mxu0 0.0
        %2420 = vmatprep.subr.mxu0 0.0
        %2421 = vmatpush1.msra.mxu0 0.0
        %2422 = vmatprep.subr.mxu0 0.0
        %2423 = vmatpush1.msra.mxu0 0.0
        %2424 = vmatprep.subr.mxu0 0.0
        %2425 = vmatpush1.msra.mxu0 0.0
        %2426 = vmatprep.subr.mxu0 0.0
        %2427 = vmatpush1.msra.mxu0 0.0
        %2428 = vmatprep.subr.mxu0 0.0
        %2429 = vmatpush1.msra.mxu0 0.0
        %2430 = vmatprep.subr.mxu0 0.0
        %2431 = vmatpush1.msra.mxu0 0.0
        %2432 = vmatprep.subr.mxu0 0.0
        %2433 = vmatpush1.msra.mxu0 0.0
        %2434 = vmatprep.subr.mxu0 0.0
        %2435 = vmatpush1.msra.mxu0 0.0
        %2436 = vmatprep.subr.mxu0 0.0
        %2437 = vmatpush1.msra.mxu0 0.0
        %2438 = vmatprep.subr.mxu0 0.0
        %2439 = vmatpush1.msra.mxu0 0.0
        %2440 = vmatprep.subr.mxu0 0.0
        %2441 = vmatpush1.msra.mxu0 0.0
        %2442 = vmatprep.subr.mxu0 0.0
        %2443 = vmatpush1.msra.mxu0 0.0
        %2444 = vmatprep.subr.mxu0 0.0
        %2445 = vmatpush1.msra.mxu0 0.0
        %2446 = vmatprep.subr.mxu0 0.0
        %2447 = vmatpush1.msra.mxu0 0.0
        %2448 = vmatprep.subr.mxu0 0.0
        %2449 = vmatpush1.msra.mxu0 0.0
        %2450 = vmatprep.subr.mxu0 0.0
        %2451 = vmatpush1.msra.mxu0 0.0
        %2452 = vmatprep.subr.mxu0 0.0
        %2453 = vmatpush1.msra.mxu0 0.0
        %2454 = vmatprep.subr.mxu0 0.0
        %2455 = vmatpush1.msra.mxu0 0.0
        %2456 = vmatprep.subr.mxu0 0.0
        %2457 = vmatpush1.msra.mxu0 0.0
        %2458 = vmatprep.subr.mxu0 0.0
        %2459 = vmatpush1.msra.mxu0 0.0
        %2460 = vmatprep.subr.mxu0 0.0
        %2461 = vmatpush1.msra.mxu0 0.0
        %2462 = vmatprep.subr.mxu0 0.0
        %2463 = vmatpush1.msra.mxu0 0.0
        %2464 = vmatprep.subr.mxu0 0.0
        %2465 = vmatpush1.msra.mxu0 0.0
        %2466 = vmatprep.subr.mxu0 0.0
        %2467 = vmatpush1.msra.mxu0 0.0
        %2468 = vmatprep.subr.mxu0 0.0
        %2469 = vmatpush1.msra.mxu0 0.0
        %2470 = vmatprep.subr.mxu0 0.0
        %2471 = vmatpush1.msra.mxu0 0.0
        %2472 = vmatprep.subr.mxu0 0.0
        %2473 = vmatpush1.msra.mxu0 0.0
        %2474 = vmatprep.subr.mxu0 0.0
        %2475 = vmatpush1.msra.mxu0 0.0
        %2476 = vmatprep.subr.mxu0 0.0
        %2477 = vmatpush1.msra.mxu0 0.0
        %2478 = vmatprep.mubr.f32.mxu0 0.0
        %2479 = vmatmul.mubr.f32.gmra.mrb[0].mxu0 %v2412
        %v2480 = vpop.f32.mrb[0].mxu0
        %v2481 = vadd.f32 0.0, %v2480
        %v2482 = vpop.f32.mrb[0].mxu0
        %v2483 = vadd.f32 0.0, %v2482
        %2484 = vdwg.mxu0
        %2485 = vmatprep.subr.mxu0 0.0
        %2486 = vmatpush1.msra.mxu0 %v1783
        %2487 = vmatprep.subr.mxu0 0.0
        %2488 = vmatpush1.msra.mxu0 0.0
        %2489 = vmatprep.subr.mxu0 0.0
        %2490 = vmatpush1.msra.mxu0 0.0
        %2491 = vmatprep.subr.mxu0 0.0
        %2492 = vmatpush1.msra.mxu0 0.0
        %2493 = vmatprep.subr.mxu0 0.0
        %2494 = vmatpush1.msra.mxu0 0.0
        %2495 = vmatprep.subr.mxu0 0.0
        %2496 = vmatpush1.msra.mxu0 0.0
        %2497 = vmatprep.subr.mxu0 0.0
        %2498 = vmatpush1.msra.mxu0 0.0
        %2499 = vmatprep.subr.mxu0 0.0
        %2500 = vmatpush1.msra.mxu0 0.0
        %2501 = vmatprep.subr.mxu0 0.0
        %2502 = vmatpush1.msra.mxu0 0.0
        %2503 = vmatprep.subr.mxu0 0.0
        %2504 = vmatpush1.msra.mxu0 0.0
        %2505 = vmatprep.subr.mxu0 0.0
        %2506 = vmatpush1.msra.mxu0 0.0
        %2507 = vmatprep.subr.mxu0 0.0
        %2508 = vmatpush1.msra.mxu0 0.0
        %2509 = vmatprep.subr.mxu0 0.0
        %2510 = vmatpush1.msra.mxu0 0.0
        %2511 = vmatprep.subr.mxu0 0.0
        %2512 = vmatpush1.msra.mxu0 0.0
        %2513 = vmatprep.subr.mxu0 0.0
        %2514 = vmatpush1.msra.mxu0 0.0
        %2515 = vmatprep.subr.mxu0 0.0
        %2516 = vmatpush1.msra.mxu0 0.0
        %2517 = vmatprep.subr.mxu0 0.0
        %2518 = vmatpush1.msra.mxu0 0.0
        %2519 = vmatprep.subr.mxu0 0.0
        %2520 = vmatpush1.msra.mxu0 0.0
        %2521 = vmatprep.subr.mxu0 0.0
        %2522 = vmatpush1.msra.mxu0 0.0
        %2523 = vmatprep.subr.mxu0 0.0
        %2524 = vmatpush1.msra.mxu0 0.0
        %2525 = vmatprep.subr.mxu0 0.0
        %2526 = vmatpush1.msra.mxu0 0.0
        %2527 = vmatprep.subr.mxu0 0.0
        %2528 = vmatpush1.msra.mxu0 0.0
        %2529 = vmatprep.subr.mxu0 0.0
        %2530 = vmatpush1.msra.mxu0 0.0
        %2531 = vmatprep.subr.mxu0 0.0
        %2532 = vmatpush1.msra.mxu0 0.0
        %2533 = vmatprep.subr.mxu0 0.0
        %2534 = vmatpush1.msra.mxu0 0.0
        %2535 = vmatprep.subr.mxu0 0.0
        %2536 = vmatpush1.msra.mxu0 0.0
        %2537 = vmatprep.subr.mxu0 0.0
        %2538 = vmatpush1.msra.mxu0 0.0
        %2539 = vmatprep.subr.mxu0 0.0
        %2540 = vmatpush1.msra.mxu0 0.0
        %2541 = vmatprep.subr.mxu0 0.0
        %2542 = vmatpush1.msra.mxu0 0.0
        %2543 = vmatprep.subr.mxu0 0.0
        %2544 = vmatpush1.msra.mxu0 0.0
        %2545 = vmatprep.subr.mxu0 0.0
        %2546 = vmatpush1.msra.mxu0 0.0
        %2547 = vmatprep.subr.mxu0 0.0
        %2548 = vmatpush1.msra.mxu0 0.0
        %2549 = vmatprep.mubr.f32.mxu0 0.0
        %2550 = vmatmul.mubr.f32.gmra.mrb[0].mxu0 %v2412
        %v2551 = vpop.f32.mrb[0].mxu0
        %v2552 = vadd.f32 0.0, %v2551
        %v2553 = vpop.f32.mrb[0].mxu0
        %2554 = vdwg.mxu0
        %v2555 = vadd.f32 %v2406, %v2481
        %v2556 = vadd.f32 %v2407, %v2483
        %v2557 = vadd.f32 %v2408, %v2552
        %2558 = vrot.lane.b32.xlu0 %v1781, 127
        %v2559 = vpop.permute.xlu0 %2558
        %2560 = vrot.lane.b32.xlu0 %v1782, 127
        %v2561 = vpop.permute.xlu0 %2560
        %2562 = vrot.lane.b32.xlu0 %v1783, 127
        %v2563 = vpop.permute.xlu0 %2562
        %v2564 = vsel %vm1122, %v2561, %v2563
        %v2565 = vsel %vm1122, %v2559, %v2561
        %v2566 = vsel %vm1122, %v2563, %v2559
        %s2567 = scalar_lea.vmem %s2, 40
        %v2568 = vld [vmem:[%s2567] sm:$0xff]
        %v2570 = vsel %vm360, %v2568, 0
        %2572 = vmatprep.subr.mxu0 %v2564
        %2573 = vmatpush1.msra.mxu0 %v2565
        %2574 = vmatprep.subr.mxu0 0.0
        %2575 = vmatpush1.msra.mxu0 0.0
        %2576 = vmatprep.subr.mxu0 0.0
        %2577 = vmatpush1.msra.mxu0 0.0
        %2578 = vmatprep.subr.mxu0 0.0
        %2579 = vmatpush1.msra.mxu0 0.0
        %2580 = vmatprep.subr.mxu0 0.0
        %2581 = vmatpush1.msra.mxu0 0.0
        %2582 = vmatprep.subr.mxu0 0.0
        %2583 = vmatpush1.msra.mxu0 0.0
        %2584 = vmatprep.subr.mxu0 0.0
        %2585 = vmatpush1.msra.mxu0 0.0
        %2586 = vmatprep.subr.mxu0 0.0
        %2587 = vmatpush1.msra.mxu0 0.0
        %2588 = vmatprep.subr.mxu0 0.0
        %2589 = vmatpush1.msra.mxu0 0.0
        %2590 = vmatprep.subr.mxu0 0.0
        %2591 = vmatpush1.msra.mxu0 0.0
        %2592 = vmatprep.subr.mxu0 0.0
        %2593 = vmatpush1.msra.mxu0 0.0
        %2594 = vmatprep.subr.mxu0 0.0
        %2595 = vmatpush1.msra.mxu0 0.0
        %2596 = vmatprep.subr.mxu0 0.0
        %2597 = vmatpush1.msra.mxu0 0.0
        %2598 = vmatprep.subr.mxu0 0.0
        %2599 = vmatpush1.msra.mxu0 0.0
        %2600 = vmatprep.subr.mxu0 0.0
        %2601 = vmatpush1.msra.mxu0 0.0
        %2602 = vmatprep.subr.mxu0 0.0
        %2603 = vmatpush1.msra.mxu0 0.0
        %2604 = vmatprep.subr.mxu0 0.0
        %2605 = vmatpush1.msra.mxu0 0.0
        %2606 = vmatprep.subr.mxu0 0.0
        %2607 = vmatpush1.msra.mxu0 0.0
        %2608 = vmatprep.subr.mxu0 0.0
        %2609 = vmatpush1.msra.mxu0 0.0
        %2610 = vmatprep.subr.mxu0 0.0
        %2611 = vmatpush1.msra.mxu0 0.0
        %2612 = vmatprep.subr.mxu0 0.0
        %2613 = vmatpush1.msra.mxu0 0.0
        %2614 = vmatprep.subr.mxu0 0.0
        %2615 = vmatpush1.msra.mxu0 0.0
        %2616 = vmatprep.subr.mxu0 0.0
        %2617 = vmatpush1.msra.mxu0 0.0
        %2618 = vmatprep.subr.mxu0 0.0
        %2619 = vmatpush1.msra.mxu0 0.0
        %2620 = vmatprep.subr.mxu0 0.0
        %2621 = vmatpush1.msra.mxu0 0.0
        %2622 = vmatprep.subr.mxu0 0.0
        %2623 = vmatpush1.msra.mxu0 0.0
        %2624 = vmatprep.subr.mxu0 0.0
        %2625 = vmatpush1.msra.mxu0 0.0
        %2626 = vmatprep.subr.mxu0 0.0
        %2627 = vmatpush1.msra.mxu0 0.0
        %2628 = vmatprep.subr.mxu0 0.0
        %2629 = vmatpush1.msra.mxu0 0.0
        %2630 = vmatprep.subr.mxu0 0.0
        %2631 = vmatpush1.msra.mxu0 0.0
        %2632 = vmatprep.subr.mxu0 0.0
        %2633 = vmatpush1.msra.mxu0 0.0
        %2634 = vmatprep.subr.mxu0 0.0
        %2635 = vmatpush1.msra.mxu0 0.0
        %2636 = vmatprep.mubr.f32.mxu0 0.0
        %2637 = vmatmul.mubr.f32.gmra.mrb[0].mxu0 %v2570
        %v2638 = vpop.f32.mrb[0].mxu0
        %v2639 = vadd.f32 0.0, %v2638
        %v2640 = vpop.f32.mrb[0].mxu0
        %v2641 = vadd.f32 0.0, %v2640
        %2642 = vdwg.mxu0
        %2643 = vmatprep.subr.mxu0 0.0
        %2644 = vmatpush1.msra.mxu0 %v2566
        %2645 = vmatprep.subr.mxu0 0.0
        %2646 = vmatpush1.msra.mxu0 0.0
        %2647 = vmatprep.subr.mxu0 0.0
        %2648 = vmatpush1.msra.mxu0 0.0
        %2649 = vmatprep.subr.mxu0 0.0
        %2650 = vmatpush1.msra.mxu0 0.0
        %2651 = vmatprep.subr.mxu0 0.0
        %2652 = vmatpush1.msra.mxu0 0.0
        %2653 = vmatprep.subr.mxu0 0.0
        %2654 = vmatpush1.msra.mxu0 0.0
        %2655 = vmatprep.subr.mxu0 0.0
        %2656 = vmatpush1.msra.mxu0 0.0
        %2657 = vmatprep.subr.mxu0 0.0
        %2658 = vmatpush1.msra.mxu0 0.0
        %2659 = vmatprep.subr.mxu0 0.0
        %2660 = vmatpush1.msra.mxu0 0.0
        %2661 = vmatprep.subr.mxu0 0.0
        %2662 = vmatpush1.msra.mxu0 0.0
        %2663 = vmatprep.subr.mxu0 0.0
        %2664 = vmatpush1.msra.mxu0 0.0
        %2665 = vmatprep.subr.mxu0 0.0
        %2666 = vmatpush1.msra.mxu0 0.0
        %2667 = vmatprep.subr.mxu0 0.0
        %2668 = vmatpush1.msra.mxu0 0.0
        %2669 = vmatprep.subr.mxu0 0.0
        %2670 = vmatpush1.msra.mxu0 0.0
        %2671 = vmatprep.subr.mxu0 0.0
        %2672 = vmatpush1.msra.mxu0 0.0
        %2673 = vmatprep.subr.mxu0 0.0
        %2674 = vmatpush1.msra.mxu0 0.0
        %2675 = vmatprep.subr.mxu0 0.0
        %2676 = vmatpush1.msra.mxu0 0.0
        %2677 = vmatprep.subr.mxu0 0.0
        %2678 = vmatpush1.msra.mxu0 0.0
        %2679 = vmatprep.subr.mxu0 0.0
        %2680 = vmatpush1.msra.mxu0 0.0
        %2681 = vmatprep.subr.mxu0 0.0
        %2682 = vmatpush1.msra.mxu0 0.0
        %2683 = vmatprep.subr.mxu0 0.0
        %2684 = vmatpush1.msra.mxu0 0.0
        %2685 = vmatprep.subr.mxu0 0.0
        %2686 = vmatpush1.msra.mxu0 0.0
        %2687 = vmatprep.subr.mxu0 0.0
        %2688 = vmatpush1.msra.mxu0 0.0
        %2689 = vmatprep.subr.mxu0 0.0
        %2690 = vmatpush1.msra.mxu0 0.0
        %2691 = vmatprep.subr.mxu0 0.0
        %2692 = vmatpush1.msra.mxu0 0.0
        %2693 = vmatprep.subr.mxu0 0.0
        %2694 = vmatpush1.msra.mxu0 0.0
        %2695 = vmatprep.subr.mxu0 0.0
        %2696 = vmatpush1.msra.mxu0 0.0
        %2697 = vmatprep.subr.mxu0 0.0
        %2698 = vmatpush1.msra.mxu0 0.0
        %2699 = vmatprep.subr.mxu0 0.0
        %2700 = vmatpush1.msra.mxu0 0.0
        %2701 = vmatprep.subr.mxu0 0.0
        %2702 = vmatpush1.msra.mxu0 0.0
        %2703 = vmatprep.subr.mxu0 0.0
        %2704 = vmatpush1.msra.mxu0 0.0
        %2705 = vmatprep.subr.mxu0 0.0
        %2706 = vmatpush1.msra.mxu0 0.0
        %2707 = vmatprep.mubr.f32.mxu0 0.0
        %2708 = vmatmul.mubr.f32.gmra.mrb[0].mxu0 %v2570
        %v2709 = vpop.f32.mrb[0].mxu0
        %v2710 = vadd.f32 0.0, %v2709
        %v2711 = vpop.f32.mrb[0].mxu0
        %2712 = vdwg.mxu0
        %v2713 = vadd.f32 %v2555, %v2639
        %v2714 = vadd.f32 %v2556, %v2641
        %v2715 = vadd.f32 %v2557, %v2710
        %2716 = vrot.lane.b32.xlu0 %v1781, 111
        %v2717 = vpop.permute.xlu0 %2716
        %2718 = vrot.lane.b32.xlu0 %v1782, 111
        %v2719 = vpop.permute.xlu0 %2718
        %2720 = vrot.lane.b32.xlu0 %v1783, 111
        %v2721 = vpop.permute.xlu0 %2720
        %v2722 = vsel %vm1281, %v2719, %v2721
        %v2723 = vsel %vm1281, %v2717, %v2719
        %v2724 = vsel %vm1281, %v2721, %v2717
        %s2725 = scalar_lea.vmem %s2, 48
        %v2726 = vld [vmem:[%s2725] sm:$0xff]
        %v2728 = vsel %vm360, %v2726, 0
        %2730 = vmatprep.subr.mxu0 %v2722
        %2731 = vmatpush1.msra.mxu0 %v2723
        %2732 = vmatprep.subr.mxu0 0.0
        %2733 = vmatpush1.msra.mxu0 0.0
        %2734 = vmatprep.subr.mxu0 0.0
        %2735 = vmatpush1.msra.mxu0 0.0
        %2736 = vmatprep.subr.mxu0 0.0
        %2737 = vmatpush1.msra.mxu0 0.0
        %2738 = vmatprep.subr.mxu0 0.0
        %2739 = vmatpush1.msra.mxu0 0.0
        %2740 = vmatprep.subr.mxu0 0.0
        %2741 = vmatpush1.msra.mxu0 0.0
        %2742 = vmatprep.subr.mxu0 0.0
        %2743 = vmatpush1.msra.mxu0 0.0
        %2744 = vmatprep.subr.mxu0 0.0
        %2745 = vmatpush1.msra.mxu0 0.0
        %2746 = vmatprep.subr.mxu0 0.0
        %2747 = vmatpush1.msra.mxu0 0.0
        %2748 = vmatprep.subr.mxu0 0.0
        %2749 = vmatpush1.msra.mxu0 0.0
        %2750 = vmatprep.subr.mxu0 0.0
        %2751 = vmatpush1.msra.mxu0 0.0
        %2752 = vmatprep.subr.mxu0 0.0
        %2753 = vmatpush1.msra.mxu0 0.0
        %2754 = vmatprep.subr.mxu0 0.0
        %2755 = vmatpush1.msra.mxu0 0.0
        %2756 = vmatprep.subr.mxu0 0.0
        %2757 = vmatpush1.msra.mxu0 0.0
        %2758 = vmatprep.subr.mxu0 0.0
        %2759 = vmatpush1.msra.mxu0 0.0
        %2760 = vmatprep.subr.mxu0 0.0
        %2761 = vmatpush1.msra.mxu0 0.0
        %2762 = vmatprep.subr.mxu0 0.0
        %2763 = vmatpush1.msra.mxu0 0.0
        %2764 = vmatprep.subr.mxu0 0.0
        %2765 = vmatpush1.msra.mxu0 0.0
        %2766 = vmatprep.subr.mxu0 0.0
        %2767 = vmatpush1.msra.mxu0 0.0
        %2768 = vmatprep.subr.mxu0 0.0
        %2769 = vmatpush1.msra.mxu0 0.0
        %2770 = vmatprep.subr.mxu0 0.0
        %2771 = vmatpush1.msra.mxu0 0.0
        %2772 = vmatprep.subr.mxu0 0.0
        %2773 = vmatpush1.msra.mxu0 0.0
        %2774 = vmatprep.subr.mxu0 0.0
        %2775 = vmatpush1.msra.mxu0 0.0
        %2776 = vmatprep.subr.mxu0 0.0
        %2777 = vmatpush1.msra.mxu0 0.0
        %2778 = vmatprep.subr.mxu0 0.0
        %2779 = vmatpush1.msra.mxu0 0.0
        %2780 = vmatprep.subr.mxu0 0.0
        %2781 = vmatpush1.msra.mxu0 0.0
        %2782 = vmatprep.subr.mxu0 0.0
        %2783 = vmatpush1.msra.mxu0 0.0
        %2784 = vmatprep.subr.mxu0 0.0
        %2785 = vmatpush1.msra.mxu0 0.0
        %2786 = vmatprep.subr.mxu0 0.0
        %2787 = vmatpush1.msra.mxu0 0.0
        %2788 = vmatprep.subr.mxu0 0.0
        %2789 = vmatpush1.msra.mxu0 0.0
        %2790 = vmatprep.subr.mxu0 0.0
        %2791 = vmatpush1.msra.mxu0 0.0
        %2792 = vmatprep.subr.mxu0 0.0
        %2793 = vmatpush1.msra.mxu0 0.0
        %2794 = vmatprep.mubr.f32.mxu0 0.0
        %2795 = vmatmul.mubr.f32.gmra.mrb[0].mxu0 %v2728
        %v2796 = vpop.f32.mrb[0].mxu0
        %v2797 = vadd.f32 0.0, %v2796
        %v2798 = vpop.f32.mrb[0].mxu0
        %v2799 = vadd.f32 0.0, %v2798
        %2800 = vdwg.mxu0
        %2801 = vmatprep.subr.mxu0 0.0
        %2802 = vmatpush1.msra.mxu0 %v2724
        %2803 = vmatprep.subr.mxu0 0.0
        %2804 = vmatpush1.msra.mxu0 0.0
        %2805 = vmatprep.subr.mxu0 0.0
        %2806 = vmatpush1.msra.mxu0 0.0
        %2807 = vmatprep.subr.mxu0 0.0
        %2808 = vmatpush1.msra.mxu0 0.0
        %2809 = vmatprep.subr.mxu0 0.0
        %2810 = vmatpush1.msra.mxu0 0.0
        %2811 = vmatprep.subr.mxu0 0.0
        %2812 = vmatpush1.msra.mxu0 0.0
        %2813 = vmatprep.subr.mxu0 0.0
        %2814 = vmatpush1.msra.mxu0 0.0
        %2815 = vmatprep.subr.mxu0 0.0
        %2816 = vmatpush1.msra.mxu0 0.0
        %2817 = vmatprep.subr.mxu0 0.0
        %2818 = vmatpush1.msra.mxu0 0.0
        %2819 = vmatprep.subr.mxu0 0.0
        %2820 = vmatpush1.msra.mxu0 0.0
        %2821 = vmatprep.subr.mxu0 0.0
        %2822 = vmatpush1.msra.mxu0 0.0
        %2823 = vmatprep.subr.mxu0 0.0
        %2824 = vmatpush1.msra.mxu0 0.0
        %2825 = vmatprep.subr.mxu0 0.0
        %2826 = vmatpush1.msra.mxu0 0.0
        %2827 = vmatprep.subr.mxu0 0.0
        %2828 = vmatpush1.msra.mxu0 0.0
        %2829 = vmatprep.subr.mxu0 0.0
        %2830 = vmatpush1.msra.mxu0 0.0
        %2831 = vmatprep.subr.mxu0 0.0
        %2832 = vmatpush1.msra.mxu0 0.0
        %2833 = vmatprep.subr.mxu0 0.0
        %2834 = vmatpush1.msra.mxu0 0.0
        %2835 = vmatprep.subr.mxu0 0.0
        %2836 = vmatpush1.msra.mxu0 0.0
        %2837 = vmatprep.subr.mxu0 0.0
        %2838 = vmatpush1.msra.mxu0 0.0
        %2839 = vmatprep.subr.mxu0 0.0
        %2840 = vmatpush1.msra.mxu0 0.0
        %2841 = vmatprep.subr.mxu0 0.0
        %2842 = vmatpush1.msra.mxu0 0.0
        %2843 = vmatprep.subr.mxu0 0.0
        %2844 = vmatpush1.msra.mxu0 0.0
        %2845 = vmatprep.subr.mxu0 0.0
        %2846 = vmatpush1.msra.mxu0 0.0
        %2847 = vmatprep.subr.mxu0 0.0
        %2848 = vmatpush1.msra.mxu0 0.0
        %2849 = vmatprep.subr.mxu0 0.0
        %2850 = vmatpush1.msra.mxu0 0.0
        %2851 = vmatprep.subr.mxu0 0.0
        %2852 = vmatpush1.msra.mxu0 0.0
        %2853 = vmatprep.subr.mxu0 0.0
        %2854 = vmatpush1.msra.mxu0 0.0
        %2855 = vmatprep.subr.mxu0 0.0
        %2856 = vmatpush1.msra.mxu0 0.0
        %2857 = vmatprep.subr.mxu0 0.0
        %2858 = vmatpush1.msra.mxu0 0.0
        %2859 = vmatprep.subr.mxu0 0.0
        %2860 = vmatpush1.msra.mxu0 0.0
        %2861 = vmatprep.subr.mxu0 0.0
        %2862 = vmatpush1.msra.mxu0 0.0
        %2863 = vmatprep.subr.mxu0 0.0
        %2864 = vmatpush1.msra.mxu0 0.0
        %2865 = vmatprep.mubr.f32.mxu0 0.0
        %2866 = vmatmul.mubr.f32.gmra.mrb[0].mxu0 %v2728
        %v2867 = vpop.f32.mrb[0].mxu0
        %v2868 = vadd.f32 0.0, %v2867
        %v2869 = vpop.f32.mrb[0].mxu0
        %2870 = vdwg.mxu0
        %v2871 = vadd.f32 %v2713, %v2797
        %v2872 = vadd.f32 %v2714, %v2799
        %v2873 = vadd.f32 %v2715, %v2868
        %2874 = vrot.lane.b32.xlu0 %v1781, 110
        %v2875 = vpop.permute.xlu0 %2874
        %2876 = vrot.lane.b32.xlu0 %v1782, 110
        %v2877 = vpop.permute.xlu0 %2876
        %2878 = vrot.lane.b32.xlu0 %v1783, 110
        %v2879 = vpop.permute.xlu0 %2878
        %v2880 = vsel %vm1440, %v2877, %v2879
        %v2881 = vsel %vm1440, %v2875, %v2877
        %v2882 = vsel %vm1440, %v2879, %v2875
        %s2883 = scalar_lea.vmem %s2, 56
        %v2884 = vld [vmem:[%s2883] sm:$0xff]
        %v2886 = vsel %vm360, %v2884, 0
        %2888 = vmatprep.subr.mxu0 %v2880
        %2889 = vmatpush1.msra.mxu0 %v2881
        %2890 = vmatprep.subr.mxu0 0.0
        %2891 = vmatpush1.msra.mxu0 0.0
        %2892 = vmatprep.subr.mxu0 0.0
        %2893 = vmatpush1.msra.mxu0 0.0
        %2894 = vmatprep.subr.mxu0 0.0
        %2895 = vmatpush1.msra.mxu0 0.0
        %2896 = vmatprep.subr.mxu0 0.0
        %2897 = vmatpush1.msra.mxu0 0.0
        %2898 = vmatprep.subr.mxu0 0.0
        %2899 = vmatpush1.msra.mxu0 0.0
        %2900 = vmatprep.subr.mxu0 0.0
        %2901 = vmatpush1.msra.mxu0 0.0
        %2902 = vmatprep.subr.mxu0 0.0
        %2903 = vmatpush1.msra.mxu0 0.0
        %2904 = vmatprep.subr.mxu0 0.0
        %2905 = vmatpush1.msra.mxu0 0.0
        %2906 = vmatprep.subr.mxu0 0.0
        %2907 = vmatpush1.msra.mxu0 0.0
        %2908 = vmatprep.subr.mxu0 0.0
        %2909 = vmatpush1.msra.mxu0 0.0
        %2910 = vmatprep.subr.mxu0 0.0
        %2911 = vmatpush1.msra.mxu0 0.0
        %2912 = vmatprep.subr.mxu0 0.0
        %2913 = vmatpush1.msra.mxu0 0.0
        %2914 = vmatprep.subr.mxu0 0.0
        %2915 = vmatpush1.msra.mxu0 0.0
        %2916 = vmatprep.subr.mxu0 0.0
        %2917 = vmatpush1.msra.mxu0 0.0
        %2918 = vmatprep.subr.mxu0 0.0
        %2919 = vmatpush1.msra.mxu0 0.0
        %2920 = vmatprep.subr.mxu0 0.0
        %2921 = vmatpush1.msra.mxu0 0.0
        %2922 = vmatprep.subr.mxu0 0.0
        %2923 = vmatpush1.msra.mxu0 0.0
        %2924 = vmatprep.subr.mxu0 0.0
        %2925 = vmatpush1.msra.mxu0 0.0
        %2926 = vmatprep.subr.mxu0 0.0
        %2927 = vmatpush1.msra.mxu0 0.0
        %2928 = vmatprep.subr.mxu0 0.0
        %2929 = vmatpush1.msra.mxu0 0.0
        %2930 = vmatprep.subr.mxu0 0.0
        %2931 = vmatpush1.msra.mxu0 0.0
        %2932 = vmatprep.subr.mxu0 0.0
        %2933 = vmatpush1.msra.mxu0 0.0
        %2934 = vmatprep.subr.mxu0 0.0
        %2935 = vmatpush1.msra.mxu0 0.0
        %2936 = vmatprep.subr.mxu0 0.0
        %2937 = vmatpush1.msra.mxu0 0.0
        %2938 = vmatprep.subr.mxu0 0.0
        %2939 = vmatpush1.msra.mxu0 0.0
        %2940 = vmatprep.subr.mxu0 0.0
        %2941 = vmatpush1.msra.mxu0 0.0
        %2942 = vmatprep.subr.mxu0 0.0
        %2943 = vmatpush1.msra.mxu0 0.0
        %2944 = vmatprep.subr.mxu0 0.0
        %2945 = vmatpush1.msra.mxu0 0.0
        %2946 = vmatprep.subr.mxu0 0.0
        %2947 = vmatpush1.msra.mxu0 0.0
        %2948 = vmatprep.subr.mxu0 0.0
        %2949 = vmatpush1.msra.mxu0 0.0
        %2950 = vmatprep.subr.mxu0 0.0
        %2951 = vmatpush1.msra.mxu0 0.0
        %2952 = vmatprep.mubr.f32.mxu0 0.0
        %2953 = vmatmul.mubr.f32.gmra.mrb[0].mxu0 %v2886
        %v2954 = vpop.f32.mrb[0].mxu0
        %v2955 = vadd.f32 0.0, %v2954
        %v2956 = vpop.f32.mrb[0].mxu0
        %v2957 = vadd.f32 0.0, %v2956
        %2958 = vdwg.mxu0
        %2959 = vmatprep.subr.mxu0 0.0
        %2960 = vmatpush1.msra.mxu0 %v2882
        %2961 = vmatprep.subr.mxu0 0.0
        %2962 = vmatpush1.msra.mxu0 0.0
        %2963 = vmatprep.subr.mxu0 0.0
        %2964 = vmatpush1.msra.mxu0 0.0
        %2965 = vmatprep.subr.mxu0 0.0
        %2966 = vmatpush1.msra.mxu0 0.0
        %2967 = vmatprep.subr.mxu0 0.0
        %2968 = vmatpush1.msra.mxu0 0.0
        %2969 = vmatprep.subr.mxu0 0.0
        %2970 = vmatpush1.msra.mxu0 0.0
        %2971 = vmatprep.subr.mxu0 0.0
        %2972 = vmatpush1.msra.mxu0 0.0
        %2973 = vmatprep.subr.mxu0 0.0
        %2974 = vmatpush1.msra.mxu0 0.0
        %2975 = vmatprep.subr.mxu0 0.0
        %2976 = vmatpush1.msra.mxu0 0.0
        %2977 = vmatprep.subr.mxu0 0.0
        %2978 = vmatpush1.msra.mxu0 0.0
        %2979 = vmatprep.subr.mxu0 0.0
        %2980 = vmatpush1.msra.mxu0 0.0
        %2981 = vmatprep.subr.mxu0 0.0
        %2982 = vmatpush1.msra.mxu0 0.0
        %2983 = vmatprep.subr.mxu0 0.0
        %2984 = vmatpush1.msra.mxu0 0.0
        %2985 = vmatprep.subr.mxu0 0.0
        %2986 = vmatpush1.msra.mxu0 0.0
        %2987 = vmatprep.subr.mxu0 0.0
        %2988 = vmatpush1.msra.mxu0 0.0
        %2989 = vmatprep.subr.mxu0 0.0
        %2990 = vmatpush1.msra.mxu0 0.0
        %2991 = vmatprep.subr.mxu0 0.0
        %2992 = vmatpush1.msra.mxu0 0.0
        %2993 = vmatprep.subr.mxu0 0.0
        %2994 = vmatpush1.msra.mxu0 0.0
        %2995 = vmatprep.subr.mxu0 0.0
        %2996 = vmatpush1.msra.mxu0 0.0
        %2997 = vmatprep.subr.mxu0 0.0
        %2998 = vmatpush1.msra.mxu0 0.0
        %2999 = vmatprep.subr.mxu0 0.0
        %3000 = vmatpush1.msra.mxu0 0.0
        %3001 = vmatprep.subr.mxu0 0.0
        %3002 = vmatpush1.msra.mxu0 0.0
        %3003 = vmatprep.subr.mxu0 0.0
        %3004 = vmatpush1.msra.mxu0 0.0
        %3005 = vmatprep.subr.mxu0 0.0
        %3006 = vmatpush1.msra.mxu0 0.0
        %3007 = vmatprep.subr.mxu0 0.0
        %3008 = vmatpush1.msra.mxu0 0.0
        %3009 = vmatprep.subr.mxu0 0.0
        %3010 = vmatpush1.msra.mxu0 0.0
        %3011 = vmatprep.subr.mxu0 0.0
        %3012 = vmatpush1.msra.mxu0 0.0
        %3013 = vmatprep.subr.mxu0 0.0
        %3014 = vmatpush1.msra.mxu0 0.0
        %3015 = vmatprep.subr.mxu0 0.0
        %3016 = vmatpush1.msra.mxu0 0.0
        %3017 = vmatprep.subr.mxu0 0.0
        %3018 = vmatpush1.msra.mxu0 0.0
        %3019 = vmatprep.subr.mxu0 0.0
        %3020 = vmatpush1.msra.mxu0 0.0
        %3021 = vmatprep.subr.mxu0 0.0
        %3022 = vmatpush1.msra.mxu0 0.0
        %3023 = vmatprep.mubr.f32.mxu0 0.0
        %3024 = vmatmul.mubr.f32.gmra.mrb[0].mxu0 %v2886
        %v3025 = vpop.f32.mrb[0].mxu0
        %v3026 = vadd.f32 0.0, %v3025
        %v3027 = vpop.f32.mrb[0].mxu0
        %3028 = vdwg.mxu0
        %v3029 = vadd.f32 %v2871, %v2955
        %v3030 = vadd.f32 %v2872, %v2957
        %v3031 = vadd.f32 %v2873, %v3026
        %3032 = vrot.lane.b32.xlu0 %v1781, 109
        %v3033 = vpop.permute.xlu0 %3032
        %3034 = vrot.lane.b32.xlu0 %v1782, 109
        %v3035 = vpop.permute.xlu0 %3034
        %3036 = vrot.lane.b32.xlu0 %v1783, 109
        %v3037 = vpop.permute.xlu0 %3036
        %v3038 = vsel %vm1599, %v3035, %v3037
        %v3039 = vsel %vm1599, %v3033, %v3035
        %v3040 = vsel %vm1599, %v3037, %v3033
        %s3041 = scalar_lea.vmem %s2, 64
        %v3042 = vld [vmem:[%s3041] sm:$0xff]
        %v3044 = vsel %vm360, %v3042, 0
        %3046 = vmatprep.subr.mxu0 %v3038
        %3047 = vmatpush1.msra.mxu0 %v3039
        %3048 = vmatprep.subr.mxu0 0.0
        %3049 = vmatpush1.msra.mxu0 0.0
        %3050 = vmatprep.subr.mxu0 0.0
        %3051 = vmatpush1.msra.mxu0 0.0
        %3052 = vmatprep.subr.mxu0 0.0
        %3053 = vmatpush1.msra.mxu0 0.0
        %3054 = vmatprep.subr.mxu0 0.0
        %3055 = vmatpush1.msra.mxu0 0.0
        %3056 = vmatprep.subr.mxu0 0.0
        %3057 = vmatpush1.msra.mxu0 0.0
        %3058 = vmatprep.subr.mxu0 0.0
        %3059 = vmatpush1.msra.mxu0 0.0
        %3060 = vmatprep.subr.mxu0 0.0
        %3061 = vmatpush1.msra.mxu0 0.0
        %3062 = vmatprep.subr.mxu0 0.0
        %3063 = vmatpush1.msra.mxu0 0.0
        %3064 = vmatprep.subr.mxu0 0.0
        %3065 = vmatpush1.msra.mxu0 0.0
        %3066 = vmatprep.subr.mxu0 0.0
        %3067 = vmatpush1.msra.mxu0 0.0
        %3068 = vmatprep.subr.mxu0 0.0
        %3069 = vmatpush1.msra.mxu0 0.0
        %3070 = vmatprep.subr.mxu0 0.0
        %3071 = vmatpush1.msra.mxu0 0.0
        %3072 = vmatprep.subr.mxu0 0.0
        %3073 = vmatpush1.msra.mxu0 0.0
        %3074 = vmatprep.subr.mxu0 0.0
        %3075 = vmatpush1.msra.mxu0 0.0
        %3076 = vmatprep.subr.mxu0 0.0
        %3077 = vmatpush1.msra.mxu0 0.0
        %3078 = vmatprep.subr.mxu0 0.0
        %3079 = vmatpush1.msra.mxu0 0.0
        %3080 = vmatprep.subr.mxu0 0.0
        %3081 = vmatpush1.msra.mxu0 0.0
        %3082 = vmatprep.subr.mxu0 0.0
        %3083 = vmatpush1.msra.mxu0 0.0
        %3084 = vmatprep.subr.mxu0 0.0
        %3085 = vmatpush1.msra.mxu0 0.0
        %3086 = vmatprep.subr.mxu0 0.0
        %3087 = vmatpush1.msra.mxu0 0.0
        %3088 = vmatprep.subr.mxu0 0.0
        %3089 = vmatpush1.msra.mxu0 0.0
        %3090 = vmatprep.subr.mxu0 0.0
        %3091 = vmatpush1.msra.mxu0 0.0
        %3092 = vmatprep.subr.mxu0 0.0
        %3093 = vmatpush1.msra.mxu0 0.0
        %3094 = vmatprep.subr.mxu0 0.0
        %3095 = vmatpush1.msra.mxu0 0.0
        %3096 = vmatprep.subr.mxu0 0.0
        %3097 = vmatpush1.msra.mxu0 0.0
        %3098 = vmatprep.subr.mxu0 0.0
        %3099 = vmatpush1.msra.mxu0 0.0
        %3100 = vmatprep.subr.mxu0 0.0
        %3101 = vmatpush1.msra.mxu0 0.0
        %3102 = vmatprep.subr.mxu0 0.0
        %3103 = vmatpush1.msra.mxu0 0.0
        %3104 = vmatprep.subr.mxu0 0.0
        %3105 = vmatpush1.msra.mxu0 0.0
        %3106 = vmatprep.subr.mxu0 0.0
        %3107 = vmatpush1.msra.mxu0 0.0
        %3108 = vmatprep.subr.mxu0 0.0
        %3109 = vmatpush1.msra.mxu0 0.0
        %3110 = vmatprep.mubr.f32.mxu0 0.0
        %3111 = vmatmul.mubr.f32.gmra.mrb[0].mxu0 %v3044
        %v3112 = vpop.f32.mrb[0].mxu0
        %v3113 = vadd.f32 0.0, %v3112
        %v3114 = vpop.f32.mrb[0].mxu0
        %v3115 = vadd.f32 0.0, %v3114
        %3116 = vdwg.mxu0
        %3117 = vmatprep.subr.mxu0 0.0
        %3118 = vmatpush1.msra.mxu0 %v3040
        %3119 = vmatprep.subr.mxu0 0.0
        %3120 = vmatpush1.msra.mxu0 0.0
        %3121 = vmatprep.subr.mxu0 0.0
        %3122 = vmatpush1.msra.mxu0 0.0
        %3123 = vmatprep.subr.mxu0 0.0
        %3124 = vmatpush1.msra.mxu0 0.0
        %3125 = vmatprep.subr.mxu0 0.0
        %3126 = vmatpush1.msra.mxu0 0.0
        %3127 = vmatprep.subr.mxu0 0.0
        %3128 = vmatpush1.msra.mxu0 0.0
        %3129 = vmatprep.subr.mxu0 0.0
        %3130 = vmatpush1.msra.mxu0 0.0
        %3131 = vmatprep.subr.mxu0 0.0
        %3132 = vmatpush1.msra.mxu0 0.0
        %3133 = vmatprep.subr.mxu0 0.0
        %3134 = vmatpush1.msra.mxu0 0.0
        %3135 = vmatprep.subr.mxu0 0.0
        %3136 = vmatpush1.msra.mxu0 0.0
        %3137 = vmatprep.subr.mxu0 0.0
        %3138 = vmatpush1.msra.mxu0 0.0
        %3139 = vmatprep.subr.mxu0 0.0
        %3140 = vmatpush1.msra.mxu0 0.0
        %3141 = vmatprep.subr.mxu0 0.0
        %3142 = vmatpush1.msra.mxu0 0.0
        %3143 = vmatprep.subr.mxu0 0.0
        %3144 = vmatpush1.msra.mxu0 0.0
        %3145 = vmatprep.subr.mxu0 0.0
        %3146 = vmatpush1.msra.mxu0 0.0
        %3147 = vmatprep.subr.mxu0 0.0
        %3148 = vmatpush1.msra.mxu0 0.0
        %3149 = vmatprep.subr.mxu0 0.0
        %3150 = vmatpush1.msra.mxu0 0.0
        %3151 = vmatprep.subr.mxu0 0.0
        %3152 = vmatpush1.msra.mxu0 0.0
        %3153 = vmatprep.subr.mxu0 0.0
        %3154 = vmatpush1.msra.mxu0 0.0
        %3155 = vmatprep.subr.mxu0 0.0
        %3156 = vmatpush1.msra.mxu0 0.0
        %3157 = vmatprep.subr.mxu0 0.0
        %3158 = vmatpush1.msra.mxu0 0.0
        %3159 = vmatprep.subr.mxu0 0.0
        %3160 = vmatpush1.msra.mxu0 0.0
        %3161 = vmatprep.subr.mxu0 0.0
        %3162 = vmatpush1.msra.mxu0 0.0
        %3163 = vmatprep.subr.mxu0 0.0
        %3164 = vmatpush1.msra.mxu0 0.0
        %3165 = vmatprep.subr.mxu0 0.0
        %3166 = vmatpush1.msra.mxu0 0.0
        %3167 = vmatprep.subr.mxu0 0.0
        %3168 = vmatpush1.msra.mxu0 0.0
        %3169 = vmatprep.subr.mxu0 0.0
        %3170 = vmatpush1.msra.mxu0 0.0
        %3171 = vmatprep.subr.mxu0 0.0
        %3172 = vmatpush1.msra.mxu0 0.0
        %3173 = vmatprep.subr.mxu0 0.0
        %3174 = vmatpush1.msra.mxu0 0.0
        %3175 = vmatprep.subr.mxu0 0.0
        %3176 = vmatpush1.msra.mxu0 0.0
        %3177 = vmatprep.subr.mxu0 0.0
        %3178 = vmatpush1.msra.mxu0 0.0
        %3179 = vmatprep.subr.mxu0 0.0
        %3180 = vmatpush1.msra.mxu0 0.0
        %3181 = vmatprep.mubr.f32.mxu0 0.0
        %3182 = vmatmul.mubr.f32.gmra.mrb[0].mxu0 %v3044
        %v3183 = vpop.f32.mrb[0].mxu0
        %v3184 = vadd.f32 0.0, %v3183
        %v3185 = vpop.f32.mrb[0].mxu0
        %3186 = vdwg.mxu0
        %v3187 = vadd.f32 %v3029, %v3113
        %v3188 = vadd.f32 %v3030, %v3115
        %v3189 = vadd.f32 %v3031, %v3184
        %v3190 = vmul.f32 %v3187, %v323
        %v3191 = vmul.f32 %v3188, %v327
        %v3192 = vmul.f32 %v3189, %v331
        %v3193 = vadd.f32 %v3190, %v3191
        %v3194 = vadd.f32 %v3193, %v3192
        %3195 = vadd.xlane.f32.xlu0 %v3194
        %v3196 = vpop.xlane.xlu0 %3195
        %v3197 = vmul.f32 %v3196, 0.00390625
        %v3198 = vmul.f32 %v3190, %v3187
        %v3199 = vmul.f32 %v3191, %v3188
        %v3200 = vmul.f32 %v3192, %v3189
        %v3201 = vadd.f32 %v3198, %v3199
        %v3202 = vadd.f32 %v3201, %v3200
        %3203 = vadd.xlane.f32.xlu0 %v3202
        %v3204 = vpop.xlane.xlu0 %3203
        %v3205 = vmul.f32 %v3204, 0.00390625
        %v3206 = vmul.f32 %v3197, %v3197
        %v3207 = vsub.f32 %v3205, %v3206
        %v3208 = vsub.f32 %v3187, %v3197
        %v3209 = vsub.f32 %v3188, %v3197
        %v3210 = vsub.f32 %v3189, %v3197
        %v3211 = vadd.f32 %v3207, 1e-05
        %v3212 = vrsqrt.pop %v3211
        %v3213 = vmul.f32 %v3208, %v3212
        %v3214 = vmul.f32 %v3209, %v3212
        %v3215 = vmul.f32 %v3210, %v3212
        %v3216 = vld [vmem:[%s195] sm:$0xff]
        %3218 = vrot.lane.b32.xlu0 %v3213, 109
        %v3219 = vpop.permute.xlu0 %3218
        %3221 = vrot.lane.b32.xlu0 %v3213, 107
        %v3222 = vpop.permute.xlu0 %3221
        %3224 = vrot.lane.b32.xlu0 %v3213, 105
        %v3225 = vpop.permute.xlu0 %3224
        %3227 = vrot.lane.b32.xlu0 %v3213, 103
        %v3228 = vpop.permute.xlu0 %3227
        %3230 = vrot.lane.b32.xlu0 %v3213, 101
        %v3231 = vpop.permute.xlu0 %3230
        %3233 = vrot.lane.b32.xlu0 %v3213, 99
        %v3234 = vpop.permute.xlu0 %3233
        %3237 = vrot.lane.b32.xlu0 %v3213, 97
        %v3238 = vpop.permute.xlu0 %3237
        %3239 = vrot.lane.b32.xlu0 %v3214, 97
        %v3240 = vpop.permute.xlu0 %3239
        %vm3241 = vcmask 793600
        %v3242 = vsel %vm3241, %v3238, %v3240
        %3244 = vrot.lane.b32.xlu0 %v3214, 95
        %v3245 = vpop.permute.xlu0 %3244
        %3247 = vrot.lane.b32.xlu0 %v3214, 93
        %v3248 = vpop.permute.xlu0 %3247
        %3250 = vrot.lane.b32.xlu0 %v3214, 91
        %v3251 = vpop.permute.xlu0 %3250
        %3253 = vrot.lane.b32.xlu0 %v3214, 89
        %v3254 = vpop.permute.xlu0 %3253
        %3256 = vrot.lane.b32.xlu0 %v3214, 87
        %v3257 = vpop.permute.xlu0 %3256
        %3259 = vrot.lane.b32.xlu0 %v3214, 85
        %v3260 = vpop.permute.xlu0 %3259
        %3263 = vrot.lane.b32.xlu0 %v3214, 83
        %v3264 = vpop.permute.xlu0 %3263
        %3265 = vrot.lane.b32.xlu0 %v3215, 83
        %v3266 = vpop.permute.xlu0 %3265
        %vm3267 = vcmask 678912
        %v3268 = vsel %vm3267, %v3264, %v3266
        %3270 = vrot.lane.b32.xlu0 %v3215, 81
        %v3271 = vpop.permute.xlu0 %3270
        %3273 = vrot.lane.b32.xlu0 %v3215, 79
        %v3274 = vpop.permute.xlu0 %3273
        %vm3276 = vcmask 130048
        %v3277 = vsel %vm3276, %v3219, %v3222
        %vm3278 = vcmask 261120
        %v3279 = vsel %vm3278, %v3277, %v3225
        %vm3280 = vcmask 392192
        %v3281 = vsel %vm3280, %v3279, %v3228
        %vm3282 = vcmask 523264
        %v3283 = vsel %vm3282, %v3281, %v3231
        %vm3284 = vcmask 654336
        %v3285 = vsel %vm3284, %v3283, %v3234
        %vm3286 = vcmask 785408
        %v3287 = vsel %vm3286, %v3285, %v3242
        %vm3288 = vcmask 916480
        %v3289 = vsel %vm3288, %v3287, %v3245
        %v3290 = vsel %vm3276, %v3248, %v3251
        %v3291 = vsel %vm3278, %v3290, %v3254
        %v3292 = vsel %vm3280, %v3291, %v3257
        %v3293 = vsel %vm3282, %v3292, %v3260
        %v3294 = vsel %vm3284, %v3293, %v3268
        %v3295 = vsel %vm3286, %v3294, %v3271
        %v3296 = vsel %vm3288, %v3295, %v3274
        %v3299 = vcombine.low %v3289, %v3296
        %v3301 = vadd.f32 %v3216, %v3299
        %3302 = vst [vmem:[%s190] sm:$0xff] %v3301
        %s3303 = sand.u32 %s115, 1
        %s3304 = scalar_lea.sflag [#allocation4], %s3303
        %s3305 = sand.u32 %s115, 1
        %s3306 = smul.addr %s3305, 8
        %s3307 = scalar_lea.vmem [#allocation3], %s3306
        // Predicated region
        $region37: #{tpu_custom_call.1} parent=35 // pred_check
          %p3308 = pneg %p125
        $region38: #{tpu_custom_call.1} parent=35 // pred_check_branch
          %3310 = sbr.rel (%p3308) target = $region40
        $region39: #{tpu_custom_call.1} parent=35 // pred_region
          %s3312 = ssub.s32 128, 128
          %3313 = vsyncadd %s3304, %s3312
          %s3314 = smul.addr %s18, 2
          %s3315 = smul.addr %s3314, 64
          %s3316 = scalar_lea.hbm %s4, %s3315
          %s3318 = sshll.u32 %s3307, 4
          %s3319 = int_to_ptr.vmem [resolvable:$true] %s3318
          %3321 = dma.vmem_to_hbm [thread:$0]  %s3319, 128, %s3316, %s3304
        $region40: #{tpu_custom_call.1} parent=35 // pred_fallthru
          _
      $region36: #{tpu_custom_call.1} parent=5 // pred_fallthru
        _
      %p3322 = scmp.le.s32.totalorder 2, %s13
      // Predicated region
      $region41: #{tpu_custom_call.1} parent=5 // pred_check
        %p3323 = pneg %p3322
      $region42: #{tpu_custom_call.1} parent=5 // pred_check_branch
        %3325 = sbr.rel (%p3323) target = $region44
      $region43: #{tpu_custom_call.1} parent=5 // pred_region
        %s3326 = ssub.s32 %s13, 2
        // Predicated region
        $region45: #{tpu_custom_call.1} parent=43 // pred_check
          %p3327 = pneg %p131
        $region46: #{tpu_custom_call.1} parent=43 // pred_check_branch
          %3329 = sbr.rel (%p3327) target = $region48
        $region47: #{tpu_custom_call.1} parent=43 // pred_region
          %s3330 = sand.u32 %s116, 1
          %s3331 = scalar_lea.sflag [#allocation4], %s3330
          %s3332 = sand.u32 %s116, 1
          %s3333 = smul.addr %s3332, 8
          %s3334 = scalar_lea.vmem [#allocation3], %s3333
          %3335 = dma.done %s3331, 128
        $region48: #{tpu_custom_call.1} parent=43 // pred_fallthru
          _
      $region44: #{tpu_custom_call.1} parent=5 // pred_fallthru
        _
    $region6: #{tpu_custom_call.1} parent=1 // loop_footer
      %s17 = sadd.s32 1, %s13
    $region7: #{tpu_custom_call.1} parent=1 // loop_footer_branch
      %12 = sbr.rel target = $region3
    $region8: #{tpu_custom_call.1} parent=1 // loop_exit
      _
    %3336 = vsyncpa [#allocation4], 1
    %s3337 = scalar_lea.sflag [#allocation4], 1
    %3338 = vsyncpa %s3337, 1

</llo_original>
